<compile_context>
chip_gen: v6e
topology: v6e:2x2x1
jax: 0.10.0
libtpu: 0.0.40
codegen_flags: <defaults>
</compile_context>

<pallas_src>
import jax
import jax.numpy as jnp
from jax.experimental import pallas as pl
from jax.experimental.pallas import tpu as pltpu


def _round_up(x, m):
    return (x + m - 1) // m * m


def _pick_tile(n, cap):
    # n and cap are multiples of 8; returns a multiple of 8 that divides n.
    t = min(n, cap)
    while n % t:
        t -= 8
    return t


def up_conv_kernel(xm_ref, xh_ref, w_ref, scale_ref, shift_ref, o_ref):
    # xm_ref   : (1, TH, Wp, Cin)   bf16  main rows of the zero-padded input tile
    # xh_ref   : (1, 8,  Wp, Cin)   bf16  bottom halo slab (only first 2 rows used)
    # w_ref    : (16, Cin, TC)      bf16  folded subpixel conv weights
    # scale_ref: (1, TC)            f32   BN scale = gamma * rsqrt(var + eps)
    # shift_ref: (1, TC)            f32   BN shift = (bias - mean) * scale + beta
    # o_ref    : (1, 4, TH, Wk, TC) f32   4 output phases, phase index = a*2 + b
    TH = xm_ref.shape[1]
    Cin = xm_ref.shape[3]
    Wk = o_ref.shape[3]
    TC = o_ref.shape[4]

    # (TH + 2, Wp, Cin): this tile's rows plus the 2 halo rows below it.
    x_full = jnp.concatenate([xm_ref[0], xh_ref[0, :2]], axis=0)

    # Column shifts kw = 0, 1, 2, hoisted to (at most) two shifted copies per grid
    # step, then flattened to 2D so every tap is one big (TH*Wk, Cin) x (Cin, TC)
    # MXU matmul.  Wk % 16 == 0 keeps the flatten and the per-tap row slices
    # sublane-aligned (bf16 packs 16 sublanes per vreg).
    xs2d = [
        x_full[:, c:c + Wk, :].reshape((TH + 2) * Wk, Cin) for c in range(3)
    ]

    scale = scale_ref[...]          # (1, TC) f32
    shift = shift_ref[...]          # (1, TC) f32

    # Subpixel / polyphase: output pixel (2p + a, 2q + b) is a 2x2 window (dh, dw)
    # of the original-resolution zero-padded input with merged weights.
    for a in range(2):
        for b in range(2):
            ph = a * 2 + b
            acc = jnp.zeros((TH * Wk, TC), jnp.float32)
            for dh in range(2):
                for dw in range(2):
                    r = a + dh                                # row offset in padded tile
                    c = b + dw                                # column offset
                    x2d = xs2d[c][r * Wk:(r + TH) * Wk]       # (TH*Wk, Cin)  bf16
                    wmat = w_ref[ph * 4 + dh * 2 + dw]        # (Cin, TC)     bf16
                    acc = acc + jnp.dot(
                        x2d, wmat, preferred_element_type=jnp.float32)
            out = jnp.maximum(acc * scale + shift, 0.0)       # BN (eval) + ReLU, f32
            o_ref[0, ph] = out.reshape(TH, Wk, TC).astype(o_ref.dtype)


@jax.jit
def up_conv_forward(x_nchw, weight_oihw, bias, gamma, beta,
                    running_mean, running_var, eps=1e-5):
    N, Cin, H, W = x_nchw.shape
    Cout = weight_oihw.shape[0]

    # ---- fold BatchNorm (eval mode) and the conv bias into scale / shift ----
    scale = (gamma / jnp.sqrt(running_var + eps)).astype(jnp.float32)
    shift = ((bias - running_mean) * scale + beta).astype(jnp.float32)

    # ---- fold the nearest-x2 upsample into the 3x3 conv: subpixel weights ----
    # R[a, d, k] selects which original kernel rows k contribute to tap d of output
    # phase a (the same matrix applies to columns).
    R = jnp.array([[[1., 0., 0.], [0., 1., 1.]],
                   [[1., 1., 0.], [0., 0., 1.]]], jnp.float32)
    w_hwio = jnp.transpose(weight_oihw, (2, 3, 1, 0)).astype(jnp.float32)  # (3,3,Ci,Co)
    w_eff = jnp.einsum('axh,byw,hwio->abxyio', R, R, w_hwio)               # (2,2,2,2,Ci,Co)
    w_eff = w_eff.reshape(16, Cin, Cout).astype(jnp.bfloat16)

    # ---- tile sizes (kept modest so tiles fit v7x's 64 MiB VMEM as well) ----
    Hk = _round_up(H, 8)                     # kernel logical height (extra rows sliced off)
    Wk = _round_up(W, 16)                    # kernel working width (first W columns kept)
    Wp = Wk + 8                              # padded input width (includes conv padding)
    TH = _pick_tile(Hk, 32)                  # H tile: multiple of 8, divides Hk
    TC = 128 if Cout % 128 == 0 else Cout    # Cout tile (lane-dense for Cout >= 128)

    # ---- layout + zero padding of the ORIGINAL-resolution input (no upsample!) ----
    x = jnp.transpose(x_nchw, (0, 2, 3, 1)).astype(jnp.bfloat16)   # NCHW -> NHWC
    xp = jnp.pad(x, ((0, 0), (1, Hk + 7 - H), (1, Wp - W - 1), (0, 0)))
    # xp: (N, Hk + 8, Wp, Cin); row/col 0 are the conv zero-padding, the trailing
    # rows/cols are alignment zeros whose outputs are sliced off below.

    scale2 = scale.reshape(1, Cout)
    shift2 = shift.reshape(1, Cout)

    grid = (N, Hk // TH, Cout // TC)

    out = pl.pallas_call(
        up_conv_kernel,
        out_shape=jax.ShapeDtypeStruct((N, 4, Hk, Wk, Cout), jnp.float32),
        grid=grid,
        in_specs=[
            # main TH rows of the padded input tile
            pl.BlockSpec((1, TH, Wp, Cin), lambda n, t, c: (n, t, 0, 0)),
            # 2-row bottom halo, delivered as the 8-row slab starting at the next
            # tile (same array, second BlockSpec)
            pl.BlockSpec((1, 8, Wp, Cin),
                         lambda n, t, c: (n, (t + 1) * (TH // 8), 0, 0)),
            pl.BlockSpec((16, Cin, TC), lambda n, t, c: (0, 0, c)),
            pl.BlockSpec((1, TC), lambda n, t, c: (0, c)),
            pl.BlockSpec((1, TC), lambda n, t, c: (0, c)),
        ],
        out_specs=pl.BlockSpec((1, 4, TH, Wk, TC),
                               lambda n, t, c: (n, 0, t, 0, c)),
        compiler_params=pltpu.CompilerParams(
            dimension_semantics=("parallel", "parallel", "parallel"),
            vmem_limit_bytes=32 * 1024 * 1024,
        ),
    )(xp, xp, w_eff, scale2, shift2)

    # Interleave the 4 phases and convert back to NCHW.  This is a single fused XLA
    # transpose+reshape over the output (the NHWC->NCHW conversion the PyTorch
    # interface needs anyway).
    o = out[:, :, :H, :W, :].reshape(N, 2, 2, H, W, Cout)
    o = jnp.transpose(o, (0, 5, 3, 1, 4, 2))        # (N, Cout, H, 2, W, 2)
    return o.reshape(N, Cout, 2 * H, 2 * W)


if __name__ == "__main__":
    key = jax.random.PRNGKey(0)
    k_x, k_w, k_b, k_g, k_bt, k_m, k_v = jax.random.split(key, 7)

    N, Cin, H, W = 2, 4, 16, 16
    Cout = 8
    eps = 1e-5

    x = jax.random.normal(k_x, (N, Cin, H, W), jnp.float32)
    weight = jax.random.normal(k_w, (Cout, Cin, 3, 3), jnp.float32) * 0.1
    bias = jax.random.normal(k_b, (Cout,), jnp.float32) * 0.1
    gamma = jax.random.uniform(k_g, (Cout,), jnp.float32, 0.5, 1.5)
    beta = jax.random.normal(k_bt, (Cout,), jnp.float32) * 0.1
    running_mean = jax.random.normal(k_m, (Cout,), jnp.float32) * 0.1
    running_var = jax.random.uniform(k_v, (Cout,), jnp.float32, 0.5, 1.5)

    out = up_conv_forward(x, weight, bias, gamma, beta,
                          running_mean, running_var, eps)
    out = jax.block_until_ready(out)
    assert out.shape == (N, Cout, 2 * H, 2 * W), out.shape

    # Pure-JAX reference (f32) for correctness.
    x_up = jnp.repeat(jnp.repeat(x, 2, axis=2), 2, axis=3)
    ref = jax.lax.conv_general_dilated(
        x_up, weight, window_strides=(1, 1), padding=((1, 1), (1, 1)),
        dimension_numbers=("NCHW", "OIHW", "NCHW"))
    ref = ref + bias[None, :, None, None]
    ref = ((ref - running_mean[None, :, None, None])
           / jnp.sqrt(running_var + eps)[None, :, None, None]
           * gamma[None, :, None, None] + beta[None, :, None, None])
    ref = jnp.maximum(ref, 0.0)
    # bf16 matmul operands (f32 accumulation) -> loosened tolerance.
    assert jnp.allclose(out, ref, atol=2e-2, rtol=2e-2), \
        float(jnp.max(jnp.abs(out - ref)))

    print("KERNEL_OK")
</pallas_src>

<mosaic_0001>
module attributes {stable_mosaic.version = 11 : i64} {
  func.func @up_conv_kernel(%arg0: i32, %arg1: i32, %arg2: i32, %arg3: memref<1x16x24x4xbf16, #tpu.memory_space<vmem>>, %arg4: memref<1x8x24x4xbf16, #tpu.memory_space<vmem>>, %arg5: memref<16x4x8xbf16, #tpu.memory_space<vmem>>, %arg6: memref<1x8xf32, #tpu.memory_space<vmem>>, %arg7: memref<1x8xf32, #tpu.memory_space<vmem>>, %arg8: memref<1x4x16x16x8xf32, #tpu.memory_space<vmem>>) attributes {dimension_semantics = [#tpu.dimension_semantics<parallel>, #tpu.dimension_semantics<parallel>, #tpu.dimension_semantics<parallel>], iteration_bounds = array<i64: 2, 1, 1>, scalar_prefetch = 0 : i64, scratch_operands = 0 : i64, tpu.core_type = #tpu.core_type<tc>, window_params = [{transform_indices = @transform_0, window_bounds = array<i64: 1, 16, 24, 4>}, {transform_indices = @transform_1, window_bounds = array<i64: 1, 8, 24, 4>}, {transform_indices = @transform_2, window_bounds = array<i64: 16, 4, 8>}, {transform_indices = @transform_3, window_bounds = array<i64: 1, 8>}, {transform_indices = @transform_4, window_bounds = array<i64: 1, 8>}, {transform_indices = @transform_5, window_bounds = array<i64: 1, 4, 16, 16, 8>}]} {
    %c0 = arith.constant 0 : index
    %c0_0 = arith.constant 0 : index
    %c0_1 = arith.constant 0 : index
    %c0_2 = arith.constant 0 : index
    %0 = vector.load %arg3[%c0, %c0_0, %c0_1, %c0_2] : memref<1x16x24x4xbf16, #tpu.memory_space<vmem>>, vector<1x16x24x4xbf16>
    %1 = vector.shape_cast %0 : vector<1x16x24x4xbf16> to vector<16x24x4xbf16>
    %c0_3 = arith.constant 0 : index
    %c0_4 = arith.constant 0 : index
    %c0_5 = arith.constant 0 : index
    %c0_6 = arith.constant 0 : index
    %2 = vector.load %arg4[%c0_3, %c0_4, %c0_5, %c0_6] : memref<1x8x24x4xbf16, #tpu.memory_space<vmem>>, vector<1x2x24x4xbf16>
    %3 = vector.shape_cast %2 : vector<1x2x24x4xbf16> to vector<2x24x4xbf16>
    %4 = tpu.concatenate %1, %3 in 0 : vector<16x24x4xbf16>, vector<2x24x4xbf16> -> vector<18x24x4xbf16>
    %5 = vector.extract_strided_slice %4 {offsets = [0, 0, 0], sizes = [18, 16, 4], strides = [1, 1, 1]} : vector<18x24x4xbf16> to vector<18x16x4xbf16>
    %6 = vector.shape_cast %5 : vector<18x16x4xbf16> to vector<288x4xbf16>
    %7 = vector.extract_strided_slice %4 {offsets = [0, 1, 0], sizes = [18, 16, 4], strides = [1, 1, 1]} : vector<18x24x4xbf16> to vector<18x16x4xbf16>
    %8 = vector.shape_cast %7 : vector<18x16x4xbf16> to vector<288x4xbf16>
    %9 = vector.extract_strided_slice %4 {offsets = [0, 2, 0], sizes = [18, 16, 4], strides = [1, 1, 1]} : vector<18x24x4xbf16> to vector<18x16x4xbf16>
    %10 = vector.shape_cast %9 : vector<18x16x4xbf16> to vector<288x4xbf16>
    %c0_7 = arith.constant 0 : index
    %c0_8 = arith.constant 0 : index
    %11 = vector.load %arg6[%c0_7, %c0_8] : memref<1x8xf32, #tpu.memory_space<vmem>>, vector<1x8xf32>
    %c0_9 = arith.constant 0 : index
    %c0_10 = arith.constant 0 : index
    %12 = vector.load %arg7[%c0_9, %c0_10] : memref<1x8xf32, #tpu.memory_space<vmem>>, vector<1x8xf32>
    %cst = arith.constant 0.000000e+00 : f32
    %13 = vector.broadcast %cst : f32 to vector<256x8xf32>
    %14 = vector.extract_strided_slice %6 {offsets = [0, 0], sizes = [256, 4], strides = [1, 1]} : vector<288x4xbf16> to vector<256x4xbf16>
    %c0_11 = arith.constant 0 : index
    %c0_12 = arith.constant 0 : index
    %c0_13 = arith.constant 0 : index
    %15 = vector.load %arg5[%c0_11, %c0_12, %c0_13] : memref<16x4x8xbf16, #tpu.memory_space<vmem>>, vector<1x4x8xbf16>
    %16 = vector.shape_cast %15 : vector<1x4x8xbf16> to vector<4x8xbf16>
    %cst_14 = arith.constant dense<0.000000e+00> : vector<256x8xf32>
    %17 = tpu.matmul %14, %16, %cst_14 {dimension_numbers = #tpu.dot_dimension_numbers<[1], [0], [0], [1], [0, 0, 1, 1], [], []>} : vector<256x4xbf16>, vector<4x8xbf16>, vector<256x8xf32> -> vector<256x8xf32>
    %18 = arith.addf %13, %17 : vector<256x8xf32>
    %19 = vector.extract_strided_slice %8 {offsets = [0, 0], sizes = [256, 4], strides = [1, 1]} : vector<288x4xbf16> to vector<256x4xbf16>
    %c1 = arith.constant 1 : index
    %c0_15 = arith.constant 0 : index
    %c0_16 = arith.constant 0 : index
    %20 = vector.load %arg5[%c1, %c0_15, %c0_16] : memref<16x4x8xbf16, #tpu.memory_space<vmem>>, vector<1x4x8xbf16>
    %21 = vector.shape_cast %20 : vector<1x4x8xbf16> to vector<4x8xbf16>
    %cst_17 = arith.constant dense<0.000000e+00> : vector<256x8xf32>
    %22 = tpu.matmul %19, %21, %cst_17 {dimension_numbers = #tpu.dot_dimension_numbers<[1], [0], [0], [1], [0, 0, 1, 1], [], []>} : vector<256x4xbf16>, vector<4x8xbf16>, vector<256x8xf32> -> vector<256x8xf32>
    %23 = arith.addf %18, %22 : vector<256x8xf32>
    %24 = vector.extract_strided_slice %6 {offsets = [16, 0], sizes = [256, 4], strides = [1, 1]} : vector<288x4xbf16> to vector<256x4xbf16>
    %c2 = arith.constant 2 : index
    %c0_18 = arith.constant 0 : index
    %c0_19 = arith.constant 0 : index
    %25 = vector.load %arg5[%c2, %c0_18, %c0_19] : memref<16x4x8xbf16, #tpu.memory_space<vmem>>, vector<1x4x8xbf16>
    %26 = vector.shape_cast %25 : vector<1x4x8xbf16> to vector<4x8xbf16>
    %cst_20 = arith.constant dense<0.000000e+00> : vector<256x8xf32>
    %27 = tpu.matmul %24, %26, %cst_20 {dimension_numbers = #tpu.dot_dimension_numbers<[1], [0], [0], [1], [0, 0, 1, 1], [], []>} : vector<256x4xbf16>, vector<4x8xbf16>, vector<256x8xf32> -> vector<256x8xf32>
    %28 = arith.addf %23, %27 : vector<256x8xf32>
    %29 = vector.extract_strided_slice %8 {offsets = [16, 0], sizes = [256, 4], strides = [1, 1]} : vector<288x4xbf16> to vector<256x4xbf16>
    %c3 = arith.constant 3 : index
    %c0_21 = arith.constant 0 : index
    %c0_22 = arith.constant 0 : index
    %30 = vector.load %arg5[%c3, %c0_21, %c0_22] : memref<16x4x8xbf16, #tpu.memory_space<vmem>>, vector<1x4x8xbf16>
    %31 = vector.shape_cast %30 : vector<1x4x8xbf16> to vector<4x8xbf16>
    %cst_23 = arith.constant dense<0.000000e+00> : vector<256x8xf32>
    %32 = tpu.matmul %29, %31, %cst_23 {dimension_numbers = #tpu.dot_dimension_numbers<[1], [0], [0], [1], [0, 0, 1, 1], [], []>} : vector<256x4xbf16>, vector<4x8xbf16>, vector<256x8xf32> -> vector<256x8xf32>
    %33 = arith.addf %28, %32 : vector<256x8xf32>
    %34 = vector.broadcast %11 : vector<1x8xf32> to vector<256x8xf32>
    %35 = arith.mulf %33, %34 : vector<256x8xf32>
    %36 = vector.broadcast %12 : vector<1x8xf32> to vector<256x8xf32>
    %37 = arith.addf %35, %36 : vector<256x8xf32>
    %cst_24 = arith.constant 0.000000e+00 : f32
    %38 = vector.broadcast %cst_24 : f32 to vector<256x8xf32>
    %39 = arith.maximumf %37, %38 : vector<256x8xf32>
    %40 = vector.shape_cast %39 : vector<256x8xf32> to vector<16x16x8xf32>
    %c0_25 = arith.constant 0 : index
    %c0_26 = arith.constant 0 : index
    %c0_27 = arith.constant 0 : index
    %c0_28 = arith.constant 0 : index
    %c0_29 = arith.constant 0 : index
    %41 = vector.load %arg8[%c0_25, %c0_26, %c0_27, %c0_28, %c0_29] : memref<1x4x16x16x8xf32, #tpu.memory_space<vmem>>, vector<1x1x16x16x8xf32>
    %42 = vector.shape_cast %41 : vector<1x1x16x16x8xf32> to vector<16x16x8xf32>
    %43 = vector.shape_cast %40 : vector<16x16x8xf32> to vector<1x1x16x16x8xf32>
    tpu.vector_store %arg8[%c0_25, %c0_26, %c0_27, %c0_28, %c0_29], %43 {strides = array<i32>} : memref<1x4x16x16x8xf32, #tpu.memory_space<vmem>>, vector<1x1x16x16x8xf32>,
    %cst_30 = arith.constant 0.000000e+00 : f32
    %44 = vector.broadcast %cst_30 : f32 to vector<256x8xf32>
    %45 = vector.extract_strided_slice %8 {offsets = [0, 0], sizes = [256, 4], strides = [1, 1]} : vector<288x4xbf16> to vector<256x4xbf16>
    %c4 = arith.constant 4 : index
    %c0_31 = arith.constant 0 : index
    %c0_32 = arith.constant 0 : index
    %46 = vector.load %arg5[%c4, %c0_31, %c0_32] : memref<16x4x8xbf16, #tpu.memory_space<vmem>>, vector<1x4x8xbf16>
    %47 = vector.shape_cast %46 : vector<1x4x8xbf16> to vector<4x8xbf16>
    %cst_33 = arith.constant dense<0.000000e+00> : vector<256x8xf32>
    %48 = tpu.matmul %45, %47, %cst_33 {dimension_numbers = #tpu.dot_dimension_numbers<[1], [0], [0], [1], [0, 0, 1, 1], [], []>} : vector<256x4xbf16>, vector<4x8xbf16>, vector<256x8xf32> -> vector<256x8xf32>
    %49 = arith.addf %44, %48 : vector<256x8xf32>
    %50 = vector.extract_strided_slice %10 {offsets = [0, 0], sizes = [256, 4], strides = [1, 1]} : vector<288x4xbf16> to vector<256x4xbf16>
    %c5 = arith.constant 5 : index
    %c0_34 = arith.constant 0 : index
    %c0_35 = arith.constant 0 : index
    %51 = vector.load %arg5[%c5, %c0_34, %c0_35] : memref<16x4x8xbf16, #tpu.memory_space<vmem>>, vector<1x4x8xbf16>
    %52 = vector.shape_cast %51 : vector<1x4x8xbf16> to vector<4x8xbf16>
    %cst_36 = arith.constant dense<0.000000e+00> : vector<256x8xf32>
    %53 = tpu.matmul %50, %52, %cst_36 {dimension_numbers = #tpu.dot_dimension_numbers<[1], [0], [0], [1], [0, 0, 1, 1], [], []>} : vector<256x4xbf16>, vector<4x8xbf16>, vector<256x8xf32> -> vector<256x8xf32>
    %54 = arith.addf %49, %53 : vector<256x8xf32>
    %55 = vector.extract_strided_slice %8 {offsets = [16, 0], sizes = [256, 4], strides = [1, 1]} : vector<288x4xbf16> to vector<256x4xbf16>
    %c6 = arith.constant 6 : index
    %c0_37 = arith.constant 0 : index
    %c0_38 = arith.constant 0 : index
    %56 = vector.load %arg5[%c6, %c0_37, %c0_38] : memref<16x4x8xbf16, #tpu.memory_space<vmem>>, vector<1x4x8xbf16>
    %57 = vector.shape_cast %56 : vector<1x4x8xbf16> to vector<4x8xbf16>
    %cst_39 = arith.constant dense<0.000000e+00> : vector<256x8xf32>
    %58 = tpu.matmul %55, %57, %cst_39 {dimension_numbers = #tpu.dot_dimension_numbers<[1], [0], [0], [1], [0, 0, 1, 1], [], []>} : vector<256x4xbf16>, vector<4x8xbf16>, vector<256x8xf32> -> vector<256x8xf32>
    %59 = arith.addf %54, %58 : vector<256x8xf32>
    %60 = vector.extract_strided_slice %10 {offsets = [16, 0], sizes = [256, 4], strides = [1, 1]} : vector<288x4xbf16> to vector<256x4xbf16>
    %c7 = arith.constant 7 : index
    %c0_40 = arith.constant 0 : index
    %c0_41 = arith.constant 0 : index
    %61 = vector.load %arg5[%c7, %c0_40, %c0_41] : memref<16x4x8xbf16, #tpu.memory_space<vmem>>, vector<1x4x8xbf16>
    %62 = vector.shape_cast %61 : vector<1x4x8xbf16> to vector<4x8xbf16>
    %cst_42 = arith.constant dense<0.000000e+00> : vector<256x8xf32>
    %63 = tpu.matmul %60, %62, %cst_42 {dimension_numbers = #tpu.dot_dimension_numbers<[1], [0], [0], [1], [0, 0, 1, 1], [], []>} : vector<256x4xbf16>, vector<4x8xbf16>, vector<256x8xf32> -> vector<256x8xf32>
    %64 = arith.addf %59, %63 : vector<256x8xf32>
    %65 = vector.broadcast %11 : vector<1x8xf32> to vector<256x8xf32>
    %66 = arith.mulf %64, %65 : vector<256x8xf32>
    %67 = vector.broadcast %12 : vector<1x8xf32> to vector<256x8xf32>
    %68 = arith.addf %66, %67 : vector<256x8xf32>
    %cst_43 = arith.constant 0.000000e+00 : f32
    %69 = vector.broadcast %cst_43 : f32 to vector<256x8xf32>
    %70 = arith.maximumf %68, %69 : vector<256x8xf32>
    %71 = vector.shape_cast %70 : vector<256x8xf32> to vector<16x16x8xf32>
    %c0_44 = arith.constant 0 : index
    %c1_45 = arith.constant 1 : index
    %c0_46 = arith.constant 0 : index
    %c0_47 = arith.constant 0 : index
    %c0_48 = arith.constant 0 : index
    %72 = vector.load %arg8[%c0_44, %c1_45, %c0_46, %c0_47, %c0_48] : memref<1x4x16x16x8xf32, #tpu.memory_space<vmem>>, vector<1x1x16x16x8xf32>
    %73 = vector.shape_cast %72 : vector<1x1x16x16x8xf32> to vector<16x16x8xf32>
    %74 = vector.shape_cast %71 : vector<16x16x8xf32> to vector<1x1x16x16x8xf32>
    tpu.vector_store %arg8[%c0_44, %c1_45, %c0_46, %c0_47, %c0_48], %74 {strides = array<i32>} : memref<1x4x16x16x8xf32, #tpu.memory_space<vmem>>, vector<1x1x16x16x8xf32>,
    %cst_49 = arith.constant 0.000000e+00 : f32
    %75 = vector.broadcast %cst_49 : f32 to vector<256x8xf32>
    %76 = vector.extract_strided_slice %6 {offsets = [16, 0], sizes = [256, 4], strides = [1, 1]} : vector<288x4xbf16> to vector<256x4xbf16>
    %c8 = arith.constant 8 : index
    %c0_50 = arith.constant 0 : index
    %c0_51 = arith.constant 0 : index
    %77 = vector.load %arg5[%c8, %c0_50, %c0_51] : memref<16x4x8xbf16, #tpu.memory_space<vmem>>, vector<1x4x8xbf16>
    %78 = vector.shape_cast %77 : vector<1x4x8xbf16> to vector<4x8xbf16>
    %cst_52 = arith.constant dense<0.000000e+00> : vector<256x8xf32>
    %79 = tpu.matmul %76, %78, %cst_52 {dimension_numbers = #tpu.dot_dimension_numbers<[1], [0], [0], [1], [0, 0, 1, 1], [], []>} : vector<256x4xbf16>, vector<4x8xbf16>, vector<256x8xf32> -> vector<256x8xf32>
    %80 = arith.addf %75, %79 : vector<256x8xf32>
    %81 = vector.extract_strided_slice %8 {offsets = [16, 0], sizes = [256, 4], strides = [1, 1]} : vector<288x4xbf16> to vector<256x4xbf16>
    %c9 = arith.constant 9 : index
    %c0_53 = arith.constant 0 : index
    %c0_54 = arith.constant 0 : index
    %82 = vector.load %arg5[%c9, %c0_53, %c0_54] : memref<16x4x8xbf16, #tpu.memory_space<vmem>>, vector<1x4x8xbf16>
    %83 = vector.shape_cast %82 : vector<1x4x8xbf16> to vector<4x8xbf16>
    %cst_55 = arith.constant dense<0.000000e+00> : vector<256x8xf32>
    %84 = tpu.matmul %81, %83, %cst_55 {dimension_numbers = #tpu.dot_dimension_numbers<[1], [0], [0], [1], [0, 0, 1, 1], [], []>} : vector<256x4xbf16>, vector<4x8xbf16>, vector<256x8xf32> -> vector<256x8xf32>
    %85 = arith.addf %80, %84 : vector<256x8xf32>
    %86 = vector.extract_strided_slice %6 {offsets = [32, 0], sizes = [256, 4], strides = [1, 1]} : vector<288x4xbf16> to vector<256x4xbf16>
    %c10 = arith.constant 10 : index
    %c0_56 = arith.constant 0 : index
    %c0_57 = arith.constant 0 : index
    %87 = vector.load %arg5[%c10, %c0_56, %c0_57] : memref<16x4x8xbf16, #tpu.memory_space<vmem>>, vector<1x4x8xbf16>
    %88 = vector.shape_cast %87 : vector<1x4x8xbf16> to vector<4x8xbf16>
    %cst_58 = arith.constant dense<0.000000e+00> : vector<256x8xf32>
    %89 = tpu.matmul %86, %88, %cst_58 {dimension_numbers = #tpu.dot_dimension_numbers<[1], [0], [0], [1], [0, 0, 1, 1], [], []>} : vector<256x4xbf16>, vector<4x8xbf16>, vector<256x8xf32> -> vector<256x8xf32>
    %90 = arith.addf %85, %89 : vector<256x8xf32>
    %91 = vector.extract_strided_slice %8 {offsets = [32, 0], sizes = [256, 4], strides = [1, 1]} : vector<288x4xbf16> to vector<256x4xbf16>
    %c11 = arith.constant 11 : index
    %c0_59 = arith.constant 0 : index
    %c0_60 = arith.constant 0 : index
    %92 = vector.load %arg5[%c11, %c0_59, %c0_60] : memref<16x4x8xbf16, #tpu.memory_space<vmem>>, vector<1x4x8xbf16>
    %93 = vector.shape_cast %92 : vector<1x4x8xbf16> to vector<4x8xbf16>
    %cst_61 = arith.constant dense<0.000000e+00> : vector<256x8xf32>
    %94 = tpu.matmul %91, %93, %cst_61 {dimension_numbers = #tpu.dot_dimension_numbers<[1], [0], [0], [1], [0, 0, 1, 1], [], []>} : vector<256x4xbf16>, vector<4x8xbf16>, vector<256x8xf32> -> vector<256x8xf32>
    %95 = arith.addf %90, %94 : vector<256x8xf32>
    %96 = vector.broadcast %11 : vector<1x8xf32> to vector<256x8xf32>
    %97 = arith.mulf %95, %96 : vector<256x8xf32>
    %98 = vector.broadcast %12 : vector<1x8xf32> to vector<256x8xf32>
    %99 = arith.addf %97, %98 : vector<256x8xf32>
    %cst_62 = arith.constant 0.000000e+00 : f32
    %100 = vector.broadcast %cst_62 : f32 to vector<256x8xf32>
    %101 = arith.maximumf %99, %100 : vector<256x8xf32>
    %102 = vector.shape_cast %101 : vector<256x8xf32> to vector<16x16x8xf32>
    %c0_63 = arith.constant 0 : index
    %c2_64 = arith.constant 2 : index
    %c0_65 = arith.constant 0 : index
    %c0_66 = arith.constant 0 : index
    %c0_67 = arith.constant 0 : index
    %103 = vector.load %arg8[%c0_63, %c2_64, %c0_65, %c0_66, %c0_67] : memref<1x4x16x16x8xf32, #tpu.memory_space<vmem>>, vector<1x1x16x16x8xf32>
    %104 = vector.shape_cast %103 : vector<1x1x16x16x8xf32> to vector<16x16x8xf32>
    %105 = vector.shape_cast %102 : vector<16x16x8xf32> to vector<1x1x16x16x8xf32>
    tpu.vector_store %arg8[%c0_63, %c2_64, %c0_65, %c0_66, %c0_67], %105 {strides = array<i32>} : memref<1x4x16x16x8xf32, #tpu.memory_space<vmem>>, vector<1x1x16x16x8xf32>,
    %cst_68 = arith.constant 0.000000e+00 : f32
    %106 = vector.broadcast %cst_68 : f32 to vector<256x8xf32>
    %107 = vector.extract_strided_slice %8 {offsets = [16, 0], sizes = [256, 4], strides = [1, 1]} : vector<288x4xbf16> to vector<256x4xbf16>
    %c12 = arith.constant 12 : index
    %c0_69 = arith.constant 0 : index
    %c0_70 = arith.constant 0 : index
    %108 = vector.load %arg5[%c12, %c0_69, %c0_70] : memref<16x4x8xbf16, #tpu.memory_space<vmem>>, vector<1x4x8xbf16>
    %109 = vector.shape_cast %108 : vector<1x4x8xbf16> to vector<4x8xbf16>
    %cst_71 = arith.constant dense<0.000000e+00> : vector<256x8xf32>
    %110 = tpu.matmul %107, %109, %cst_71 {dimension_numbers = #tpu.dot_dimension_numbers<[1], [0], [0], [1], [0, 0, 1, 1], [], []>} : vector<256x4xbf16>, vector<4x8xbf16>, vector<256x8xf32> -> vector<256x8xf32>
    %111 = arith.addf %106, %110 : vector<256x8xf32>
    %112 = vector.extract_strided_slice %10 {offsets = [16, 0], sizes = [256, 4], strides = [1, 1]} : vector<288x4xbf16> to vector<256x4xbf16>
    %c13 = arith.constant 13 : index
    %c0_72 = arith.constant 0 : index
    %c0_73 = arith.constant 0 : index
    %113 = vector.load %arg5[%c13, %c0_72, %c0_73] : memref<16x4x8xbf16, #tpu.memory_space<vmem>>, vector<1x4x8xbf16>
    %114 = vector.shape_cast %113 : vector<1x4x8xbf16> to vector<4x8xbf16>
    %cst_74 = arith.constant dense<0.000000e+00> : vector<256x8xf32>
    %115 = tpu.matmul %112, %114, %cst_74 {dimension_numbers = #tpu.dot_dimension_numbers<[1], [0], [0], [1], [0, 0, 1, 1], [], []>} : vector<256x4xbf16>, vector<4x8xbf16>, vector<256x8xf32> -> vector<256x8xf32>
    %116 = arith.addf %111, %115 : vector<256x8xf32>
    %117 = vector.extract_strided_slice %8 {offsets = [32, 0], sizes = [256, 4], strides = [1, 1]} : vector<288x4xbf16> to vector<256x4xbf16>
    %c14 = arith.constant 14 : index
    %c0_75 = arith.constant 0 : index
    %c0_76 = arith.constant 0 : index
    %118 = vector.load %arg5[%c14, %c0_75, %c0_76] : memref<16x4x8xbf16, #tpu.memory_space<vmem>>, vector<1x4x8xbf16>
    %119 = vector.shape_cast %118 : vector<1x4x8xbf16> to vector<4x8xbf16>
    %cst_77 = arith.constant dense<0.000000e+00> : vector<256x8xf32>
    %120 = tpu.matmul %117, %119, %cst_77 {dimension_numbers = #tpu.dot_dimension_numbers<[1], [0], [0], [1], [0, 0, 1, 1], [], []>} : vector<256x4xbf16>, vector<4x8xbf16>, vector<256x8xf32> -> vector<256x8xf32>
    %121 = arith.addf %116, %120 : vector<256x8xf32>
    %122 = vector.extract_strided_slice %10 {offsets = [32, 0], sizes = [256, 4], strides = [1, 1]} : vector<288x4xbf16> to vector<256x4xbf16>
    %c15 = arith.constant 15 : index
    %c0_78 = arith.constant 0 : index
    %c0_79 = arith.constant 0 : index
    %123 = vector.load %arg5[%c15, %c0_78, %c0_79] : memref<16x4x8xbf16, #tpu.memory_space<vmem>>, vector<1x4x8xbf16>
    %124 = vector.shape_cast %123 : vector<1x4x8xbf16> to vector<4x8xbf16>
    %cst_80 = arith.constant dense<0.000000e+00> : vector<256x8xf32>
    %125 = tpu.matmul %122, %124, %cst_80 {dimension_numbers = #tpu.dot_dimension_numbers<[1], [0], [0], [1], [0, 0, 1, 1], [], []>} : vector<256x4xbf16>, vector<4x8xbf16>, vector<256x8xf32> -> vector<256x8xf32>
    %126 = arith.addf %121, %125 : vector<256x8xf32>
    %127 = vector.broadcast %11 : vector<1x8xf32> to vector<256x8xf32>
    %128 = arith.mulf %126, %127 : vector<256x8xf32>
    %129 = vector.broadcast %12 : vector<1x8xf32> to vector<256x8xf32>
    %130 = arith.addf %128, %129 : vector<256x8xf32>
    %cst_81 = arith.constant 0.000000e+00 : f32
    %131 = vector.broadcast %cst_81 : f32 to vector<256x8xf32>
    %132 = arith.maximumf %130, %131 : vector<256x8xf32>
    %133 = vector.shape_cast %132 : vector<256x8xf32> to vector<16x16x8xf32>
    %c0_82 = arith.constant 0 : index
    %c3_83 = arith.constant 3 : index
    %c0_84 = arith.constant 0 : index
    %c0_85 = arith.constant 0 : index
    %c0_86 = arith.constant 0 : index
    %134 = vector.load %arg8[%c0_82, %c3_83, %c0_84, %c0_85, %c0_86] : memref<1x4x16x16x8xf32, #tpu.memory_space<vmem>>, vector<1x1x16x16x8xf32>
    %135 = vector.shape_cast %134 : vector<1x1x16x16x8xf32> to vector<16x16x8xf32>
    %136 = vector.shape_cast %133 : vector<16x16x8xf32> to vector<1x1x16x16x8xf32>
    tpu.vector_store %arg8[%c0_82, %c3_83, %c0_84, %c0_85, %c0_86], %136 {strides = array<i32>} : memref<1x4x16x16x8xf32, #tpu.memory_space<vmem>>, vector<1x1x16x16x8xf32>,
    return
  }
  func.func @transform_0(%arg0: i32, %arg1: i32, %arg2: i32) -> (i32, i32, i32, i32) {
    %c0_i32 = arith.constant 0 : i32
    %c0_i32_0 = arith.constant 0 : i32
    %c0_i32_1 = arith.constant 0 : i32
    return %arg0, %arg1, %c0_i32, %c0_i32_0 : i32, i32, i32, i32
  }
  func.func @transform_1(%arg0: i32, %arg1: i32, %arg2: i32) -> (i32, i32, i32, i32) {
    %c1_i32 = arith.constant 1 : i32
    %0 = arith.addi %arg1, %c1_i32 : i32
    %c2_i32 = arith.constant 2 : i32
    %1 = arith.muli %0, %c2_i32 : i32
    %c0_i32 = arith.constant 0 : i32
    %c0_i32_0 = arith.constant 0 : i32
    %c0_i32_1 = arith.constant 0 : i32
    return %arg0, %1, %c0_i32, %c0_i32_0 : i32, i32, i32, i32
  }
  func.func @transform_2(%arg0: i32, %arg1: i32, %arg2: i32) -> (i32, i32, i32) {
    %c0_i32 = arith.constant 0 : i32
    %c0_i32_0 = arith.constant 0 : i32
    %c0_i32_1 = arith.constant 0 : i32
    return %c0_i32, %c0_i32_0, %arg2 : i32, i32, i32
  }
  func.func @transform_3(%arg0: i32, %arg1: i32, %arg2: i32) -> (i32, i32) {
    %c0_i32 = arith.constant 0 : i32
    %c0_i32_0 = arith.constant 0 : i32
    return %c0_i32, %arg2 : i32, i32
  }
  func.func @transform_4(%arg0: i32, %arg1: i32, %arg2: i32) -> (i32, i32) {
    %c0_i32 = arith.constant 0 : i32
    %c0_i32_0 = arith.constant 0 : i32
    return %c0_i32, %arg2 : i32, i32
  }
  func.func @transform_5(%arg0: i32, %arg1: i32, %arg2: i32) -> (i32, i32, i32, i32, i32) {
    %c0_i32 = arith.constant 0 : i32
    %c0_i32_0 = arith.constant 0 : i32
    %c0_i32_1 = arith.constant 0 : i32
    return %arg0, %c0_i32, %arg1, %c0_i32_0, %arg2 : i32, i32, i32, i32, i32
  }
}

</mosaic_0001>

<llo_original>
// kernel: up_conv_forward.1
$region0: #{up_conv_forward.1}
  #allocation0 [shape = 'u32[]', space=smem, size = 0x4, offset = 0x4, fixed_abs, tag = 'smem constant byte address 0x4 - core index']
  #allocation1 [shape = 'u32[144,128]{1,0:T(1,128)}', space=vmem, size = 0x12000, scoped, tag = 'internal scratch']
  %s0 = inlined_call_operand.vmem [shape: bf16[2,24,24,4], index: 0, kind: input, shape index: {}, may-alias: {0,1}]
  %s1 = inlined_call_operand.vmem [shape: bf16[2,24,24,4], index: 1, kind: input, shape index: {}, may-alias: {0,1}]
  %s2 = inlined_call_operand.vmem [shape: bf16[16,4,8], index: 2, kind: input, shape index: {}]
  %s3 = inlined_call_operand.vmem [shape: f32[1,8], index: 3, kind: input, shape index: {}]
  %s4 = inlined_call_operand.vmem [shape: f32[1,8], index: 4, kind: input, shape index: {}]
  %s5 = inlined_call_operand.vmem [shape: f32[2,4,16,16,8], index: 5, kind: output, shape index: {}]
  %s6 = sld [smem:[#allocation0]]
  $region53: #{up_conv_forward.1} parent=0
    _
  %s8 = ssub.s32 1, %s6
  %s9 = scalar_select 0, %s8, %s6
  loop: start=0, step=1, limit=4
  $region2: #{up_conv_forward.1} parent=0 // loop_pre_header
    _
  $region3: #{up_conv_forward.1} parent=0 // loop_header
    %s11 = sphi 0, %s15
    %p12 = scmp.ge.s32.totalorder %s11, 4
    %s18 = sphi 0, %s37
    %s19 = sphi 0, %s33
    %s20 = sphi 0, %s29
    %s21 = sphi 0, %s18
    %s22 = sphi 0, %s19
    %s23 = sphi 0, %s20
    %s24 = sphi 0, %s21
    %s25 = sphi 0, %s22
    %s26 = sphi 0, %s23
    %s42 = sphi 0, %s44
    %s45 = sphi 0, %s42
    %s46 = sphi 0, %s45
    %s62 = sphi 0, %s46
    %s74 = sphi 0, %s76
    %s77 = sphi 0, %s74
    %s78 = sphi 0, %s77
    %s94 = sphi 0, %s78
    %s100 = sphi 0, %s102
    %s103 = sphi 0, %s100
    %s104 = sphi 0, %s103
    %s120 = sphi 0, %s104
    %s126 = sphi 0, %s128
    %s129 = sphi 0, %s126
    %s130 = sphi 0, %s129
    %s146 = sphi 0, %s130
    %s152 = sphi 0, %s154
    %s155 = sphi 0, %s152
    %s156 = sphi 0, %s155
    %s172 = sphi 0, %s156
    %s182 = sphi 0, %s184
    %s185 = sphi 0, %s182
    %s186 = sphi 0, %s185
    %s202 = sphi 0, %s186
  $region4: #{up_conv_forward.1} parent=0 // loop_header_branch
    %14 = sbr.rel (%p12) target = $region8
  $region5: #{up_conv_forward.1} parent=0 // loop_body
    %s16 = ssub.s32 %s11, 1
    %s17 = ssub.s32 %s11, 2
    %s27 = sadd.s32 1, %s20
    %p28 = scmp.ge.s32.totalorder %s27, 1
    %s29 = scalar_select %p28, 0, %s27
    %s30 = sadd.s32 1, %s19
    %s31 = scalar_select %p28, %s30, %s19
    %p32 = scmp.ge.s32.totalorder %s31, 1
    %s33 = scalar_select %p32, 0, %s31
    %s34 = sadd.s32 1, %s18
    %s35 = scalar_select %p32, %s34, %s18
    %p36 = scmp.ge.s32.totalorder %s35, 2
    %s37 = scalar_select %p36, 0, %s35
    %s38 = ssub.s32 %s18, %s37
    %s39 = ssub.s32 %s19, %s33
    %s40 = sor.u32 %s38, %s39
    %p41 = scmp.eq.s32.totalorder %s40, 0
    %s43 = sadd.s32 %s42, 1
    %s44 = scalar_select %p41, %s42, %s43
    %p47 = pneg %p41
    %p48 = scmp.eq.s32.totalorder %s11, 1
    %p49 = por %p47, %p48
    %p50 = scmp.ne.s32.totalorder %s42, %s45
    %p51 = scmp.eq.s32.totalorder %s11, 0
    %p52 = por %p50, %p51
    %p53 = scmp.ne.s32.totalorder %s42, %s45
    %p54 = scmp.eq.s32.totalorder %s16, 1
    %p55 = por %p53, %p54
    %p56 = scmp.ne.s32.totalorder %s45, %s46
    %p57 = scmp.eq.s32.totalorder %s16, 0
    %p58 = por %p56, %p57
    %p59 = scmp.ne.s32.totalorder %s45, %s46
    %p60 = scmp.eq.s32.totalorder %s17, 1
    %p61 = por %p59, %p60
    %p63 = scmp.ne.s32.totalorder %s46, %s62
    %p64 = scmp.eq.s32.totalorder %s17, 0
    %p65 = por %p63, %p64
    %s66 = sadd.s32 %s19, 1
    %s67 = smul.u32 %s66, 2
    %s68 = sadd.s32 %s33, 1
    %s69 = smul.u32 %s68, 2
    %s70 = ssub.s32 %s18, %s37
    %s71 = ssub.s32 %s67, %s69
    %s72 = sor.u32 %s70, %s71
    %p73 = scmp.eq.s32.totalorder %s72, 0
    %s75 = sadd.s32 %s74, 1
    %s76 = scalar_select %p73, %s74, %s75
    %p79 = pneg %p73
    %p80 = scmp.eq.s32.totalorder %s11, 1
    %p81 = por %p79, %p80
    %p82 = scmp.ne.s32.totalorder %s74, %s77
    %p83 = scmp.eq.s32.totalorder %s11, 0
    %p84 = por %p82, %p83
    %p85 = scmp.ne.s32.totalorder %s74, %s77
    %p86 = scmp.eq.s32.totalorder %s16, 1
    %p87 = por %p85, %p86
    %p88 = scmp.ne.s32.totalorder %s77, %s78
    %p89 = scmp.eq.s32.totalorder %s16, 0
    %p90 = por %p88, %p89
    %p91 = scmp.ne.s32.totalorder %s77, %s78
    %p92 = scmp.eq.s32.totalorder %s17, 1
    %p93 = por %p91, %p92
    %p95 = scmp.ne.s32.totalorder %s78, %s94
    %p96 = scmp.eq.s32.totalorder %s17, 0
    %p97 = por %p95, %p96
    %s98 = ssub.s32 %s20, %s29
    %p99 = scmp.eq.s32.totalorder %s98, 0
    %s101 = sadd.s32 %s100, 1
    %s102 = scalar_select %p99, %s100, %s101
    %p105 = pneg %p99
    %p106 = scmp.eq.s32.totalorder %s11, 1
    %p107 = por %p105, %p106
    %p108 = scmp.ne.s32.totalorder %s100, %s103
    %p109 = scmp.eq.s32.totalorder %s11, 0
    %p110 = por %p108, %p109
    %p111 = scmp.ne.s32.totalorder %s100, %s103
    %p112 = scmp.eq.s32.totalorder %s16, 1
    %p113 = por %p111, %p112
    %p114 = scmp.ne.s32.totalorder %s103, %s104
    %p115 = scmp.eq.s32.totalorder %s16, 0
    %p116 = por %p114, %p115
    %p117 = scmp.ne.s32.totalorder %s103, %s104
    %p118 = scmp.eq.s32.totalorder %s17, 1
    %p119 = por %p117, %p118
    %p121 = scmp.ne.s32.totalorder %s104, %s120
    %p122 = scmp.eq.s32.totalorder %s17, 0
    %p123 = por %p121, %p122
    %s124 = ssub.s32 %s20, %s29
    %p125 = scmp.eq.s32.totalorder %s124, 0
    %s127 = sadd.s32 %s126, 1
    %s128 = scalar_select %p125, %s126, %s127
    %p131 = pneg %p125
    %p132 = scmp.eq.s32.totalorder %s11, 1
    %p133 = por %p131, %p132
    %p134 = scmp.ne.s32.totalorder %s126, %s129
    %p135 = scmp.eq.s32.totalorder %s11, 0
    %p136 = por %p134, %p135
    %p137 = scmp.ne.s32.totalorder %s126, %s129
    %p138 = scmp.eq.s32.totalorder %s16, 1
    %p139 = por %p137, %p138
    %p140 = scmp.ne.s32.totalorder %s129, %s130
    %p141 = scmp.eq.s32.totalorder %s16, 0
    %p142 = por %p140, %p141
    %p143 = scmp.ne.s32.totalorder %s129, %s130
    %p144 = scmp.eq.s32.totalorder %s17, 1
    %p145 = por %p143, %p144
    %p147 = scmp.ne.s32.totalorder %s130, %s146
    %p148 = scmp.eq.s32.totalorder %s17, 0
    %p149 = por %p147, %p148
    %s150 = ssub.s32 %s20, %s29
    %p151 = scmp.eq.s32.totalorder %s150, 0
    %s153 = sadd.s32 %s152, 1
    %s154 = scalar_select %p151, %s152, %s153
    %p157 = pneg %p151
    %p158 = scmp.eq.s32.totalorder %s11, 1
    %p159 = por %p157, %p158
    %p160 = scmp.ne.s32.totalorder %s152, %s155
    %p161 = scmp.eq.s32.totalorder %s11, 0
    %p162 = por %p160, %p161
    %p163 = scmp.ne.s32.totalorder %s152, %s155
    %p164 = scmp.eq.s32.totalorder %s16, 1
    %p165 = por %p163, %p164
    %p166 = scmp.ne.s32.totalorder %s155, %s156
    %p167 = scmp.eq.s32.totalorder %s16, 0
    %p168 = por %p166, %p167
    %p169 = scmp.ne.s32.totalorder %s155, %s156
    %p170 = scmp.eq.s32.totalorder %s17, 1
    %p171 = por %p169, %p170
    %p173 = scmp.ne.s32.totalorder %s156, %s172
    %p174 = scmp.eq.s32.totalorder %s17, 0
    %p175 = por %p173, %p174
    %s176 = ssub.s32 %s18, %s37
    %s177 = ssub.s32 %s19, %s33
    %s178 = sor.u32 %s176, %s177
    %s179 = ssub.s32 %s20, %s29
    %s180 = sor.u32 %s178, %s179
    %p181 = scmp.eq.s32.totalorder %s180, 0
    %s183 = sadd.s32 %s182, 1
    %s184 = scalar_select %p181, %s182, %s183
    %p187 = pneg %p181
    %p188 = scmp.eq.s32.totalorder %s11, 1
    %p189 = por %p187, %p188
    %p190 = scmp.ne.s32.totalorder %s182, %s185
    %p191 = scmp.eq.s32.totalorder %s11, 0
    %p192 = por %p190, %p191
    %p193 = scmp.ne.s32.totalorder %s182, %s185
    %p194 = scmp.eq.s32.totalorder %s16, 1
    %p195 = por %p193, %p194
    %p196 = scmp.ne.s32.totalorder %s185, %s186
    %p197 = scmp.eq.s32.totalorder %s16, 0
    %p198 = por %p196, %p197
    %p199 = scmp.ne.s32.totalorder %s185, %s186
    %p200 = scmp.eq.s32.totalorder %s17, 1
    %p201 = por %p199, %p200
    %p203 = scmp.ne.s32.totalorder %s186, %s202
    %p204 = scmp.eq.s32.totalorder %s17, 0
    %p205 = por %p203, %p204
    %p206 = scmp.le.s32.totalorder 1, %s11
    %p207 = scmp.lt.s32.totalorder %s11, 3
    %p208 = pnand %p206, %p207
    %p209 = pneg %p208
    // Predicated region
    $region9: #{up_conv_forward.1} parent=5 // pred_check
      _
    $region10: #{up_conv_forward.1} parent=5 // pred_check_branch
      %211 = sbr.rel (%p208) target = $region12
    $region11: #{up_conv_forward.1} parent=5 // pred_region
      %s212 = ssub.s32 %s11, 1
      // Predicated region
      $region13: #{up_conv_forward.1} parent=11 // pred_check
        %p213 = pneg %p116
      $region14: #{up_conv_forward.1} parent=11 // pred_check_branch
        %215 = sbr.rel (%p213) target = $region16
      $region15: #{up_conv_forward.1} parent=11 // pred_region
        %p216 = scmp.lt.s32.totalorder %s23, 0
        %s217 = scalar_select %p216, %s23, 0
        %s218 = smul.addr %s217, 2
        %s219 = scalar_lea.vmem %s2, %s218
      $region16: #{up_conv_forward.1} parent=11 // pred_fallthru
        _
      // Predicated region
      $region17: #{up_conv_forward.1} parent=11 // pred_check
        %p220 = pneg %p142
      $region18: #{up_conv_forward.1} parent=11 // pred_check_branch
        %222 = sbr.rel (%p220) target = $region20
      $region19: #{up_conv_forward.1} parent=11 // pred_region
        %p223 = scmp.lt.s32.totalorder %s23, 0
        %s224 = scalar_select %p223, %s23, 0
        %s225 = scalar_lea.vmem %s3, %s224
      $region20: #{up_conv_forward.1} parent=11 // pred_fallthru
        _
      // Predicated region
      $region21: #{up_conv_forward.1} parent=11 // pred_check
        %p226 = pneg %p168
      $region22: #{up_conv_forward.1} parent=11 // pred_check_branch
        %228 = sbr.rel (%p226) target = $region24
      $region23: #{up_conv_forward.1} parent=11 // pred_region
        %p229 = scmp.lt.s32.totalorder %s23, 0
        %s230 = scalar_select %p229, %s23, 0
        %s231 = scalar_lea.vmem %s4, %s230
      $region24: #{up_conv_forward.1} parent=11 // pred_fallthru
        _
    $region12: #{up_conv_forward.1} parent=5 // pred_fallthru
      _
    %p232 = scmp.lt.s32.totalorder %s11, 2
    // Predicated region
    $region25: #{up_conv_forward.1} parent=5 // pred_check
      %p233 = pneg %p232
    $region26: #{up_conv_forward.1} parent=5 // pred_check_branch
      %235 = sbr.rel (%p233) target = $region28
    $region27: #{up_conv_forward.1} parent=5 // pred_region
      // Predicated region
      $region29: #{up_conv_forward.1} parent=27 // pred_check
        %p236 = pneg %p52
      $region30: #{up_conv_forward.1} parent=27 // pred_check_branch
        %238 = sbr.rel (%p236) target = $region32
      $region31: #{up_conv_forward.1} parent=27 // pred_region
        %s239 = smul.u32 16, %s19
        %s240 = ssub.s32 24, %s239
        %p241 = scmp.lt.s32.totalorder %s240, 16
        %s242 = scalar_select %p241, %s240, 16
        %s243 = smul.u32 64, %s242
        %s244 = smul.u32 %s243, 3
        %p245 = scmp.lt.s32.totalorder %s18, 1
        %s246 = scalar_select %p245, %s18, 1
        %p247 = scmp.lt.s32.totalorder %s239, 23
        %s248 = scalar_select %p247, %s239, 23
        %s249 = smul.addr %s248, 3
        %s250 = smul.addr %s246, 72
        %s251 = sadd.s32 %s249, %s250
        %s252 = smul.addr %s251, 4
        %s253 = scalar_lea.vmem %s0, %s252
        %s254 = smul.u32 16, %s19
        %s255 = ssub.s32 24, %s254
        %p256 = scmp.lt.s32.totalorder %s255, 16
        %s257 = scalar_select %p256, %s255, 16
        %s258 = smul.u32 64, %s257
        %s259 = smul.u32 %s258, 3
      $region32: #{up_conv_forward.1} parent=27 // pred_fallthru
        _
      // Predicated region
      $region33: #{up_conv_forward.1} parent=27 // pred_check
        %p260 = pneg %p84
      $region34: #{up_conv_forward.1} parent=27 // pred_check_branch
        %262 = sbr.rel (%p260) target = $region36
      $region35: #{up_conv_forward.1} parent=27 // pred_region
        %s263 = sadd.s32 %s19, 1
        %s264 = smul.u32 %s263, 2
        %s265 = smul.u32 8, %s264
        %p266 = scmp.lt.s32.totalorder %s18, 1
        %s267 = scalar_select %p266, %s18, 1
        %p268 = scmp.lt.s32.totalorder %s265, 23
        %s269 = scalar_select %p268, %s265, 23
        %s270 = smul.addr %s269, 3
        %s271 = smul.addr %s267, 72
        %s272 = sadd.s32 %s270, %s271
        %s273 = smul.addr %s272, 4
        %s274 = scalar_lea.vmem %s1, %s273
        %s275 = sadd.s32 %s19, 1
        %s276 = smul.u32 %s275, 2
        %s277 = smul.u32 8, %s276
      $region36: #{up_conv_forward.1} parent=27 // pred_fallthru
        _
    $region28: #{up_conv_forward.1} parent=5 // pred_fallthru
      _
    %p278 = scmp.le.s32.totalorder 1, %s11
    %p279 = scmp.lt.s32.totalorder %s11, 3
    %p280 = pnand %p278, %p279
    %p281 = pneg %p280
    // Predicated region
    $region37: #{up_conv_forward.1} parent=5 // pred_check
      _
    $region38: #{up_conv_forward.1} parent=5 // pred_check_branch
      %283 = sbr.rel (%p280) target = $region40
    $region39: #{up_conv_forward.1} parent=5 // pred_region
      %s284 = ssub.s32 %s11, 1
      %s285 = smul.u32 16, %s22
      %s286 = ssub.s32 24, %s285
      %p287 = scmp.lt.s32.totalorder %s286, 16
      %s288 = scalar_select %p287, %s286, 16
      %s289 = smul.u32 64, %s288
      %s290 = smul.u32 %s289, 3
      %p291 = scmp.lt.s32.totalorder %s21, 1
      %s292 = scalar_select %p291, %s21, 1
      %p293 = scmp.lt.s32.totalorder %s285, 23
      %s294 = scalar_select %p293, %s285, 23
      %s295 = smul.addr %s294, 3
      %s296 = smul.addr %s292, 72
      %s297 = sadd.s32 %s295, %s296
      %s298 = smul.addr %s297, 4
      %s299 = scalar_lea.vmem %s0, %s298
      %p300 = pneg %p58
      %p301 = pneg %p55
      %s302 = sadd.s32 %s22, 1
      %s303 = smul.u32 %s302, 2
      %s304 = smul.u32 8, %s303
      %p305 = scmp.lt.s32.totalorder %s21, 1
      %s306 = scalar_select %p305, %s21, 1
      %p307 = scmp.lt.s32.totalorder %s304, 23
      %s308 = scalar_select %p307, %s304, 23
      %s309 = smul.addr %s308, 3
      %s310 = smul.addr %s306, 72
      %s311 = sadd.s32 %s309, %s310
      %s312 = smul.addr %s311, 4
      %s313 = scalar_lea.vmem %s1, %s312
      %p314 = pneg %p90
      %p315 = pneg %p87
      %p316 = scmp.lt.s32.totalorder %s23, 0
      %s317 = scalar_select %p316, %s23, 0
      %s318 = smul.addr %s317, 2
      %s319 = scalar_lea.vmem %s2, %s318
      %p320 = pneg %p116
      %p321 = pneg %p113
      %p322 = scmp.lt.s32.totalorder %s23, 0
      %s323 = scalar_select %p322, %s23, 0
      %s324 = scalar_lea.vmem %s3, %s323
      %p325 = pneg %p142
      %p326 = pneg %p139
      %p327 = scmp.lt.s32.totalorder %s23, 0
      %s328 = scalar_select %p327, %s23, 0
      %s329 = scalar_lea.vmem %s4, %s328
      %p330 = pneg %p168
      %p331 = pneg %p165
      %p332 = pneg %p198
      %p333 = pneg %p195
      %s334 = smul.u32 16, %s22
      %p335 = scmp.lt.s32.totalorder %s21, 1
      %s336 = scalar_select %p335, %s21, 1
      %p337 = scmp.lt.s32.totalorder %s334, 15
      %s338 = scalar_select %p337, %s334, 15
      %p339 = scmp.lt.s32.totalorder %s23, 0
      %s340 = scalar_select %p339, %s23, 0
      %s341 = smul.addr %s338, 2
      %s342 = sadd.s32 %s340, %s341
      %s343 = smul.addr %s336, 128
      %s344 = sadd.s32 %s342, %s343
      %s345 = smul.addr %s344, 8
      %s346 = scalar_lea.vmem %s5, %s345
      %s347 = smul.u32 16, %s22
      %s348 = ssub.s32 24, %s347
      %p349 = scmp.lt.s32.totalorder %s348, 16
      %s350 = scalar_select %p349, %s348, 16
      %s351 = smul.u32 64, %s350
      %s352 = smul.u32 %s351, 3
      %p353 = scmp.lt.s32.totalorder %s21, 1
      %s354 = scalar_select %p353, %s21, 1
      %p355 = scmp.lt.s32.totalorder %s347, 23
      %s356 = scalar_select %p355, %s347, 23
      %s357 = smul.addr %s356, 3
      %s358 = smul.addr %s354, 72
      %s359 = sadd.s32 %s357, %s358
      %s360 = smul.addr %s359, 4
      %s361 = scalar_lea.vmem %s0, %s360
      %s362 = smul.u32 16, %s22
      %s363 = ssub.s32 24, %s362
      %p364 = scmp.lt.s32.totalorder %s363, 16
      %s365 = scalar_select %p364, %s363, 16
      %s366 = smul.u32 64, %s365
      %s367 = smul.u32 %s366, 3
      %s368 = sadd.s32 %s22, 1
      %s369 = smul.u32 %s368, 2
      %s370 = smul.u32 8, %s369
      %p371 = scmp.lt.s32.totalorder %s21, 1
      %s372 = scalar_select %p371, %s21, 1
      %p373 = scmp.lt.s32.totalorder %s370, 23
      %s374 = scalar_select %p373, %s370, 23
      %s375 = smul.addr %s374, 3
      %s376 = smul.addr %s372, 72
      %s377 = sadd.s32 %s375, %s376
      %s378 = smul.addr %s377, 4
      %s379 = scalar_lea.vmem %s1, %s378
      %s380 = sadd.s32 %s22, 1
      %s381 = smul.u32 %s380, 2
      %s382 = smul.u32 8, %s381
      %p383 = scmp.lt.s32.totalorder %s23, 0
      %s384 = scalar_select %p383, %s23, 0
      %s385 = smul.addr %s384, 2
      %s386 = scalar_lea.vmem %s2, %s385
      %p387 = scmp.lt.s32.totalorder %s23, 0
      %s388 = scalar_select %p387, %s23, 0
      %s389 = scalar_lea.vmem %s3, %s388
      %p390 = scmp.lt.s32.totalorder %s23, 0
      %s391 = scalar_select %p390, %s23, 0
      %s392 = scalar_lea.vmem %s4, %s391
      %s393 = smul.u32 16, %s22
      %p394 = scmp.lt.s32.totalorder %s21, 1
      %s395 = scalar_select %p394, %s21, 1
      %p396 = scmp.lt.s32.totalorder %s393, 15
      %s397 = scalar_select %p396, %s393, 15
      %p398 = scmp.lt.s32.totalorder %s23, 0
      %s399 = scalar_select %p398, %s23, 0
      %s400 = smul.addr %s397, 2
      %s401 = sadd.s32 %s399, %s400
      %s402 = smul.addr %s395, 128
      %s403 = sadd.s32 %s401, %s402
      %s404 = smul.addr %s403, 8
      %s405 = scalar_lea.vmem %s5, %s404
      %s406 = smul.u32 16, %s22
      %v408 = vld [vmem:[%s361] sm:$0xf]
      %v409 = vld [vmem:[%s361 + $0x4] sm:$0xf]
      %v410 = vld [vmem:[%s361 + $0x8] sm:$0xf]
      %v411 = vld [vmem:[%s361 + $0xc] sm:$0xf]
      %v412 = vld [vmem:[%s361 + $0x10] sm:$0xf]
      %v413 = vld [vmem:[%s361 + $0x14] sm:$0xf]
      %v414 = vld [vmem:[%s361 + $0x18] sm:$0xf]
      %v415 = vld [vmem:[%s361 + $0x1c] sm:$0xf]
      %v416 = vld [vmem:[%s361 + $0x20] sm:$0xf]
      %v417 = vld [vmem:[%s361 + $0x24] sm:$0xf]
      %v418 = vld [vmem:[%s361 + $0x28] sm:$0xf]
      %v419 = vld [vmem:[%s361 + $0x2c] sm:$0xf]
      %v420 = vld [vmem:[%s361 + $0x30] sm:$0xf]
      %v421 = vld [vmem:[%s361 + $0x34] sm:$0xf]
      %v422 = vld [vmem:[%s361 + $0x38] sm:$0xf]
      %v423 = vld [vmem:[%s361 + $0x3c] sm:$0xf]
      %v424 = vld [vmem:[%s361 + $0x40] sm:$0xf]
      %v425 = vld [vmem:[%s361 + $0x44] sm:$0xf]
      %v426 = vld [vmem:[%s361 + $0x48] sm:$0xf]
      %v427 = vld [vmem:[%s361 + $0x4c] sm:$0xf]
      %v428 = vld [vmem:[%s361 + $0x50] sm:$0xf]
      %v429 = vld [vmem:[%s361 + $0x54] sm:$0xf]
      %v430 = vld [vmem:[%s361 + $0x58] sm:$0xf]
      %v431 = vld [vmem:[%s361 + $0x5c] sm:$0xf]
      %v432 = vld [vmem:[%s361 + $0x60] sm:$0xf]
      %v433 = vld [vmem:[%s361 + $0x64] sm:$0xf]
      %v434 = vld [vmem:[%s361 + $0x68] sm:$0xf]
      %v435 = vld [vmem:[%s361 + $0x6c] sm:$0xf]
      %v436 = vld [vmem:[%s361 + $0x70] sm:$0xf]
      %v437 = vld [vmem:[%s361 + $0x74] sm:$0xf]
      %v438 = vld [vmem:[%s361 + $0x78] sm:$0xf]
      %v439 = vld [vmem:[%s361 + $0x7c] sm:$0xf]
      %v440 = vld [vmem:[%s361 + $0x80] sm:$0xf]
      %v441 = vld [vmem:[%s361 + $0x84] sm:$0xf]
      %v442 = vld [vmem:[%s361 + $0x88] sm:$0xf]
      %v443 = vld [vmem:[%s361 + $0x8c] sm:$0xf]
      %v444 = vld [vmem:[%s361 + $0x90] sm:$0xf]
      %v445 = vld [vmem:[%s361 + $0x94] sm:$0xf]
      %v446 = vld [vmem:[%s361 + $0x98] sm:$0xf]
      %v447 = vld [vmem:[%s361 + $0x9c] sm:$0xf]
      %v448 = vld [vmem:[%s361 + $0xa0] sm:$0xf]
      %v449 = vld [vmem:[%s361 + $0xa4] sm:$0xf]
      %v450 = vld [vmem:[%s361 + $0xa8] sm:$0xf]
      %v451 = vld [vmem:[%s361 + $0xac] sm:$0xf]
      %v452 = vld [vmem:[%s361 + $0xb0] sm:$0xf]
      %v453 = vld [vmem:[%s361 + $0xb4] sm:$0xf]
      %v454 = vld [vmem:[%s361 + $0xb8] sm:$0xf]
      %v455 = vld [vmem:[%s361 + $0xbc] sm:$0xf]
      %v456 = vld [vmem:[%s379] sm:$0xf]
      %v457 = vld [vmem:[%s379 + $0x4] sm:$0xf]
      %v458 = vld [vmem:[%s379 + $0x8] sm:$0xf]
      %v459 = vld [vmem:[%s379 + $0xc] sm:$0xf]
      %v460 = vld [vmem:[%s379 + $0x10] sm:$0xf]
      %v461 = vld [vmem:[%s379 + $0x14] sm:$0xf]
      %vm462 = vsmask.f32 3328
      %vm463 = vsmask.f32 7440
      %vm464 = vmor %vm462, %vm463
      %v466 = vshrl.u32 %v408, 16
      %v468 = vrot.slane %v466, 4
      %v469 = vshll.u32 %v408, 16
      %v471 = vrot.slane %v469, 5
      %v472 = vor.u32 %v468, %v471
      %v473 = vrot.slane %v472, 4
      %v475 = vshll.u32 %v409, 16
      %v477 = vrot.slane %v475, 5
      %v478 = vsel %vm464, %v473, %v477
      %v479 = vshrl.u32 %v409, 16
      %v481 = vrot.slane %v479, 4
      %v482 = vor.u32 %v481, %v477
      %v483 = vrot.slane %v482, 4
      %v485 = vshll.u32 %v410, 16
      %v487 = vrot.slane %v485, 5
      %v488 = vsel %vm464, %v483, %v487
      %v490 = vshrl.u32 %v411, 16
      %v492 = vrot.slane %v490, 4
      %v493 = vshll.u32 %v411, 16
      %v495 = vrot.slane %v493, 5
      %v496 = vor.u32 %v492, %v495
      %v497 = vrot.slane %v496, 4
      %v499 = vshll.u32 %v412, 16
      %v501 = vrot.slane %v499, 5
      %v502 = vsel %vm464, %v497, %v501
      %v503 = vshrl.u32 %v412, 16
      %v505 = vrot.slane %v503, 4
      %v506 = vor.u32 %v505, %v501
      %v507 = vrot.slane %v506, 4
      %v509 = vshll.u32 %v413, 16
      %v511 = vrot.slane %v509, 5
      %v512 = vsel %vm464, %v507, %v511
      %v514 = vshrl.u32 %v414, 16
      %v516 = vrot.slane %v514, 4
      %v517 = vshll.u32 %v414, 16
      %v519 = vrot.slane %v517, 5
      %v520 = vor.u32 %v516, %v519
      %v521 = vrot.slane %v520, 4
      %v523 = vshll.u32 %v415, 16
      %v525 = vrot.slane %v523, 5
      %v526 = vsel %vm464, %v521, %v525
      %v527 = vshrl.u32 %v415, 16
      %v529 = vrot.slane %v527, 4
      %v530 = vor.u32 %v529, %v525
      %v531 = vrot.slane %v530, 4
      %v533 = vshll.u32 %v416, 16
      %v535 = vrot.slane %v533, 5
      %v536 = vsel %vm464, %v531, %v535
      %v538 = vshrl.u32 %v417, 16
      %v540 = vrot.slane %v538, 4
      %v541 = vshll.u32 %v417, 16
      %v543 = vrot.slane %v541, 5
      %v544 = vor.u32 %v540, %v543
      %v545 = vrot.slane %v544, 4
      %v547 = vshll.u32 %v418, 16
      %v549 = vrot.slane %v547, 5
      %v550 = vsel %vm464, %v545, %v549
      %v551 = vshrl.u32 %v418, 16
      %v553 = vrot.slane %v551, 4
      %v554 = vor.u32 %v553, %v549
      %v555 = vrot.slane %v554, 4
      %v557 = vshll.u32 %v419, 16
      %v559 = vrot.slane %v557, 5
      %v560 = vsel %vm464, %v555, %v559
      %v562 = vshrl.u32 %v420, 16
      %v564 = vrot.slane %v562, 4
      %v565 = vshll.u32 %v420, 16
      %v567 = vrot.slane %v565, 5
      %v568 = vor.u32 %v564, %v567
      %v569 = vrot.slane %v568, 4
      %v571 = vshll.u32 %v421, 16
      %v573 = vrot.slane %v571, 5
      %v574 = vsel %vm464, %v569, %v573
      %v575 = vshrl.u32 %v421, 16
      %v577 = vrot.slane %v575, 4
      %v578 = vor.u32 %v577, %v573
      %v579 = vrot.slane %v578, 4
      %v581 = vshll.u32 %v422, 16
      %v583 = vrot.slane %v581, 5
      %v584 = vsel %vm464, %v579, %v583
      %v586 = vshrl.u32 %v423, 16
      %v588 = vrot.slane %v586, 4
      %v589 = vshll.u32 %v423, 16
      %v591 = vrot.slane %v589, 5
      %v592 = vor.u32 %v588, %v591
      %v593 = vrot.slane %v592, 4
      %v595 = vshll.u32 %v424, 16
      %v597 = vrot.slane %v595, 5
      %v598 = vsel %vm464, %v593, %v597
      %v599 = vshrl.u32 %v424, 16
      %v601 = vrot.slane %v599, 4
      %v602 = vor.u32 %v601, %v597
      %v603 = vrot.slane %v602, 4
      %v605 = vshll.u32 %v425, 16
      %v607 = vrot.slane %v605, 5
      %v608 = vsel %vm464, %v603, %v607
      %v610 = vshrl.u32 %v426, 16
      %v612 = vrot.slane %v610, 4
      %v613 = vshll.u32 %v426, 16
      %v615 = vrot.slane %v613, 5
      %v616 = vor.u32 %v612, %v615
      %v617 = vrot.slane %v616, 4
      %v619 = vshll.u32 %v427, 16
      %v621 = vrot.slane %v619, 5
      %v622 = vsel %vm464, %v617, %v621
      %v623 = vshrl.u32 %v427, 16
      %v625 = vrot.slane %v623, 4
      %v626 = vor.u32 %v625, %v621
      %v627 = vrot.slane %v626, 4
      %v629 = vshll.u32 %v428, 16
      %v631 = vrot.slane %v629, 5
      %v632 = vsel %vm464, %v627, %v631
      %v634 = vshrl.u32 %v429, 16
      %v636 = vrot.slane %v634, 4
      %v637 = vshll.u32 %v429, 16
      %v639 = vrot.slane %v637, 5
      %v640 = vor.u32 %v636, %v639
      %v641 = vrot.slane %v640, 4
      %v643 = vshll.u32 %v430, 16
      %v645 = vrot.slane %v643, 5
      %v646 = vsel %vm464, %v641, %v645
      %v647 = vshrl.u32 %v430, 16
      %v649 = vrot.slane %v647, 4
      %v650 = vor.u32 %v649, %v645
      %v651 = vrot.slane %v650, 4
      %v653 = vshll.u32 %v431, 16
      %v655 = vrot.slane %v653, 5
      %v656 = vsel %vm464, %v651, %v655
      %v658 = vshrl.u32 %v432, 16
      %v660 = vrot.slane %v658, 4
      %v661 = vshll.u32 %v432, 16
      %v663 = vrot.slane %v661, 5
      %v664 = vor.u32 %v660, %v663
      %v665 = vrot.slane %v664, 4
      %v667 = vshll.u32 %v433, 16
      %v669 = vrot.slane %v667, 5
      %v670 = vsel %vm464, %v665, %v669
      %v671 = vshrl.u32 %v433, 16
      %v673 = vrot.slane %v671, 4
      %v674 = vor.u32 %v673, %v669
      %v675 = vrot.slane %v674, 4
      %v677 = vshll.u32 %v434, 16
      %v679 = vrot.slane %v677, 5
      %v680 = vsel %vm464, %v675, %v679
      %v682 = vshrl.u32 %v435, 16
      %v684 = vrot.slane %v682, 4
      %v685 = vshll.u32 %v435, 16
      %v687 = vrot.slane %v685, 5
      %v688 = vor.u32 %v684, %v687
      %v689 = vrot.slane %v688, 4
      %v691 = vshll.u32 %v436, 16
      %v693 = vrot.slane %v691, 5
      %v694 = vsel %vm464, %v689, %v693
      %v695 = vshrl.u32 %v436, 16
      %v697 = vrot.slane %v695, 4
      %v698 = vor.u32 %v697, %v693
      %v699 = vrot.slane %v698, 4
      %v701 = vshll.u32 %v437, 16
      %v703 = vrot.slane %v701, 5
      %v704 = vsel %vm464, %v699, %v703
      %v706 = vshrl.u32 %v438, 16
      %v708 = vrot.slane %v706, 4
      %v709 = vshll.u32 %v438, 16
      %v711 = vrot.slane %v709, 5
      %v712 = vor.u32 %v708, %v711
      %v713 = vrot.slane %v712, 4
      %v715 = vshll.u32 %v439, 16
      %v717 = vrot.slane %v715, 5
      %v718 = vsel %vm464, %v713, %v717
      %v719 = vshrl.u32 %v439, 16
      %v721 = vrot.slane %v719, 4
      %v722 = vor.u32 %v721, %v717
      %v723 = vrot.slane %v722, 4
      %v725 = vshll.u32 %v440, 16
      %v727 = vrot.slane %v725, 5
      %v728 = vsel %vm464, %v723, %v727
      %v730 = vshrl.u32 %v441, 16
      %v732 = vrot.slane %v730, 4
      %v733 = vshll.u32 %v441, 16
      %v735 = vrot.slane %v733, 5
      %v736 = vor.u32 %v732, %v735
      %v737 = vrot.slane %v736, 4
      %v739 = vshll.u32 %v442, 16
      %v741 = vrot.slane %v739, 5
      %v742 = vsel %vm464, %v737, %v741
      %v743 = vshrl.u32 %v442, 16
      %v745 = vrot.slane %v743, 4
      %v746 = vor.u32 %v745, %v741
      %v747 = vrot.slane %v746, 4
      %v749 = vshll.u32 %v443, 16
      %v751 = vrot.slane %v749, 5
      %v752 = vsel %vm464, %v747, %v751
      %v754 = vshrl.u32 %v444, 16
      %v756 = vrot.slane %v754, 4
      %v757 = vshll.u32 %v444, 16
      %v759 = vrot.slane %v757, 5
      %v760 = vor.u32 %v756, %v759
      %v761 = vrot.slane %v760, 4
      %v763 = vshll.u32 %v445, 16
      %v765 = vrot.slane %v763, 5
      %v766 = vsel %vm464, %v761, %v765
      %v767 = vshrl.u32 %v445, 16
      %v769 = vrot.slane %v767, 4
      %v770 = vor.u32 %v769, %v765
      %v771 = vrot.slane %v770, 4
      %v773 = vshll.u32 %v446, 16
      %v775 = vrot.slane %v773, 5
      %v776 = vsel %vm464, %v771, %v775
      %v778 = vshrl.u32 %v447, 16
      %v780 = vrot.slane %v778, 4
      %v781 = vshll.u32 %v447, 16
      %v783 = vrot.slane %v781, 5
      %v784 = vor.u32 %v780, %v783
      %v785 = vrot.slane %v784, 4
      %v787 = vshll.u32 %v448, 16
      %v789 = vrot.slane %v787, 5
      %v790 = vsel %vm464, %v785, %v789
      %v791 = vshrl.u32 %v448, 16
      %v793 = vrot.slane %v791, 4
      %v794 = vor.u32 %v793, %v789
      %v795 = vrot.slane %v794, 4
      %v797 = vshll.u32 %v449, 16
      %v799 = vrot.slane %v797, 5
      %v800 = vsel %vm464, %v795, %v799
      %v802 = vshrl.u32 %v450, 16
      %v804 = vrot.slane %v802, 4
      %v805 = vshll.u32 %v450, 16
      %v807 = vrot.slane %v805, 5
      %v808 = vor.u32 %v804, %v807
      %v809 = vrot.slane %v808, 4
      %v811 = vshll.u32 %v451, 16
      %v813 = vrot.slane %v811, 5
      %v814 = vsel %vm464, %v809, %v813
      %v815 = vshrl.u32 %v451, 16
      %v817 = vrot.slane %v815, 4
      %v818 = vor.u32 %v817, %v813
      %v819 = vrot.slane %v818, 4
      %v821 = vshll.u32 %v452, 16
      %v823 = vrot.slane %v821, 5
      %v824 = vsel %vm464, %v819, %v823
      %v826 = vshrl.u32 %v453, 16
      %v828 = vrot.slane %v826, 4
      %v829 = vshll.u32 %v453, 16
      %v831 = vrot.slane %v829, 5
      %v832 = vor.u32 %v828, %v831
      %v833 = vrot.slane %v832, 4
      %v835 = vshll.u32 %v454, 16
      %v837 = vrot.slane %v835, 5
      %v838 = vsel %vm464, %v833, %v837
      %v839 = vshrl.u32 %v454, 16
      %v841 = vrot.slane %v839, 4
      %v842 = vor.u32 %v841, %v837
      %v843 = vrot.slane %v842, 4
      %v845 = vshll.u32 %v455, 16
      %v847 = vrot.slane %v845, 5
      %v848 = vsel %vm464, %v843, %v847
      %v850 = vshrl.u32 %v456, 16
      %v852 = vrot.slane %v850, 4
      %v853 = vshll.u32 %v456, 16
      %v855 = vrot.slane %v853, 5
      %v856 = vor.u32 %v852, %v855
      %v857 = vrot.slane %v856, 4
      %v859 = vshll.u32 %v457, 16
      %v861 = vrot.slane %v859, 5
      %v862 = vsel %vm464, %v857, %v861
      %v863 = vshrl.u32 %v457, 16
      %v865 = vrot.slane %v863, 4
      %v866 = vor.u32 %v865, %v861
      %v867 = vrot.slane %v866, 4
      %v869 = vshll.u32 %v458, 16
      %v871 = vrot.slane %v869, 5
      %v872 = vsel %vm464, %v867, %v871
      %v874 = vshrl.u32 %v459, 16
      %v876 = vrot.slane %v874, 4
      %v877 = vshll.u32 %v459, 16
      %v879 = vrot.slane %v877, 5
      %v880 = vor.u32 %v876, %v879
      %v881 = vrot.slane %v880, 4
      %v883 = vshll.u32 %v460, 16
      %v885 = vrot.slane %v883, 5
      %v886 = vsel %vm464, %v881, %v885
      %v887 = vshrl.u32 %v460, 16
      %v889 = vrot.slane %v887, 4
      %v890 = vor.u32 %v889, %v885
      %v891 = vrot.slane %v890, 4
      %v893 = vshll.u32 %v461, 16
      %v895 = vrot.slane %v893, 5
      %v896 = vsel %vm464, %v891, %v895
      %vm951 = vcmask 1042432
      %vm952 = vcmask 1046532
      %vm953 = vmor %vm951, %vm952
      %v954 = vrot.slane %v408, 5
      %v955 = vrot.slane %v954, 4
      %v956 = vrot.slane %v409, 5
      %v957 = vsel %vm953, %v955, %v956
      %v958 = vrot.slane %v956, 4
      %v959 = vrot.slane %v410, 5
      %v960 = vsel %vm953, %v958, %v959
      %v961 = vrot.slane %v411, 5
      %v962 = vrot.slane %v961, 4
      %v963 = vrot.slane %v412, 5
      %v964 = vsel %vm953, %v962, %v963
      %v965 = vrot.slane %v963, 4
      %v966 = vrot.slane %v413, 5
      %v967 = vsel %vm953, %v965, %v966
      %v968 = vrot.slane %v414, 5
      %v969 = vrot.slane %v968, 4
      %v970 = vrot.slane %v415, 5
      %v971 = vsel %vm953, %v969, %v970
      %v972 = vrot.slane %v970, 4
      %v973 = vrot.slane %v416, 5
      %v974 = vsel %vm953, %v972, %v973
      %v975 = vrot.slane %v417, 5
      %v976 = vrot.slane %v975, 4
      %v977 = vrot.slane %v418, 5
      %v978 = vsel %vm953, %v976, %v977
      %v979 = vrot.slane %v977, 4
      %v980 = vrot.slane %v419, 5
      %v981 = vsel %vm953, %v979, %v980
      %v982 = vrot.slane %v420, 5
      %v983 = vrot.slane %v982, 4
      %v984 = vrot.slane %v421, 5
      %v985 = vsel %vm953, %v983, %v984
      %v986 = vrot.slane %v984, 4
      %v987 = vrot.slane %v422, 5
      %v988 = vsel %vm953, %v986, %v987
      %v989 = vrot.slane %v423, 5
      %v990 = vrot.slane %v989, 4
      %v991 = vrot.slane %v424, 5
      %v992 = vsel %vm953, %v990, %v991
      %v993 = vrot.slane %v991, 4
      %v994 = vrot.slane %v425, 5
      %v995 = vsel %vm953, %v993, %v994
      %v996 = vrot.slane %v426, 5
      %v997 = vrot.slane %v996, 4
      %v998 = vrot.slane %v427, 5
      %v999 = vsel %vm953, %v997, %v998
      %v1000 = vrot.slane %v998, 4
      %v1001 = vrot.slane %v428, 5
      %v1002 = vsel %vm953, %v1000, %v1001
      %v1003 = vrot.slane %v429, 5
      %v1004 = vrot.slane %v1003, 4
      %v1005 = vrot.slane %v430, 5
      %v1006 = vsel %vm953, %v1004, %v1005
      %v1007 = vrot.slane %v1005, 4
      %v1008 = vrot.slane %v431, 5
      %v1009 = vsel %vm953, %v1007, %v1008
      %v1010 = vrot.slane %v432, 5
      %v1011 = vrot.slane %v1010, 4
      %v1012 = vrot.slane %v433, 5
      %v1013 = vsel %vm953, %v1011, %v1012
      %v1014 = vrot.slane %v1012, 4
      %v1015 = vrot.slane %v434, 5
      %v1016 = vsel %vm953, %v1014, %v1015
      %v1017 = vrot.slane %v435, 5
      %v1018 = vrot.slane %v1017, 4
      %v1019 = vrot.slane %v436, 5
      %v1020 = vsel %vm953, %v1018, %v1019
      %v1021 = vrot.slane %v1019, 4
      %v1022 = vrot.slane %v437, 5
      %v1023 = vsel %vm953, %v1021, %v1022
      %v1024 = vrot.slane %v438, 5
      %v1025 = vrot.slane %v1024, 4
      %v1026 = vrot.slane %v439, 5
      %v1027 = vsel %vm953, %v1025, %v1026
      %v1028 = vrot.slane %v1026, 4
      %v1029 = vrot.slane %v440, 5
      %v1030 = vsel %vm953, %v1028, %v1029
      %v1031 = vrot.slane %v441, 5
      %v1032 = vrot.slane %v1031, 4
      %v1033 = vrot.slane %v442, 5
      %v1034 = vsel %vm953, %v1032, %v1033
      %v1035 = vrot.slane %v1033, 4
      %v1036 = vrot.slane %v443, 5
      %v1037 = vsel %vm953, %v1035, %v1036
      %v1038 = vrot.slane %v444, 5
      %v1039 = vrot.slane %v1038, 4
      %v1040 = vrot.slane %v445, 5
      %v1041 = vsel %vm953, %v1039, %v1040
      %v1042 = vrot.slane %v1040, 4
      %v1043 = vrot.slane %v446, 5
      %v1044 = vsel %vm953, %v1042, %v1043
      %v1045 = vrot.slane %v447, 5
      %v1046 = vrot.slane %v1045, 4
      %v1047 = vrot.slane %v448, 5
      %v1048 = vsel %vm953, %v1046, %v1047
      %v1049 = vrot.slane %v1047, 4
      %v1050 = vrot.slane %v449, 5
      %v1051 = vsel %vm953, %v1049, %v1050
      %v1052 = vrot.slane %v450, 5
      %v1053 = vrot.slane %v1052, 4
      %v1054 = vrot.slane %v451, 5
      %v1055 = vsel %vm953, %v1053, %v1054
      %v1056 = vrot.slane %v1054, 4
      %v1057 = vrot.slane %v452, 5
      %v1058 = vsel %vm953, %v1056, %v1057
      %v1059 = vrot.slane %v453, 5
      %v1060 = vrot.slane %v1059, 4
      %v1061 = vrot.slane %v454, 5
      %v1062 = vsel %vm953, %v1060, %v1061
      %v1063 = vrot.slane %v1061, 4
      %v1064 = vrot.slane %v455, 5
      %v1065 = vsel %vm953, %v1063, %v1064
      %v1066 = vrot.slane %v456, 5
      %v1067 = vrot.slane %v1066, 4
      %v1068 = vrot.slane %v457, 5
      %v1069 = vsel %vm953, %v1067, %v1068
      %v1070 = vrot.slane %v1068, 4
      %v1071 = vrot.slane %v458, 5
      %v1072 = vsel %vm953, %v1070, %v1071
      %v1073 = vrot.slane %v459, 5
      %v1074 = vrot.slane %v1073, 4
      %v1075 = vrot.slane %v460, 5
      %v1076 = vsel %vm953, %v1074, %v1075
      %v1077 = vrot.slane %v1075, 4
      %v1078 = vrot.slane %v461, 5
      %v1079 = vsel %vm953, %v1077, %v1078
      %v1080 = vld [vmem:[%s389] sm:$0x1]
      %v1081 = vld [vmem:[%s392] sm:$0x1]
      %v1082 = vld [vmem:[%s386] sm:$0x3]
      %s1083 = scalar_lea.vmem %s386, 2
      %v1084 = vld [vmem:[%s1083] sm:$0x3]
      %v1085 = vunpack.c.l.b16 %v478
      %v1086 = vunpack.c.l.b16 %v488
      %v1087 = vunpack.c.l.b16 %v502
      %v1088 = vunpack.c.l.b16 %v512
      %v1089 = vunpack.c.l.b16 %v526
      %v1090 = vunpack.c.l.b16 %v536
      %v1091 = vunpack.c.l.b16 %v550
      %v1092 = vunpack.c.l.b16 %v560
      %v1093 = vunpack.c.l.b16 %v574
      %v1094 = vunpack.c.l.b16 %v584
      %v1095 = vunpack.c.l.b16 %v598
      %v1096 = vunpack.c.l.b16 %v608
      %v1097 = vunpack.c.l.b16 %v622
      %v1098 = vunpack.c.l.b16 %v632
      %v1099 = vunpack.c.l.b16 %v646
      %v1100 = vunpack.c.l.b16 %v656
      %v1101 = vunpack.c.l.b16 %v670
      %v1102 = vunpack.c.l.b16 %v680
      %v1103 = vunpack.c.l.b16 %v694
      %v1104 = vunpack.c.l.b16 %v704
      %v1105 = vunpack.c.l.b16 %v718
      %v1106 = vunpack.c.l.b16 %v728
      %v1107 = vunpack.c.l.b16 %v742
      %v1108 = vunpack.c.l.b16 %v752
      %v1109 = vunpack.c.l.b16 %v766
      %v1110 = vunpack.c.l.b16 %v776
      %v1111 = vunpack.c.l.b16 %v790
      %v1112 = vunpack.c.l.b16 %v800
      %v1113 = vunpack.c.l.b16 %v814
      %v1114 = vunpack.c.l.b16 %v824
      %v1115 = vunpack.c.l.b16 %v838
      %v1116 = vunpack.c.l.b16 %v848
      %v1117 = vpack.c.b16 %v1086, %v1085
      %v1118 = vpack.c.b16 %v1088, %v1087
      %v1119 = vpack.c.b16 %v1090, %v1089
      %v1120 = vpack.c.b16 %v1092, %v1091
      %v1121 = vpack.c.b16 %v1094, %v1093
      %v1122 = vpack.c.b16 %v1096, %v1095
      %v1123 = vpack.c.b16 %v1098, %v1097
      %v1124 = vpack.c.b16 %v1100, %v1099
      %v1125 = vpack.c.b16 %v1102, %v1101
      %v1126 = vpack.c.b16 %v1104, %v1103
      %v1127 = vpack.c.b16 %v1106, %v1105
      %v1128 = vpack.c.b16 %v1108, %v1107
      %v1129 = vpack.c.b16 %v1110, %v1109
      %v1130 = vpack.c.b16 %v1112, %v1111
      %v1131 = vpack.c.b16 %v1114, %v1113
      %v1132 = vpack.c.b16 %v1116, %v1115
      %vm1133 = vcmask 31744
      %v1135 = vsel %vm1133, %v1117, 0
      %v1138 = vsel %vm1133, %v1118, 0
      %v1141 = vsel %vm1133, %v1119, 0
      %v1144 = vsel %vm1133, %v1120, 0
      %v1147 = vsel %vm1133, %v1121, 0
      %v1150 = vsel %vm1133, %v1122, 0
      %v1153 = vsel %vm1133, %v1123, 0
      %v1156 = vsel %vm1133, %v1124, 0
      %v1159 = vsel %vm1133, %v1125, 0
      %v1162 = vsel %vm1133, %v1126, 0
      %v1165 = vsel %vm1133, %v1127, 0
      %v1168 = vsel %vm1133, %v1128, 0
      %v1171 = vsel %vm1133, %v1129, 0
      %v1174 = vsel %vm1133, %v1130, 0
      %v1177 = vsel %vm1133, %v1131, 0
      %v1180 = vsel %vm1133, %v1132, 0
      %vm1182 = vcmask 1041408
      %v1184 = vsel %vm1182, %v1084, 0
      %1186 = vmatprep.subr.bf16.mxu0 0
      %1187 = vmatpush1.bf16.msra.mxu0 0
      %1188 = vmatprep.subr.bf16.mxu0 0
      %1189 = vmatpush1.bf16.msra.mxu0 0
      %1190 = vmatprep.subr.bf16.mxu0 0
      %1191 = vmatpush1.bf16.msra.mxu0 0
      %1192 = vmatprep.subr.bf16.mxu0 0
      %1193 = vmatpush1.bf16.msra.mxu0 0
      %1194 = vmatprep.subr.bf16.mxu0 0
      %1195 = vmatpush1.bf16.msra.mxu0 0
      %1196 = vmatprep.subr.bf16.mxu0 0
      %1197 = vmatpush1.bf16.msra.mxu0 0
      %1198 = vmatprep.subr.bf16.mxu0 0
      %1199 = vmatpush1.bf16.msra.mxu0 0
      %1200 = vmatprep.subr.bf16.mxu0 0
      %1201 = vmatpush1.bf16.msra.mxu0 %v1184
      %1202 = vmatprep.subr.bf16.mxu0 0
      %1203 = vmatpush2.bf16.msra.mxu0 0
      %1204 = vmatprep.subr.bf16.mxu0 0
      %1205 = vmatpush2.bf16.msra.mxu0 0
      %1206 = vmatprep.subr.bf16.mxu0 0
      %1207 = vmatpush2.bf16.msra.mxu0 0
      %1208 = vmatprep.subr.bf16.mxu0 0
      %1209 = vmatpush2.bf16.msra.mxu0 0
      %1210 = vmatprep.subr.bf16.mxu0 0
      %1211 = vmatpush2.bf16.msra.mxu0 0
      %1212 = vmatprep.subr.bf16.mxu0 0
      %1213 = vmatpush2.bf16.msra.mxu0 0
      %1214 = vmatprep.subr.bf16.mxu0 0
      %1215 = vmatpush2.bf16.msra.mxu0 0
      %1216 = vmatprep.subr.bf16.mxu0 0
      %1217 = vmatpush2.bf16.msra.mxu0 0
      %1218 = vmatprep.mubr.bf16.mxu0 0
      %1219 = vmatmul.mubr.bf16.gmra.mxu0 %v1135
      %v1220 = vpop.f32.mrf.mxu0
      %v1221 = vadd.f32 0.0, %v1220
      %v1222 = vpop.f32.mrf.mxu0
      %v1223 = vpop.f32.mrf.mxu0
      %v1224 = vadd.f32 0.0, %v1223
      %v1225 = vpop.f32.mrf.mxu0
      %1226 = vmatprep.mubr.bf16.mxu0 0
      %1227 = vmatmul.mubr.bf16.gmra.mxu0 %v1138
      %v1228 = vpop.f32.mrf.mxu0
      %v1229 = vadd.f32 0.0, %v1228
      %v1230 = vpop.f32.mrf.mxu0
      %v1231 = vpop.f32.mrf.mxu0
      %v1232 = vadd.f32 0.0, %v1231
      %v1233 = vpop.f32.mrf.mxu0
      %1234 = vmatprep.mubr.bf16.mxu0 0
      %1235 = vmatmul.mubr.bf16.gmra.mxu0 %v1141
      %v1236 = vpop.f32.mrf.mxu0
      %v1237 = vadd.f32 0.0, %v1236
      %v1238 = vpop.f32.mrf.mxu0
      %v1239 = vpop.f32.mrf.mxu0
      %v1240 = vadd.f32 0.0, %v1239
      %v1241 = vpop.f32.mrf.mxu0
      %1242 = vmatprep.mubr.bf16.mxu0 0
      %1243 = vmatmul.mubr.bf16.gmra.mxu0 %v1144
      %v1244 = vpop.f32.mrf.mxu0
      %v1245 = vadd.f32 0.0, %v1244
      %v1246 = vpop.f32.mrf.mxu0
      %v1247 = vpop.f32.mrf.mxu0
      %v1248 = vadd.f32 0.0, %v1247
      %v1249 = vpop.f32.mrf.mxu0
      %1250 = vmatprep.mubr.bf16.mxu0 0
      %1251 = vmatmul.mubr.bf16.gmra.mxu0 %v1147
      %v1252 = vpop.f32.mrf.mxu0
      %v1253 = vadd.f32 0.0, %v1252
      %v1254 = vpop.f32.mrf.mxu0
      %v1255 = vpop.f32.mrf.mxu0
      %v1256 = vadd.f32 0.0, %v1255
      %v1257 = vpop.f32.mrf.mxu0
      %1258 = vmatprep.mubr.bf16.mxu0 0
      %1259 = vmatmul.mubr.bf16.gmra.mxu0 %v1150
      %v1260 = vpop.f32.mrf.mxu0
      %v1261 = vadd.f32 0.0, %v1260
      %v1262 = vpop.f32.mrf.mxu0
      %v1263 = vpop.f32.mrf.mxu0
      %v1264 = vadd.f32 0.0, %v1263
      %v1265 = vpop.f32.mrf.mxu0
      %1266 = vmatprep.mubr.bf16.mxu0 0
      %1267 = vmatmul.mubr.bf16.gmra.mxu0 %v1153
      %v1268 = vpop.f32.mrf.mxu0
      %v1269 = vadd.f32 0.0, %v1268
      %v1270 = vpop.f32.mrf.mxu0
      %v1271 = vpop.f32.mrf.mxu0
      %v1272 = vadd.f32 0.0, %v1271
      %v1273 = vpop.f32.mrf.mxu0
      %1274 = vmatprep.mubr.bf16.mxu0 0
      %1275 = vmatmul.mubr.bf16.gmra.mxu0 %v1156
      %v1276 = vpop.f32.mrf.mxu0
      %v1277 = vadd.f32 0.0, %v1276
      %v1278 = vpop.f32.mrf.mxu0
      %v1279 = vpop.f32.mrf.mxu0
      %v1280 = vadd.f32 0.0, %v1279
      %v1281 = vpop.f32.mrf.mxu0
      %1282 = vmatprep.mubr.bf16.mxu0 0
      %1283 = vmatmul.mubr.bf16.gmra.mxu0 %v1159
      %v1284 = vpop.f32.mrf.mxu0
      %v1285 = vadd.f32 0.0, %v1284
      %v1286 = vpop.f32.mrf.mxu0
      %v1287 = vpop.f32.mrf.mxu0
      %v1288 = vadd.f32 0.0, %v1287
      %v1289 = vpop.f32.mrf.mxu0
      %1290 = vmatprep.mubr.bf16.mxu0 0
      %1291 = vmatmul.mubr.bf16.gmra.mxu0 %v1162
      %v1292 = vpop.f32.mrf.mxu0
      %v1293 = vadd.f32 0.0, %v1292
      %v1294 = vpop.f32.mrf.mxu0
      %v1295 = vpop.f32.mrf.mxu0
      %v1296 = vadd.f32 0.0, %v1295
      %v1297 = vpop.f32.mrf.mxu0
      %1298 = vmatprep.mubr.bf16.mxu0 0
      %1299 = vmatmul.mubr.bf16.gmra.mxu0 %v1165
      %v1300 = vpop.f32.mrf.mxu0
      %v1301 = vadd.f32 0.0, %v1300
      %v1302 = vpop.f32.mrf.mxu0
      %v1303 = vpop.f32.mrf.mxu0
      %v1304 = vadd.f32 0.0, %v1303
      %v1305 = vpop.f32.mrf.mxu0
      %1306 = vmatprep.mubr.bf16.mxu0 0
      %1307 = vmatmul.mubr.bf16.gmra.mxu0 %v1168
      %v1308 = vpop.f32.mrf.mxu0
      %v1309 = vadd.f32 0.0, %v1308
      %v1310 = vpop.f32.mrf.mxu0
      %v1311 = vpop.f32.mrf.mxu0
      %v1312 = vadd.f32 0.0, %v1311
      %v1313 = vpop.f32.mrf.mxu0
      %1314 = vmatprep.mubr.bf16.mxu0 0
      %1315 = vmatmul.mubr.bf16.gmra.mxu0 %v1171
      %v1316 = vpop.f32.mrf.mxu0
      %v1317 = vadd.f32 0.0, %v1316
      %v1318 = vpop.f32.mrf.mxu0
      %v1319 = vpop.f32.mrf.mxu0
      %v1320 = vadd.f32 0.0, %v1319
      %v1321 = vpop.f32.mrf.mxu0
      %1322 = vmatprep.mubr.bf16.mxu0 0
      %1323 = vmatmul.mubr.bf16.gmra.mxu0 %v1174
      %v1324 = vpop.f32.mrf.mxu0
      %v1325 = vadd.f32 0.0, %v1324
      %v1326 = vpop.f32.mrf.mxu0
      %v1327 = vpop.f32.mrf.mxu0
      %v1328 = vadd.f32 0.0, %v1327
      %v1329 = vpop.f32.mrf.mxu0
      %1330 = vmatprep.mubr.bf16.mxu0 0
      %1331 = vmatmul.mubr.bf16.gmra.mxu0 %v1177
      %v1332 = vpop.f32.mrf.mxu0
      %v1333 = vadd.f32 0.0, %v1332
      %v1334 = vpop.f32.mrf.mxu0
      %v1335 = vpop.f32.mrf.mxu0
      %v1336 = vadd.f32 0.0, %v1335
      %v1337 = vpop.f32.mrf.mxu0
      %1338 = vmatprep.mubr.bf16.mxu0 0
      %1339 = vmatmul.mubr.bf16.gmra.mxu0 %v1180
      %v1340 = vpop.f32.mrf.mxu0
      %v1341 = vadd.f32 0.0, %v1340
      %v1342 = vpop.f32.mrf.mxu0
      %v1343 = vpop.f32.mrf.mxu0
      %v1344 = vadd.f32 0.0, %v1343
      %v1345 = vpop.f32.mrf.mxu0
      %1346 = vdwg.mxu0
      %v1347 = vunpack.c.l.b16 %v408
      %v1348 = vunpack.c.l.b16 %v409
      %v1349 = vunpack.c.l.b16 %v411
      %v1350 = vunpack.c.l.b16 %v412
      %v1351 = vunpack.c.l.b16 %v414
      %v1352 = vunpack.c.l.b16 %v415
      %v1353 = vunpack.c.l.b16 %v417
      %v1354 = vunpack.c.l.b16 %v418
      %v1355 = vunpack.c.l.b16 %v420
      %v1356 = vunpack.c.l.b16 %v421
      %v1357 = vunpack.c.l.b16 %v423
      %v1358 = vunpack.c.l.b16 %v424
      %v1359 = vunpack.c.l.b16 %v426
      %v1360 = vunpack.c.l.b16 %v427
      %v1361 = vunpack.c.l.b16 %v429
      %v1362 = vunpack.c.l.b16 %v430
      %v1363 = vunpack.c.l.b16 %v432
      %v1364 = vunpack.c.l.b16 %v433
      %v1365 = vunpack.c.l.b16 %v435
      %v1366 = vunpack.c.l.b16 %v436
      %v1367 = vunpack.c.l.b16 %v438
      %v1368 = vunpack.c.l.b16 %v439
      %v1369 = vunpack.c.l.b16 %v441
      %v1370 = vunpack.c.l.b16 %v442
      %v1371 = vunpack.c.l.b16 %v444
      %v1372 = vunpack.c.l.b16 %v445
      %v1373 = vunpack.c.l.b16 %v447
      %v1374 = vunpack.c.l.b16 %v448
      %v1375 = vunpack.c.l.b16 %v450
      %v1376 = vunpack.c.l.b16 %v451
      %v1377 = vunpack.c.l.b16 %v453
      %v1378 = vunpack.c.l.b16 %v454
      %v1379 = vpack.c.b16 %v1348, %v1347
      %v1380 = vpack.c.b16 %v1350, %v1349
      %v1381 = vpack.c.b16 %v1352, %v1351
      %v1382 = vpack.c.b16 %v1354, %v1353
      %v1383 = vpack.c.b16 %v1356, %v1355
      %v1384 = vpack.c.b16 %v1358, %v1357
      %v1385 = vpack.c.b16 %v1360, %v1359
      %v1386 = vpack.c.b16 %v1362, %v1361
      %v1387 = vpack.c.b16 %v1364, %v1363
      %v1388 = vpack.c.b16 %v1366, %v1365
      %v1389 = vpack.c.b16 %v1368, %v1367
      %v1390 = vpack.c.b16 %v1370, %v1369
      %v1391 = vpack.c.b16 %v1372, %v1371
      %v1392 = vpack.c.b16 %v1374, %v1373
      %v1393 = vpack.c.b16 %v1376, %v1375
      %v1394 = vpack.c.b16 %v1378, %v1377
      %v1396 = vsel %vm1133, %v1379, 0
      %v1399 = vsel %vm1133, %v1380, 0
      %v1402 = vsel %vm1133, %v1381, 0
      %v1405 = vsel %vm1133, %v1382, 0
      %v1408 = vsel %vm1133, %v1383, 0
      %v1411 = vsel %vm1133, %v1384, 0
      %v1414 = vsel %vm1133, %v1385, 0
      %v1417 = vsel %vm1133, %v1386, 0
      %v1420 = vsel %vm1133, %v1387, 0
      %v1423 = vsel %vm1133, %v1388, 0
      %v1426 = vsel %vm1133, %v1389, 0
      %v1429 = vsel %vm1133, %v1390, 0
      %v1432 = vsel %vm1133, %v1391, 0
      %v1435 = vsel %vm1133, %v1392, 0
      %v1438 = vsel %vm1133, %v1393, 0
      %v1441 = vsel %vm1133, %v1394, 0
      %v1444 = vsel %vm1182, %v1082, 0
      %1446 = vmatprep.subr.bf16.mxu0 0
      %1447 = vmatpush1.bf16.msra.mxu0 0
      %1448 = vmatprep.subr.bf16.mxu0 0
      %1449 = vmatpush1.bf16.msra.mxu0 0
      %1450 = vmatprep.subr.bf16.mxu0 0
      %1451 = vmatpush1.bf16.msra.mxu0 0
      %1452 = vmatprep.subr.bf16.mxu0 0
      %1453 = vmatpush1.bf16.msra.mxu0 0
      %1454 = vmatprep.subr.bf16.mxu0 0
      %1455 = vmatpush1.bf16.msra.mxu0 0
      %1456 = vmatprep.subr.bf16.mxu0 0
      %1457 = vmatpush1.bf16.msra.mxu0 0
      %1458 = vmatprep.subr.bf16.mxu0 0
      %1459 = vmatpush1.bf16.msra.mxu0 0
      %1460 = vmatprep.subr.bf16.mxu0 0
      %1461 = vmatpush1.bf16.msra.mxu0 %v1444
      %1462 = vmatprep.subr.bf16.mxu0 0
      %1463 = vmatpush2.bf16.msra.mxu0 0
      %1464 = vmatprep.subr.bf16.mxu0 0
      %1465 = vmatpush2.bf16.msra.mxu0 0
      %1466 = vmatprep.subr.bf16.mxu0 0
      %1467 = vmatpush2.bf16.msra.mxu0 0
      %1468 = vmatprep.subr.bf16.mxu0 0
      %1469 = vmatpush2.bf16.msra.mxu0 0
      %1470 = vmatprep.subr.bf16.mxu0 0
      %1471 = vmatpush2.bf16.msra.mxu0 0
      %1472 = vmatprep.subr.bf16.mxu0 0
      %1473 = vmatpush2.bf16.msra.mxu0 0
      %1474 = vmatprep.subr.bf16.mxu0 0
      %1475 = vmatpush2.bf16.msra.mxu0 0
      %1476 = vmatprep.subr.bf16.mxu0 0
      %1477 = vmatpush2.bf16.msra.mxu0 0
      %1478 = vmatprep.mubr.bf16.mxu0 0
      %1479 = vmatmul.mubr.bf16.gmra.mxu0 %v1396
      %v1480 = vpop.f32.mrf.mxu0
      %v1481 = vadd.f32 %v1221, %v1480
      %v1482 = vpop.f32.mrf.mxu0
      %v1483 = vpop.f32.mrf.mxu0
      %v1484 = vadd.f32 %v1224, %v1483
      %v1485 = vpop.f32.mrf.mxu0
      %1486 = vmatprep.mubr.bf16.mxu0 0
      %1487 = vmatmul.mubr.bf16.gmra.mxu0 %v1399
      %v1488 = vpop.f32.mrf.mxu0
      %v1489 = vadd.f32 %v1229, %v1488
      %v1490 = vpop.f32.mrf.mxu0
      %v1491 = vpop.f32.mrf.mxu0
      %v1492 = vadd.f32 %v1232, %v1491
      %v1493 = vpop.f32.mrf.mxu0
      %1494 = vmatprep.mubr.bf16.mxu0 0
      %1495 = vmatmul.mubr.bf16.gmra.mxu0 %v1402
      %v1496 = vpop.f32.mrf.mxu0
      %v1497 = vadd.f32 %v1237, %v1496
      %v1498 = vpop.f32.mrf.mxu0
      %v1499 = vpop.f32.mrf.mxu0
      %v1500 = vadd.f32 %v1240, %v1499
      %v1501 = vpop.f32.mrf.mxu0
      %1502 = vmatprep.mubr.bf16.mxu0 0
      %1503 = vmatmul.mubr.bf16.gmra.mxu0 %v1405
      %v1504 = vpop.f32.mrf.mxu0
      %v1505 = vadd.f32 %v1245, %v1504
      %v1506 = vpop.f32.mrf.mxu0
      %v1507 = vpop.f32.mrf.mxu0
      %v1508 = vadd.f32 %v1248, %v1507
      %v1509 = vpop.f32.mrf.mxu0
      %1510 = vmatprep.mubr.bf16.mxu0 0
      %1511 = vmatmul.mubr.bf16.gmra.mxu0 %v1408
      %v1512 = vpop.f32.mrf.mxu0
      %v1513 = vadd.f32 %v1253, %v1512
      %v1514 = vpop.f32.mrf.mxu0
      %v1515 = vpop.f32.mrf.mxu0
      %v1516 = vadd.f32 %v1256, %v1515
      %v1517 = vpop.f32.mrf.mxu0
      %1518 = vmatprep.mubr.bf16.mxu0 0
      %1519 = vmatmul.mubr.bf16.gmra.mxu0 %v1411
      %v1520 = vpop.f32.mrf.mxu0
      %v1521 = vadd.f32 %v1261, %v1520
      %v1522 = vpop.f32.mrf.mxu0
      %v1523 = vpop.f32.mrf.mxu0
      %v1524 = vadd.f32 %v1264, %v1523
      %v1525 = vpop.f32.mrf.mxu0
      %1526 = vmatprep.mubr.bf16.mxu0 0
      %1527 = vmatmul.mubr.bf16.gmra.mxu0 %v1414
      %v1528 = vpop.f32.mrf.mxu0
      %v1529 = vadd.f32 %v1269, %v1528
      %v1530 = vpop.f32.mrf.mxu0
      %v1531 = vpop.f32.mrf.mxu0
      %v1532 = vadd.f32 %v1272, %v1531
      %v1533 = vpop.f32.mrf.mxu0
      %1534 = vmatprep.mubr.bf16.mxu0 0
      %1535 = vmatmul.mubr.bf16.gmra.mxu0 %v1417
      %v1536 = vpop.f32.mrf.mxu0
      %v1537 = vadd.f32 %v1277, %v1536
      %v1538 = vpop.f32.mrf.mxu0
      %v1539 = vpop.f32.mrf.mxu0
      %v1540 = vadd.f32 %v1280, %v1539
      %v1541 = vpop.f32.mrf.mxu0
      %1542 = vmatprep.mubr.bf16.mxu0 0
      %1543 = vmatmul.mubr.bf16.gmra.mxu0 %v1420
      %v1544 = vpop.f32.mrf.mxu0
      %v1545 = vadd.f32 %v1285, %v1544
      %v1546 = vpop.f32.mrf.mxu0
      %v1547 = vpop.f32.mrf.mxu0
      %v1548 = vadd.f32 %v1288, %v1547
      %v1549 = vpop.f32.mrf.mxu0
      %1550 = vmatprep.mubr.bf16.mxu0 0
      %1551 = vmatmul.mubr.bf16.gmra.mxu0 %v1423
      %v1552 = vpop.f32.mrf.mxu0
      %v1553 = vadd.f32 %v1293, %v1552
      %v1554 = vpop.f32.mrf.mxu0
      %v1555 = vpop.f32.mrf.mxu0
      %v1556 = vadd.f32 %v1296, %v1555
      %v1557 = vpop.f32.mrf.mxu0
      %1558 = vmatprep.mubr.bf16.mxu0 0
      %1559 = vmatmul.mubr.bf16.gmra.mxu0 %v1426
      %v1560 = vpop.f32.mrf.mxu0
      %v1561 = vadd.f32 %v1301, %v1560
      %v1562 = vpop.f32.mrf.mxu0
      %v1563 = vpop.f32.mrf.mxu0
      %v1564 = vadd.f32 %v1304, %v1563
      %v1565 = vpop.f32.mrf.mxu0
      %1566 = vmatprep.mubr.bf16.mxu0 0
      %1567 = vmatmul.mubr.bf16.gmra.mxu0 %v1429
      %v1568 = vpop.f32.mrf.mxu0
      %v1569 = vadd.f32 %v1309, %v1568
      %v1570 = vpop.f32.mrf.mxu0
      %v1571 = vpop.f32.mrf.mxu0
      %v1572 = vadd.f32 %v1312, %v1571
      %v1573 = vpop.f32.mrf.mxu0
      %1574 = vmatprep.mubr.bf16.mxu0 0
      %1575 = vmatmul.mubr.bf16.gmra.mxu0 %v1432
      %v1576 = vpop.f32.mrf.mxu0
      %v1577 = vadd.f32 %v1317, %v1576
      %v1578 = vpop.f32.mrf.mxu0
      %v1579 = vpop.f32.mrf.mxu0
      %v1580 = vadd.f32 %v1320, %v1579
      %v1581 = vpop.f32.mrf.mxu0
      %1582 = vmatprep.mubr.bf16.mxu0 0
      %1583 = vmatmul.mubr.bf16.gmra.mxu0 %v1435
      %v1584 = vpop.f32.mrf.mxu0
      %v1585 = vadd.f32 %v1325, %v1584
      %v1586 = vpop.f32.mrf.mxu0
      %v1587 = vpop.f32.mrf.mxu0
      %v1588 = vadd.f32 %v1328, %v1587
      %v1589 = vpop.f32.mrf.mxu0
      %1590 = vmatprep.mubr.bf16.mxu0 0
      %1591 = vmatmul.mubr.bf16.gmra.mxu0 %v1438
      %v1592 = vpop.f32.mrf.mxu0
      %v1593 = vadd.f32 %v1333, %v1592
      %v1594 = vpop.f32.mrf.mxu0
      %v1595 = vpop.f32.mrf.mxu0
      %v1596 = vadd.f32 %v1336, %v1595
      %v1597 = vpop.f32.mrf.mxu0
      %1598 = vmatprep.mubr.bf16.mxu0 0
      %1599 = vmatmul.mubr.bf16.gmra.mxu0 %v1441
      %v1600 = vpop.f32.mrf.mxu0
      %v1601 = vadd.f32 %v1341, %v1600
      %v1602 = vpop.f32.mrf.mxu0
      %v1603 = vpop.f32.mrf.mxu0
      %v1604 = vadd.f32 %v1344, %v1603
      %v1605 = vpop.f32.mrf.mxu0
      %1606 = vdwg.mxu0
      %s1607 = scalar_lea.vmem %s386, 4
      %v1608 = vld [vmem:[%s1607] sm:$0x3]
      %v1609 = vunpack.c.l.b16 %v456
      %v1610 = vunpack.c.l.b16 %v457
      %v1611 = vpack.c.b16 %v1610, %v1609
      %v1613 = vsel %vm1133, %v1611, 0
      %v1616 = vsel %vm1182, %v1608, 0
      %1618 = vmatprep.subr.bf16.mxu0 0
      %1619 = vmatpush1.bf16.msra.mxu0 0
      %1620 = vmatprep.subr.bf16.mxu0 0
      %1621 = vmatpush1.bf16.msra.mxu0 0
      %1622 = vmatprep.subr.bf16.mxu0 0
      %1623 = vmatpush1.bf16.msra.mxu0 0
      %1624 = vmatprep.subr.bf16.mxu0 0
      %1625 = vmatpush1.bf16.msra.mxu0 0
      %1626 = vmatprep.subr.bf16.mxu0 0
      %1627 = vmatpush1.bf16.msra.mxu0 0
      %1628 = vmatprep.subr.bf16.mxu0 0
      %1629 = vmatpush1.bf16.msra.mxu0 0
      %1630 = vmatprep.subr.bf16.mxu0 0
      %1631 = vmatpush1.bf16.msra.mxu0 0
      %1632 = vmatprep.subr.bf16.mxu0 0
      %1633 = vmatpush1.bf16.msra.mxu0 %v1616
      %1634 = vmatprep.subr.bf16.mxu0 0
      %1635 = vmatpush2.bf16.msra.mxu0 0
      %1636 = vmatprep.subr.bf16.mxu0 0
      %1637 = vmatpush2.bf16.msra.mxu0 0
      %1638 = vmatprep.subr.bf16.mxu0 0
      %1639 = vmatpush2.bf16.msra.mxu0 0
      %1640 = vmatprep.subr.bf16.mxu0 0
      %1641 = vmatpush2.bf16.msra.mxu0 0
      %1642 = vmatprep.subr.bf16.mxu0 0
      %1643 = vmatpush2.bf16.msra.mxu0 0
      %1644 = vmatprep.subr.bf16.mxu0 0
      %1645 = vmatpush2.bf16.msra.mxu0 0
      %1646 = vmatprep.subr.bf16.mxu0 0
      %1647 = vmatpush2.bf16.msra.mxu0 0
      %1648 = vmatprep.subr.bf16.mxu0 0
      %1649 = vmatpush2.bf16.msra.mxu0 0
      %1650 = vmatprep.mubr.bf16.mxu0 0
      %1651 = vmatmul.mubr.bf16.gmra.mxu0 %v1399
      %v1652 = vpop.f32.mrf.mxu0
      %v1653 = vadd.f32 0.0, %v1652
      %v1654 = vpop.f32.mrf.mxu0
      %v1655 = vpop.f32.mrf.mxu0
      %v1656 = vadd.f32 0.0, %v1655
      %v1657 = vpop.f32.mrf.mxu0
      %1658 = vmatprep.mubr.bf16.mxu0 0
      %1659 = vmatmul.mubr.bf16.gmra.mxu0 %v1402
      %v1660 = vpop.f32.mrf.mxu0
      %v1661 = vadd.f32 0.0, %v1660
      %v1662 = vpop.f32.mrf.mxu0
      %v1663 = vpop.f32.mrf.mxu0
      %v1664 = vadd.f32 0.0, %v1663
      %v1665 = vpop.f32.mrf.mxu0
      %1666 = vmatprep.mubr.bf16.mxu0 0
      %1667 = vmatmul.mubr.bf16.gmra.mxu0 %v1405
      %v1668 = vpop.f32.mrf.mxu0
      %v1669 = vadd.f32 0.0, %v1668
      %v1670 = vpop.f32.mrf.mxu0
      %v1671 = vpop.f32.mrf.mxu0
      %v1672 = vadd.f32 0.0, %v1671
      %v1673 = vpop.f32.mrf.mxu0
      %1674 = vmatprep.mubr.bf16.mxu0 0
      %1675 = vmatmul.mubr.bf16.gmra.mxu0 %v1408
      %v1676 = vpop.f32.mrf.mxu0
      %v1677 = vadd.f32 0.0, %v1676
      %v1678 = vpop.f32.mrf.mxu0
      %v1679 = vpop.f32.mrf.mxu0
      %v1680 = vadd.f32 0.0, %v1679
      %v1681 = vpop.f32.mrf.mxu0
      %1682 = vmatprep.mubr.bf16.mxu0 0
      %1683 = vmatmul.mubr.bf16.gmra.mxu0 %v1411
      %v1684 = vpop.f32.mrf.mxu0
      %v1685 = vadd.f32 0.0, %v1684
      %v1686 = vpop.f32.mrf.mxu0
      %v1687 = vpop.f32.mrf.mxu0
      %v1688 = vadd.f32 0.0, %v1687
      %v1689 = vpop.f32.mrf.mxu0
      %1690 = vmatprep.mubr.bf16.mxu0 0
      %1691 = vmatmul.mubr.bf16.gmra.mxu0 %v1414
      %v1692 = vpop.f32.mrf.mxu0
      %v1693 = vadd.f32 0.0, %v1692
      %v1694 = vpop.f32.mrf.mxu0
      %v1695 = vpop.f32.mrf.mxu0
      %v1696 = vadd.f32 0.0, %v1695
      %v1697 = vpop.f32.mrf.mxu0
      %1698 = vmatprep.mubr.bf16.mxu0 0
      %1699 = vmatmul.mubr.bf16.gmra.mxu0 %v1417
      %v1700 = vpop.f32.mrf.mxu0
      %v1701 = vadd.f32 0.0, %v1700
      %v1702 = vpop.f32.mrf.mxu0
      %v1703 = vpop.f32.mrf.mxu0
      %v1704 = vadd.f32 0.0, %v1703
      %v1705 = vpop.f32.mrf.mxu0
      %1706 = vmatprep.mubr.bf16.mxu0 0
      %1707 = vmatmul.mubr.bf16.gmra.mxu0 %v1420
      %v1708 = vpop.f32.mrf.mxu0
      %v1709 = vadd.f32 0.0, %v1708
      %v1710 = vpop.f32.mrf.mxu0
      %v1711 = vpop.f32.mrf.mxu0
      %v1712 = vadd.f32 0.0, %v1711
      %v1713 = vpop.f32.mrf.mxu0
      %1714 = vmatprep.mubr.bf16.mxu0 0
      %1715 = vmatmul.mubr.bf16.gmra.mxu0 %v1423
      %v1716 = vpop.f32.mrf.mxu0
      %v1717 = vadd.f32 0.0, %v1716
      %v1718 = vpop.f32.mrf.mxu0
      %v1719 = vpop.f32.mrf.mxu0
      %v1720 = vadd.f32 0.0, %v1719
      %v1721 = vpop.f32.mrf.mxu0
      %1722 = vmatprep.mubr.bf16.mxu0 0
      %1723 = vmatmul.mubr.bf16.gmra.mxu0 %v1426
      %v1724 = vpop.f32.mrf.mxu0
      %v1725 = vadd.f32 0.0, %v1724
      %v1726 = vpop.f32.mrf.mxu0
      %v1727 = vpop.f32.mrf.mxu0
      %v1728 = vadd.f32 0.0, %v1727
      %v1729 = vpop.f32.mrf.mxu0
      %1730 = vmatprep.mubr.bf16.mxu0 0
      %1731 = vmatmul.mubr.bf16.gmra.mxu0 %v1429
      %v1732 = vpop.f32.mrf.mxu0
      %v1733 = vadd.f32 0.0, %v1732
      %v1734 = vpop.f32.mrf.mxu0
      %v1735 = vpop.f32.mrf.mxu0
      %v1736 = vadd.f32 0.0, %v1735
      %v1737 = vpop.f32.mrf.mxu0
      %1738 = vmatprep.mubr.bf16.mxu0 0
      %1739 = vmatmul.mubr.bf16.gmra.mxu0 %v1432
      %v1740 = vpop.f32.mrf.mxu0
      %v1741 = vadd.f32 0.0, %v1740
      %v1742 = vpop.f32.mrf.mxu0
      %v1743 = vpop.f32.mrf.mxu0
      %v1744 = vadd.f32 0.0, %v1743
      %v1745 = vpop.f32.mrf.mxu0
      %1746 = vmatprep.mubr.bf16.mxu0 0
      %1747 = vmatmul.mubr.bf16.gmra.mxu0 %v1435
      %v1748 = vpop.f32.mrf.mxu0
      %v1749 = vadd.f32 0.0, %v1748
      %v1750 = vpop.f32.mrf.mxu0
      %v1751 = vpop.f32.mrf.mxu0
      %v1752 = vadd.f32 0.0, %v1751
      %v1753 = vpop.f32.mrf.mxu0
      %1754 = vmatprep.mubr.bf16.mxu0 0
      %1755 = vmatmul.mubr.bf16.gmra.mxu0 %v1438
      %v1756 = vpop.f32.mrf.mxu0
      %v1757 = vadd.f32 0.0, %v1756
      %v1758 = vpop.f32.mrf.mxu0
      %v1759 = vpop.f32.mrf.mxu0
      %v1760 = vadd.f32 0.0, %v1759
      %v1761 = vpop.f32.mrf.mxu0
      %1762 = vmatprep.mubr.bf16.mxu0 0
      %1763 = vmatmul.mubr.bf16.gmra.mxu0 %v1441
      %v1764 = vpop.f32.mrf.mxu0
      %v1765 = vadd.f32 0.0, %v1764
      %v1766 = vpop.f32.mrf.mxu0
      %v1767 = vpop.f32.mrf.mxu0
      %v1768 = vadd.f32 0.0, %v1767
      %v1769 = vpop.f32.mrf.mxu0
      %1770 = vmatprep.mubr.bf16.mxu0 0
      %1771 = vmatmul.mubr.bf16.gmra.mxu0 %v1613
      %v1772 = vpop.f32.mrf.mxu0
      %v1773 = vadd.f32 0.0, %v1772
      %v1774 = vpop.f32.mrf.mxu0
      %v1775 = vpop.f32.mrf.mxu0
      %v1776 = vadd.f32 0.0, %v1775
      %v1777 = vpop.f32.mrf.mxu0
      %1778 = vdwg.mxu0
      %v1779 = vadd.f32 %v1481, %v1653
      %v1780 = vadd.f32 %v1484, %v1656
      %v1781 = vadd.f32 %v1489, %v1661
      %v1782 = vadd.f32 %v1492, %v1664
      %v1783 = vadd.f32 %v1497, %v1669
      %v1784 = vadd.f32 %v1500, %v1672
      %v1785 = vadd.f32 %v1505, %v1677
      %v1786 = vadd.f32 %v1508, %v1680
      %v1787 = vadd.f32 %v1513, %v1685
      %v1788 = vadd.f32 %v1516, %v1688
      %v1789 = vadd.f32 %v1521, %v1693
      %v1790 = vadd.f32 %v1524, %v1696
      %v1791 = vadd.f32 %v1529, %v1701
      %v1792 = vadd.f32 %v1532, %v1704
      %v1793 = vadd.f32 %v1537, %v1709
      %v1794 = vadd.f32 %v1540, %v1712
      %v1795 = vadd.f32 %v1545, %v1717
      %v1796 = vadd.f32 %v1548, %v1720
      %v1797 = vadd.f32 %v1553, %v1725
      %v1798 = vadd.f32 %v1556, %v1728
      %v1799 = vadd.f32 %v1561, %v1733
      %v1800 = vadd.f32 %v1564, %v1736
      %v1801 = vadd.f32 %v1569, %v1741
      %v1802 = vadd.f32 %v1572, %v1744
      %v1803 = vadd.f32 %v1577, %v1749
      %v1804 = vadd.f32 %v1580, %v1752
      %v1805 = vadd.f32 %v1585, %v1757
      %v1806 = vadd.f32 %v1588, %v1760
      %v1807 = vadd.f32 %v1593, %v1765
      %v1808 = vadd.f32 %v1596, %v1768
      %v1809 = vadd.f32 %v1601, %v1773
      %v1810 = vadd.f32 %v1604, %v1776
      %s1811 = scalar_lea.vmem %s386, 6
      %v1812 = vld [vmem:[%s1811] sm:$0x3]
      %v1813 = vunpack.c.l.b16 %v862
      %v1814 = vunpack.c.l.b16 %v872
      %v1815 = vpack.c.b16 %v1814, %v1813
      %v1817 = vsel %vm1133, %v1815, 0
      %v1820 = vsel %vm1182, %v1812, 0
      %1822 = vmatprep.subr.bf16.mxu0 0
      %1823 = vmatpush1.bf16.msra.mxu0 0
      %1824 = vmatprep.subr.bf16.mxu0 0
      %1825 = vmatpush1.bf16.msra.mxu0 0
      %1826 = vmatprep.subr.bf16.mxu0 0
      %1827 = vmatpush1.bf16.msra.mxu0 0
      %1828 = vmatprep.subr.bf16.mxu0 0
      %1829 = vmatpush1.bf16.msra.mxu0 0
      %1830 = vmatprep.subr.bf16.mxu0 0
      %1831 = vmatpush1.bf16.msra.mxu0 0
      %1832 = vmatprep.subr.bf16.mxu0 0
      %1833 = vmatpush1.bf16.msra.mxu0 0
      %1834 = vmatprep.subr.bf16.mxu0 0
      %1835 = vmatpush1.bf16.msra.mxu0 0
      %1836 = vmatprep.subr.bf16.mxu0 0
      %1837 = vmatpush1.bf16.msra.mxu0 %v1820
      %1838 = vmatprep.subr.bf16.mxu0 0
      %1839 = vmatpush2.bf16.msra.mxu0 0
      %1840 = vmatprep.subr.bf16.mxu0 0
      %1841 = vmatpush2.bf16.msra.mxu0 0
      %1842 = vmatprep.subr.bf16.mxu0 0
      %1843 = vmatpush2.bf16.msra.mxu0 0
      %1844 = vmatprep.subr.bf16.mxu0 0
      %1845 = vmatpush2.bf16.msra.mxu0 0
      %1846 = vmatprep.subr.bf16.mxu0 0
      %1847 = vmatpush2.bf16.msra.mxu0 0
      %1848 = vmatprep.subr.bf16.mxu0 0
      %1849 = vmatpush2.bf16.msra.mxu0 0
      %1850 = vmatprep.subr.bf16.mxu0 0
      %1851 = vmatpush2.bf16.msra.mxu0 0
      %1852 = vmatprep.subr.bf16.mxu0 0
      %1853 = vmatpush2.bf16.msra.mxu0 0
      %1854 = vmatprep.mubr.bf16.mxu0 0
      %1855 = vmatmul.mubr.bf16.gmra.mxu0 %v1138
      %v1856 = vpop.f32.mrf.mxu0
      %v1857 = vadd.f32 0.0, %v1856
      %v1858 = vpop.f32.mrf.mxu0
      %v1859 = vpop.f32.mrf.mxu0
      %v1860 = vadd.f32 0.0, %v1859
      %v1861 = vpop.f32.mrf.mxu0
      %1862 = vmatprep.mubr.bf16.mxu0 0
      %1863 = vmatmul.mubr.bf16.gmra.mxu0 %v1141
      %v1864 = vpop.f32.mrf.mxu0
      %v1865 = vadd.f32 0.0, %v1864
      %v1866 = vpop.f32.mrf.mxu0
      %v1867 = vpop.f32.mrf.mxu0
      %v1868 = vadd.f32 0.0, %v1867
      %v1869 = vpop.f32.mrf.mxu0
      %1870 = vmatprep.mubr.bf16.mxu0 0
      %1871 = vmatmul.mubr.bf16.gmra.mxu0 %v1144
      %v1872 = vpop.f32.mrf.mxu0
      %v1873 = vadd.f32 0.0, %v1872
      %v1874 = vpop.f32.mrf.mxu0
      %v1875 = vpop.f32.mrf.mxu0
      %v1876 = vadd.f32 0.0, %v1875
      %v1877 = vpop.f32.mrf.mxu0
      %1878 = vmatprep.mubr.bf16.mxu0 0
      %1879 = vmatmul.mubr.bf16.gmra.mxu0 %v1147
      %v1880 = vpop.f32.mrf.mxu0
      %v1881 = vadd.f32 0.0, %v1880
      %v1882 = vpop.f32.mrf.mxu0
      %v1883 = vpop.f32.mrf.mxu0
      %v1884 = vadd.f32 0.0, %v1883
      %v1885 = vpop.f32.mrf.mxu0
      %1886 = vmatprep.mubr.bf16.mxu0 0
      %1887 = vmatmul.mubr.bf16.gmra.mxu0 %v1150
      %v1888 = vpop.f32.mrf.mxu0
      %v1889 = vadd.f32 0.0, %v1888
      %v1890 = vpop.f32.mrf.mxu0
      %v1891 = vpop.f32.mrf.mxu0
      %v1892 = vadd.f32 0.0, %v1891
      %v1893 = vpop.f32.mrf.mxu0
      %1894 = vmatprep.mubr.bf16.mxu0 0
      %1895 = vmatmul.mubr.bf16.gmra.mxu0 %v1153
      %v1896 = vpop.f32.mrf.mxu0
      %v1897 = vadd.f32 0.0, %v1896
      %v1898 = vpop.f32.mrf.mxu0
      %v1899 = vpop.f32.mrf.mxu0
      %v1900 = vadd.f32 0.0, %v1899
      %v1901 = vpop.f32.mrf.mxu0
      %1902 = vmatprep.mubr.bf16.mxu0 0
      %1903 = vmatmul.mubr.bf16.gmra.mxu0 %v1156
      %v1904 = vpop.f32.mrf.mxu0
      %v1905 = vadd.f32 0.0, %v1904
      %v1906 = vpop.f32.mrf.mxu0
      %v1907 = vpop.f32.mrf.mxu0
      %v1908 = vadd.f32 0.0, %v1907
      %v1909 = vpop.f32.mrf.mxu0
      %1910 = vmatprep.mubr.bf16.mxu0 0
      %1911 = vmatmul.mubr.bf16.gmra.mxu0 %v1159
      %v1912 = vpop.f32.mrf.mxu0
      %v1913 = vadd.f32 0.0, %v1912
      %v1914 = vpop.f32.mrf.mxu0
      %v1915 = vpop.f32.mrf.mxu0
      %v1916 = vadd.f32 0.0, %v1915
      %v1917 = vpop.f32.mrf.mxu0
      %1918 = vmatprep.mubr.bf16.mxu0 0
      %1919 = vmatmul.mubr.bf16.gmra.mxu0 %v1162
      %v1920 = vpop.f32.mrf.mxu0
      %v1921 = vadd.f32 0.0, %v1920
      %v1922 = vpop.f32.mrf.mxu0
      %v1923 = vpop.f32.mrf.mxu0
      %v1924 = vadd.f32 0.0, %v1923
      %v1925 = vpop.f32.mrf.mxu0
      %1926 = vmatprep.mubr.bf16.mxu0 0
      %1927 = vmatmul.mubr.bf16.gmra.mxu0 %v1165
      %v1928 = vpop.f32.mrf.mxu0
      %v1929 = vadd.f32 0.0, %v1928
      %v1930 = vpop.f32.mrf.mxu0
      %v1931 = vpop.f32.mrf.mxu0
      %v1932 = vadd.f32 0.0, %v1931
      %v1933 = vpop.f32.mrf.mxu0
      %1934 = vmatprep.mubr.bf16.mxu0 0
      %1935 = vmatmul.mubr.bf16.gmra.mxu0 %v1168
      %v1936 = vpop.f32.mrf.mxu0
      %v1937 = vadd.f32 0.0, %v1936
      %v1938 = vpop.f32.mrf.mxu0
      %v1939 = vpop.f32.mrf.mxu0
      %v1940 = vadd.f32 0.0, %v1939
      %v1941 = vpop.f32.mrf.mxu0
      %1942 = vmatprep.mubr.bf16.mxu0 0
      %1943 = vmatmul.mubr.bf16.gmra.mxu0 %v1171
      %v1944 = vpop.f32.mrf.mxu0
      %v1945 = vadd.f32 0.0, %v1944
      %v1946 = vpop.f32.mrf.mxu0
      %v1947 = vpop.f32.mrf.mxu0
      %v1948 = vadd.f32 0.0, %v1947
      %v1949 = vpop.f32.mrf.mxu0
      %1950 = vmatprep.mubr.bf16.mxu0 0
      %1951 = vmatmul.mubr.bf16.gmra.mxu0 %v1174
      %v1952 = vpop.f32.mrf.mxu0
      %v1953 = vadd.f32 0.0, %v1952
      %v1954 = vpop.f32.mrf.mxu0
      %v1955 = vpop.f32.mrf.mxu0
      %v1956 = vadd.f32 0.0, %v1955
      %v1957 = vpop.f32.mrf.mxu0
      %1958 = vmatprep.mubr.bf16.mxu0 0
      %1959 = vmatmul.mubr.bf16.gmra.mxu0 %v1177
      %v1960 = vpop.f32.mrf.mxu0
      %v1961 = vadd.f32 0.0, %v1960
      %v1962 = vpop.f32.mrf.mxu0
      %v1963 = vpop.f32.mrf.mxu0
      %v1964 = vadd.f32 0.0, %v1963
      %v1965 = vpop.f32.mrf.mxu0
      %1966 = vmatprep.mubr.bf16.mxu0 0
      %1967 = vmatmul.mubr.bf16.gmra.mxu0 %v1180
      %v1968 = vpop.f32.mrf.mxu0
      %v1969 = vadd.f32 0.0, %v1968
      %v1970 = vpop.f32.mrf.mxu0
      %v1971 = vpop.f32.mrf.mxu0
      %v1972 = vadd.f32 0.0, %v1971
      %v1973 = vpop.f32.mrf.mxu0
      %1974 = vmatprep.mubr.bf16.mxu0 0
      %1975 = vmatmul.mubr.bf16.gmra.mxu0 %v1817
      %v1976 = vpop.f32.mrf.mxu0
      %v1977 = vadd.f32 0.0, %v1976
      %v1978 = vpop.f32.mrf.mxu0
      %v1979 = vpop.f32.mrf.mxu0
      %v1980 = vadd.f32 0.0, %v1979
      %v1981 = vpop.f32.mrf.mxu0
      %1982 = vdwg.mxu0
      %v1983 = vadd.f32 %v1779, %v1857
      %v1984 = vadd.f32 %v1780, %v1860
      %v1985 = vadd.f32 %v1781, %v1865
      %v1986 = vadd.f32 %v1782, %v1868
      %v1987 = vadd.f32 %v1783, %v1873
      %v1988 = vadd.f32 %v1784, %v1876
      %v1989 = vadd.f32 %v1785, %v1881
      %v1990 = vadd.f32 %v1786, %v1884
      %v1991 = vadd.f32 %v1787, %v1889
      %v1992 = vadd.f32 %v1788, %v1892
      %v1993 = vadd.f32 %v1789, %v1897
      %v1994 = vadd.f32 %v1790, %v1900
      %v1995 = vadd.f32 %v1791, %v1905
      %v1996 = vadd.f32 %v1792, %v1908
      %v1997 = vadd.f32 %v1793, %v1913
      %v1998 = vadd.f32 %v1794, %v1916
      %v1999 = vadd.f32 %v1795, %v1921
      %v2000 = vadd.f32 %v1796, %v1924
      %v2001 = vadd.f32 %v1797, %v1929
      %v2002 = vadd.f32 %v1798, %v1932
      %v2003 = vadd.f32 %v1799, %v1937
      %v2004 = vadd.f32 %v1800, %v1940
      %v2005 = vadd.f32 %v1801, %v1945
      %v2006 = vadd.f32 %v1802, %v1948
      %v2007 = vadd.f32 %v1803, %v1953
      %v2008 = vadd.f32 %v1804, %v1956
      %v2009 = vadd.f32 %v1805, %v1961
      %v2010 = vadd.f32 %v1806, %v1964
      %v2011 = vadd.f32 %v1807, %v1969
      %v2012 = vadd.f32 %v1808, %v1972
      %v2013 = vadd.f32 %v1809, %v1977
      %v2014 = vadd.f32 %v1810, %v1980
      %v2016 = vlaneseq
      %v2017 = vshrl.u32 %v2016, 7
      %v2018 = vsub.s32 0, %v2017
      %v2019 = vrot.slane %v1080, %v2018
      %v2021 = vmul.f32 %v1983, %v2019
      %v2022 = vmul.f32 %v1984, %v2019
      %v2023 = vmul.f32 %v1985, %v2019
      %v2024 = vmul.f32 %v1986, %v2019
      %v2025 = vmul.f32 %v1987, %v2019
      %v2026 = vmul.f32 %v1988, %v2019
      %v2027 = vmul.f32 %v1989, %v2019
      %v2028 = vmul.f32 %v1990, %v2019
      %v2029 = vmul.f32 %v1991, %v2019
      %v2030 = vmul.f32 %v1992, %v2019
      %v2031 = vmul.f32 %v1993, %v2019
      %v2032 = vmul.f32 %v1994, %v2019
      %v2033 = vmul.f32 %v1995, %v2019
      %v2034 = vmul.f32 %v1996, %v2019
      %v2035 = vmul.f32 %v1997, %v2019
      %v2036 = vmul.f32 %v1998, %v2019
      %v2037 = vmul.f32 %v1999, %v2019
      %v2038 = vmul.f32 %v2000, %v2019
      %v2039 = vmul.f32 %v2001, %v2019
      %v2040 = vmul.f32 %v2002, %v2019
      %v2041 = vmul.f32 %v2003, %v2019
      %v2042 = vmul.f32 %v2004, %v2019
      %v2043 = vmul.f32 %v2005, %v2019
      %v2044 = vmul.f32 %v2006, %v2019
      %v2045 = vmul.f32 %v2007, %v2019
      %v2046 = vmul.f32 %v2008, %v2019
      %v2047 = vmul.f32 %v2009, %v2019
      %v2048 = vmul.f32 %v2010, %v2019
      %v2049 = vmul.f32 %v2011, %v2019
      %v2050 = vmul.f32 %v2012, %v2019
      %v2051 = vmul.f32 %v2013, %v2019
      %v2052 = vmul.f32 %v2014, %v2019
      %v2054 = vlaneseq
      %v2055 = vshrl.u32 %v2054, 7
      %v2056 = vsub.s32 0, %v2055
      %v2057 = vrot.slane %v1081, %v2056
      %v2059 = vadd.f32 %v2021, %v2057
      %v2060 = vadd.f32 %v2022, %v2057
      %v2061 = vadd.f32 %v2023, %v2057
      %v2062 = vadd.f32 %v2024, %v2057
      %v2063 = vadd.f32 %v2025, %v2057
      %v2064 = vadd.f32 %v2026, %v2057
      %v2065 = vadd.f32 %v2027, %v2057
      %v2066 = vadd.f32 %v2028, %v2057
      %v2067 = vadd.f32 %v2029, %v2057
      %v2068 = vadd.f32 %v2030, %v2057
      %v2069 = vadd.f32 %v2031, %v2057
      %v2070 = vadd.f32 %v2032, %v2057
      %v2071 = vadd.f32 %v2033, %v2057
      %v2072 = vadd.f32 %v2034, %v2057
      %v2073 = vadd.f32 %v2035, %v2057
      %v2074 = vadd.f32 %v2036, %v2057
      %v2075 = vadd.f32 %v2037, %v2057
      %v2076 = vadd.f32 %v2038, %v2057
      %v2077 = vadd.f32 %v2039, %v2057
      %v2078 = vadd.f32 %v2040, %v2057
      %v2079 = vadd.f32 %v2041, %v2057
      %v2080 = vadd.f32 %v2042, %v2057
      %v2081 = vadd.f32 %v2043, %v2057
      %v2082 = vadd.f32 %v2044, %v2057
      %v2083 = vadd.f32 %v2045, %v2057
      %v2084 = vadd.f32 %v2046, %v2057
      %v2085 = vadd.f32 %v2047, %v2057
      %v2086 = vadd.f32 %v2048, %v2057
      %v2087 = vadd.f32 %v2049, %v2057
      %v2088 = vadd.f32 %v2050, %v2057
      %v2089 = vadd.f32 %v2051, %v2057
      %v2090 = vadd.f32 %v2052, %v2057
      %v2091 = vmax.f32 %v2059, 0.0
      %v2092 = vmax.f32 %v2060, 0.0
      %v2093 = vmax.f32 %v2061, 0.0
      %v2094 = vmax.f32 %v2062, 0.0
      %v2095 = vmax.f32 %v2063, 0.0
      %v2096 = vmax.f32 %v2064, 0.0
      %v2097 = vmax.f32 %v2065, 0.0
      %v2098 = vmax.f32 %v2066, 0.0
      %v2099 = vmax.f32 %v2067, 0.0
      %v2100 = vmax.f32 %v2068, 0.0
      %v2101 = vmax.f32 %v2069, 0.0
      %v2102 = vmax.f32 %v2070, 0.0
      %v2103 = vmax.f32 %v2071, 0.0
      %v2104 = vmax.f32 %v2072, 0.0
      %v2105 = vmax.f32 %v2073, 0.0
      %v2106 = vmax.f32 %v2074, 0.0
      %v2107 = vmax.f32 %v2075, 0.0
      %v2108 = vmax.f32 %v2076, 0.0
      %v2109 = vmax.f32 %v2077, 0.0
      %v2110 = vmax.f32 %v2078, 0.0
      %v2111 = vmax.f32 %v2079, 0.0
      %v2112 = vmax.f32 %v2080, 0.0
      %v2113 = vmax.f32 %v2081, 0.0
      %v2114 = vmax.f32 %v2082, 0.0
      %v2115 = vmax.f32 %v2083, 0.0
      %v2116 = vmax.f32 %v2084, 0.0
      %v2117 = vmax.f32 %v2085, 0.0
      %v2118 = vmax.f32 %v2086, 0.0
      %v2119 = vmax.f32 %v2087, 0.0
      %v2120 = vmax.f32 %v2088, 0.0
      %v2121 = vmax.f32 %v2089, 0.0
      %v2122 = vmax.f32 %v2090, 0.0
      %vm2123 = vcmask 64512
      %2124 = vst.msk [vmem:[%s405] sm:$0xff] %vm2123, %v2091
      %2125 = vst.msk [vmem:[%s405 + $0x8] sm:$0xff] %vm2123, %v2092
      %2126 = vst.msk [vmem:[%s405 + $0x10] sm:$0xff] %vm2123, %v2093
      %2127 = vst.msk [vmem:[%s405 + $0x18] sm:$0xff] %vm2123, %v2094
      %2128 = vst.msk [vmem:[%s405 + $0x20] sm:$0xff] %vm2123, %v2095
      %2129 = vst.msk [vmem:[%s405 + $0x28] sm:$0xff] %vm2123, %v2096
      %2130 = vst.msk [vmem:[%s405 + $0x30] sm:$0xff] %vm2123, %v2097
      %2131 = vst.msk [vmem:[%s405 + $0x38] sm:$0xff] %vm2123, %v2098
      %2132 = vst.msk [vmem:[%s405 + $0x40] sm:$0xff] %vm2123, %v2099
      %2133 = vst.msk [vmem:[%s405 + $0x48] sm:$0xff] %vm2123, %v2100
      %2134 = vst.msk [vmem:[%s405 + $0x50] sm:$0xff] %vm2123, %v2101
      %2135 = vst.msk [vmem:[%s405 + $0x58] sm:$0xff] %vm2123, %v2102
      %2136 = vst.msk [vmem:[%s405 + $0x60] sm:$0xff] %vm2123, %v2103
      %2137 = vst.msk [vmem:[%s405 + $0x68] sm:$0xff] %vm2123, %v2104
      %2138 = vst.msk [vmem:[%s405 + $0x70] sm:$0xff] %vm2123, %v2105
      %2139 = vst.msk [vmem:[%s405 + $0x78] sm:$0xff] %vm2123, %v2106
      %2140 = vst.msk [vmem:[%s405 + $0x80] sm:$0xff] %vm2123, %v2107
      %2141 = vst.msk [vmem:[%s405 + $0x88] sm:$0xff] %vm2123, %v2108
      %2142 = vst.msk [vmem:[%s405 + $0x90] sm:$0xff] %vm2123, %v2109
      %2143 = vst.msk [vmem:[%s405 + $0x98] sm:$0xff] %vm2123, %v2110
      %2144 = vst.msk [vmem:[%s405 + $0xa0] sm:$0xff] %vm2123, %v2111
      %2145 = vst.msk [vmem:[%s405 + $0xa8] sm:$0xff] %vm2123, %v2112
      %2146 = vst.msk [vmem:[%s405 + $0xb0] sm:$0xff] %vm2123, %v2113
      %2147 = vst.msk [vmem:[%s405 + $0xb8] sm:$0xff] %vm2123, %v2114
      %2148 = vst.msk [vmem:[%s405 + $0xc0] sm:$0xff] %vm2123, %v2115
      %2149 = vst.msk [vmem:[%s405 + $0xc8] sm:$0xff] %vm2123, %v2116
      %2150 = vst.msk [vmem:[%s405 + $0xd0] sm:$0xff] %vm2123, %v2117
      %2151 = vst.msk [vmem:[%s405 + $0xd8] sm:$0xff] %vm2123, %v2118
      %2152 = vst.msk [vmem:[%s405 + $0xe0] sm:$0xff] %vm2123, %v2119
      %2153 = vst.msk [vmem:[%s405 + $0xe8] sm:$0xff] %vm2123, %v2120
      %2154 = vst.msk [vmem:[%s405 + $0xf0] sm:$0xff] %vm2123, %v2121
      %2155 = vst.msk [vmem:[%s405 + $0xf8] sm:$0xff] %vm2123, %v2122
      %s2156 = scalar_lea.vmem %s386, 8
      %v2157 = vld [vmem:[%s2156] sm:$0x3]
      %s2158 = scalar_lea.vmem %s386, 10
      %v2159 = vld [vmem:[%s2158] sm:$0x3]
      %v2160 = vunpack.c.l.b16 %v957
      %v2161 = vunpack.c.l.b16 %v960
      %v2162 = vunpack.c.l.b16 %v964
      %v2163 = vunpack.c.l.b16 %v967
      %v2164 = vunpack.c.l.b16 %v971
      %v2165 = vunpack.c.l.b16 %v974
      %v2166 = vunpack.c.l.b16 %v978
      %v2167 = vunpack.c.l.b16 %v981
      %v2168 = vunpack.c.l.b16 %v985
      %v2169 = vunpack.c.l.b16 %v988
      %v2170 = vunpack.c.l.b16 %v992
      %v2171 = vunpack.c.l.b16 %v995
      %v2172 = vunpack.c.l.b16 %v999
      %v2173 = vunpack.c.l.b16 %v1002
      %v2174 = vunpack.c.l.b16 %v1006
      %v2175 = vunpack.c.l.b16 %v1009
      %v2176 = vunpack.c.l.b16 %v1013
      %v2177 = vunpack.c.l.b16 %v1016
      %v2178 = vunpack.c.l.b16 %v1020
      %v2179 = vunpack.c.l.b16 %v1023
      %v2180 = vunpack.c.l.b16 %v1027
      %v2181 = vunpack.c.l.b16 %v1030
      %v2182 = vunpack.c.l.b16 %v1034
      %v2183 = vunpack.c.l.b16 %v1037
      %v2184 = vunpack.c.l.b16 %v1041
      %v2185 = vunpack.c.l.b16 %v1044
      %v2186 = vunpack.c.l.b16 %v1048
      %v2187 = vunpack.c.l.b16 %v1051
      %v2188 = vunpack.c.l.b16 %v1055
      %v2189 = vunpack.c.l.b16 %v1058
      %v2190 = vunpack.c.l.b16 %v1062
      %v2191 = vunpack.c.l.b16 %v1065
      %v2192 = vpack.c.b16 %v2161, %v2160
      %v2193 = vpack.c.b16 %v2163, %v2162
      %v2194 = vpack.c.b16 %v2165, %v2164
      %v2195 = vpack.c.b16 %v2167, %v2166
      %v2196 = vpack.c.b16 %v2169, %v2168
      %v2197 = vpack.c.b16 %v2171, %v2170
      %v2198 = vpack.c.b16 %v2173, %v2172
      %v2199 = vpack.c.b16 %v2175, %v2174
      %v2200 = vpack.c.b16 %v2177, %v2176
      %v2201 = vpack.c.b16 %v2179, %v2178
      %v2202 = vpack.c.b16 %v2181, %v2180
      %v2203 = vpack.c.b16 %v2183, %v2182
      %v2204 = vpack.c.b16 %v2185, %v2184
      %v2205 = vpack.c.b16 %v2187, %v2186
      %v2206 = vpack.c.b16 %v2189, %v2188
      %v2207 = vpack.c.b16 %v2191, %v2190
      %v2209 = vsel %vm1133, %v2192, 0
      %v2212 = vsel %vm1133, %v2193, 0
      %v2215 = vsel %vm1133, %v2194, 0
      %v2218 = vsel %vm1133, %v2195, 0
      %v2221 = vsel %vm1133, %v2196, 0
      %v2224 = vsel %vm1133, %v2197, 0
      %v2227 = vsel %vm1133, %v2198, 0
      %v2230 = vsel %vm1133, %v2199, 0
      %v2233 = vsel %vm1133, %v2200, 0
      %v2236 = vsel %vm1133, %v2201, 0
      %v2239 = vsel %vm1133, %v2202, 0
      %v2242 = vsel %vm1133, %v2203, 0
      %v2245 = vsel %vm1133, %v2204, 0
      %v2248 = vsel %vm1133, %v2205, 0
      %v2251 = vsel %vm1133, %v2206, 0
      %v2254 = vsel %vm1133, %v2207, 0
      %v2257 = vsel %vm1182, %v2159, 0
      %2259 = vmatprep.subr.bf16.mxu0 0
      %2260 = vmatpush1.bf16.msra.mxu0 0
      %2261 = vmatprep.subr.bf16.mxu0 0
      %2262 = vmatpush1.bf16.msra.mxu0 0
      %2263 = vmatprep.subr.bf16.mxu0 0
      %2264 = vmatpush1.bf16.msra.mxu0 0
      %2265 = vmatprep.subr.bf16.mxu0 0
      %2266 = vmatpush1.bf16.msra.mxu0 0
      %2267 = vmatprep.subr.bf16.mxu0 0
      %2268 = vmatpush1.bf16.msra.mxu0 0
      %2269 = vmatprep.subr.bf16.mxu0 0
      %2270 = vmatpush1.bf16.msra.mxu0 0
      %2271 = vmatprep.subr.bf16.mxu0 0
      %2272 = vmatpush1.bf16.msra.mxu0 0
      %2273 = vmatprep.subr.bf16.mxu0 0
      %2274 = vmatpush1.bf16.msra.mxu0 %v2257
      %2275 = vmatprep.subr.bf16.mxu0 0
      %2276 = vmatpush2.bf16.msra.mxu0 0
      %2277 = vmatprep.subr.bf16.mxu0 0
      %2278 = vmatpush2.bf16.msra.mxu0 0
      %2279 = vmatprep.subr.bf16.mxu0 0
      %2280 = vmatpush2.bf16.msra.mxu0 0
      %2281 = vmatprep.subr.bf16.mxu0 0
      %2282 = vmatpush2.bf16.msra.mxu0 0
      %2283 = vmatprep.subr.bf16.mxu0 0
      %2284 = vmatpush2.bf16.msra.mxu0 0
      %2285 = vmatprep.subr.bf16.mxu0 0
      %2286 = vmatpush2.bf16.msra.mxu0 0
      %2287 = vmatprep.subr.bf16.mxu0 0
      %2288 = vmatpush2.bf16.msra.mxu0 0
      %2289 = vmatprep.subr.bf16.mxu0 0
      %2290 = vmatpush2.bf16.msra.mxu0 0
      %2291 = vmatprep.mubr.bf16.mxu0 0
      %2292 = vmatmul.mubr.bf16.gmra.mxu0 %v2209
      %v2293 = vpop.f32.mrf.mxu0
      %v2294 = vadd.f32 0.0, %v2293
      %v2295 = vpop.f32.mrf.mxu0
      %v2296 = vpop.f32.mrf.mxu0
      %v2297 = vadd.f32 0.0, %v2296
      %v2298 = vpop.f32.mrf.mxu0
      %2299 = vmatprep.mubr.bf16.mxu0 0
      %2300 = vmatmul.mubr.bf16.gmra.mxu0 %v2212
      %v2301 = vpop.f32.mrf.mxu0
      %v2302 = vadd.f32 0.0, %v2301
      %v2303 = vpop.f32.mrf.mxu0
      %v2304 = vpop.f32.mrf.mxu0
      %v2305 = vadd.f32 0.0, %v2304
      %v2306 = vpop.f32.mrf.mxu0
      %2307 = vmatprep.mubr.bf16.mxu0 0
      %2308 = vmatmul.mubr.bf16.gmra.mxu0 %v2215
      %v2309 = vpop.f32.mrf.mxu0
      %v2310 = vadd.f32 0.0, %v2309
      %v2311 = vpop.f32.mrf.mxu0
      %v2312 = vpop.f32.mrf.mxu0
      %v2313 = vadd.f32 0.0, %v2312
      %v2314 = vpop.f32.mrf.mxu0
      %2315 = vmatprep.mubr.bf16.mxu0 0
      %2316 = vmatmul.mubr.bf16.gmra.mxu0 %v2218
      %v2317 = vpop.f32.mrf.mxu0
      %v2318 = vadd.f32 0.0, %v2317
      %v2319 = vpop.f32.mrf.mxu0
      %v2320 = vpop.f32.mrf.mxu0
      %v2321 = vadd.f32 0.0, %v2320
      %v2322 = vpop.f32.mrf.mxu0
      %2323 = vmatprep.mubr.bf16.mxu0 0
      %2324 = vmatmul.mubr.bf16.gmra.mxu0 %v2221
      %v2325 = vpop.f32.mrf.mxu0
      %v2326 = vadd.f32 0.0, %v2325
      %v2327 = vpop.f32.mrf.mxu0
      %v2328 = vpop.f32.mrf.mxu0
      %v2329 = vadd.f32 0.0, %v2328
      %v2330 = vpop.f32.mrf.mxu0
      %2331 = vmatprep.mubr.bf16.mxu0 0
      %2332 = vmatmul.mubr.bf16.gmra.mxu0 %v2224
      %v2333 = vpop.f32.mrf.mxu0
      %v2334 = vadd.f32 0.0, %v2333
      %v2335 = vpop.f32.mrf.mxu0
      %v2336 = vpop.f32.mrf.mxu0
      %v2337 = vadd.f32 0.0, %v2336
      %v2338 = vpop.f32.mrf.mxu0
      %2339 = vmatprep.mubr.bf16.mxu0 0
      %2340 = vmatmul.mubr.bf16.gmra.mxu0 %v2227
      %v2341 = vpop.f32.mrf.mxu0
      %v2342 = vadd.f32 0.0, %v2341
      %v2343 = vpop.f32.mrf.mxu0
      %v2344 = vpop.f32.mrf.mxu0
      %v2345 = vadd.f32 0.0, %v2344
      %v2346 = vpop.f32.mrf.mxu0
      %2347 = vmatprep.mubr.bf16.mxu0 0
      %2348 = vmatmul.mubr.bf16.gmra.mxu0 %v2230
      %v2349 = vpop.f32.mrf.mxu0
      %v2350 = vadd.f32 0.0, %v2349
      %v2351 = vpop.f32.mrf.mxu0
      %v2352 = vpop.f32.mrf.mxu0
      %v2353 = vadd.f32 0.0, %v2352
      %v2354 = vpop.f32.mrf.mxu0
      %2355 = vmatprep.mubr.bf16.mxu0 0
      %2356 = vmatmul.mubr.bf16.gmra.mxu0 %v2233
      %v2357 = vpop.f32.mrf.mxu0
      %v2358 = vadd.f32 0.0, %v2357
      %v2359 = vpop.f32.mrf.mxu0
      %v2360 = vpop.f32.mrf.mxu0
      %v2361 = vadd.f32 0.0, %v2360
      %v2362 = vpop.f32.mrf.mxu0
      %2363 = vmatprep.mubr.bf16.mxu0 0
      %2364 = vmatmul.mubr.bf16.gmra.mxu0 %v2236
      %v2365 = vpop.f32.mrf.mxu0
      %v2366 = vadd.f32 0.0, %v2365
      %v2367 = vpop.f32.mrf.mxu0
      %v2368 = vpop.f32.mrf.mxu0
      %v2369 = vadd.f32 0.0, %v2368
      %v2370 = vpop.f32.mrf.mxu0
      %2371 = vmatprep.mubr.bf16.mxu0 0
      %2372 = vmatmul.mubr.bf16.gmra.mxu0 %v2239
      %v2373 = vpop.f32.mrf.mxu0
      %v2374 = vadd.f32 0.0, %v2373
      %v2375 = vpop.f32.mrf.mxu0
      %v2376 = vpop.f32.mrf.mxu0
      %v2377 = vadd.f32 0.0, %v2376
      %v2378 = vpop.f32.mrf.mxu0
      %2379 = vmatprep.mubr.bf16.mxu0 0
      %2380 = vmatmul.mubr.bf16.gmra.mxu0 %v2242
      %v2381 = vpop.f32.mrf.mxu0
      %v2382 = vadd.f32 0.0, %v2381
      %v2383 = vpop.f32.mrf.mxu0
      %v2384 = vpop.f32.mrf.mxu0
      %v2385 = vadd.f32 0.0, %v2384
      %v2386 = vpop.f32.mrf.mxu0
      %2387 = vmatprep.mubr.bf16.mxu0 0
      %2388 = vmatmul.mubr.bf16.gmra.mxu0 %v2245
      %v2389 = vpop.f32.mrf.mxu0
      %v2390 = vadd.f32 0.0, %v2389
      %v2391 = vpop.f32.mrf.mxu0
      %v2392 = vpop.f32.mrf.mxu0
      %v2393 = vadd.f32 0.0, %v2392
      %v2394 = vpop.f32.mrf.mxu0
      %2395 = vmatprep.mubr.bf16.mxu0 0
      %2396 = vmatmul.mubr.bf16.gmra.mxu0 %v2248
      %v2397 = vpop.f32.mrf.mxu0
      %v2398 = vadd.f32 0.0, %v2397
      %v2399 = vpop.f32.mrf.mxu0
      %v2400 = vpop.f32.mrf.mxu0
      %v2401 = vadd.f32 0.0, %v2400
      %v2402 = vpop.f32.mrf.mxu0
      %2403 = vmatprep.mubr.bf16.mxu0 0
      %2404 = vmatmul.mubr.bf16.gmra.mxu0 %v2251
      %v2405 = vpop.f32.mrf.mxu0
      %v2406 = vadd.f32 0.0, %v2405
      %v2407 = vpop.f32.mrf.mxu0
      %v2408 = vpop.f32.mrf.mxu0
      %v2409 = vadd.f32 0.0, %v2408
      %v2410 = vpop.f32.mrf.mxu0
      %2411 = vmatprep.mubr.bf16.mxu0 0
      %2412 = vmatmul.mubr.bf16.gmra.mxu0 %v2254
      %v2413 = vpop.f32.mrf.mxu0
      %v2414 = vadd.f32 0.0, %v2413
      %v2415 = vpop.f32.mrf.mxu0
      %v2416 = vpop.f32.mrf.mxu0
      %v2417 = vadd.f32 0.0, %v2416
      %v2418 = vpop.f32.mrf.mxu0
      %2419 = vdwg.mxu0
      %v2421 = vsel %vm1182, %v2157, 0
      %2423 = vmatprep.subr.bf16.mxu0 0
      %2424 = vmatpush1.bf16.msra.mxu0 0
      %2425 = vmatprep.subr.bf16.mxu0 0
      %2426 = vmatpush1.bf16.msra.mxu0 0
      %2427 = vmatprep.subr.bf16.mxu0 0
      %2428 = vmatpush1.bf16.msra.mxu0 0
      %2429 = vmatprep.subr.bf16.mxu0 0
      %2430 = vmatpush1.bf16.msra.mxu0 0
      %2431 = vmatprep.subr.bf16.mxu0 0
      %2432 = vmatpush1.bf16.msra.mxu0 0
      %2433 = vmatprep.subr.bf16.mxu0 0
      %2434 = vmatpush1.bf16.msra.mxu0 0
      %2435 = vmatprep.subr.bf16.mxu0 0
      %2436 = vmatpush1.bf16.msra.mxu0 0
      %2437 = vmatprep.subr.bf16.mxu0 0
      %2438 = vmatpush1.bf16.msra.mxu0 %v2421
      %2439 = vmatprep.subr.bf16.mxu0 0
      %2440 = vmatpush2.bf16.msra.mxu0 0
      %2441 = vmatprep.subr.bf16.mxu0 0
      %2442 = vmatpush2.bf16.msra.mxu0 0
      %2443 = vmatprep.subr.bf16.mxu0 0
      %2444 = vmatpush2.bf16.msra.mxu0 0
      %2445 = vmatprep.subr.bf16.mxu0 0
      %2446 = vmatpush2.bf16.msra.mxu0 0
      %2447 = vmatprep.subr.bf16.mxu0 0
      %2448 = vmatpush2.bf16.msra.mxu0 0
      %2449 = vmatprep.subr.bf16.mxu0 0
      %2450 = vmatpush2.bf16.msra.mxu0 0
      %2451 = vmatprep.subr.bf16.mxu0 0
      %2452 = vmatpush2.bf16.msra.mxu0 0
      %2453 = vmatprep.subr.bf16.mxu0 0
      %2454 = vmatpush2.bf16.msra.mxu0 0
      %2455 = vmatprep.mubr.bf16.mxu0 0
      %2456 = vmatmul.mubr.bf16.gmra.mxu0 %v1135
      %v2457 = vpop.f32.mrf.mxu0
      %v2458 = vadd.f32 %v2294, %v2457
      %v2459 = vpop.f32.mrf.mxu0
      %v2460 = vpop.f32.mrf.mxu0
      %v2461 = vadd.f32 %v2297, %v2460
      %v2462 = vpop.f32.mrf.mxu0
      %2463 = vmatprep.mubr.bf16.mxu0 0
      %2464 = vmatmul.mubr.bf16.gmra.mxu0 %v1138
      %v2465 = vpop.f32.mrf.mxu0
      %v2466 = vadd.f32 %v2302, %v2465
      %v2467 = vpop.f32.mrf.mxu0
      %v2468 = vpop.f32.mrf.mxu0
      %v2469 = vadd.f32 %v2305, %v2468
      %v2470 = vpop.f32.mrf.mxu0
      %2471 = vmatprep.mubr.bf16.mxu0 0
      %2472 = vmatmul.mubr.bf16.gmra.mxu0 %v1141
      %v2473 = vpop.f32.mrf.mxu0
      %v2474 = vadd.f32 %v2310, %v2473
      %v2475 = vpop.f32.mrf.mxu0
      %v2476 = vpop.f32.mrf.mxu0
      %v2477 = vadd.f32 %v2313, %v2476
      %v2478 = vpop.f32.mrf.mxu0
      %2479 = vmatprep.mubr.bf16.mxu0 0
      %2480 = vmatmul.mubr.bf16.gmra.mxu0 %v1144
      %v2481 = vpop.f32.mrf.mxu0
      %v2482 = vadd.f32 %v2318, %v2481
      %v2483 = vpop.f32.mrf.mxu0
      %v2484 = vpop.f32.mrf.mxu0
      %v2485 = vadd.f32 %v2321, %v2484
      %v2486 = vpop.f32.mrf.mxu0
      %2487 = vmatprep.mubr.bf16.mxu0 0
      %2488 = vmatmul.mubr.bf16.gmra.mxu0 %v1147
      %v2489 = vpop.f32.mrf.mxu0
      %v2490 = vadd.f32 %v2326, %v2489
      %v2491 = vpop.f32.mrf.mxu0
      %v2492 = vpop.f32.mrf.mxu0
      %v2493 = vadd.f32 %v2329, %v2492
      %v2494 = vpop.f32.mrf.mxu0
      %2495 = vmatprep.mubr.bf16.mxu0 0
      %2496 = vmatmul.mubr.bf16.gmra.mxu0 %v1150
      %v2497 = vpop.f32.mrf.mxu0
      %v2498 = vadd.f32 %v2334, %v2497
      %v2499 = vpop.f32.mrf.mxu0
      %v2500 = vpop.f32.mrf.mxu0
      %v2501 = vadd.f32 %v2337, %v2500
      %v2502 = vpop.f32.mrf.mxu0
      %2503 = vmatprep.mubr.bf16.mxu0 0
      %2504 = vmatmul.mubr.bf16.gmra.mxu0 %v1153
      %v2505 = vpop.f32.mrf.mxu0
      %v2506 = vadd.f32 %v2342, %v2505
      %v2507 = vpop.f32.mrf.mxu0
      %v2508 = vpop.f32.mrf.mxu0
      %v2509 = vadd.f32 %v2345, %v2508
      %v2510 = vpop.f32.mrf.mxu0
      %2511 = vmatprep.mubr.bf16.mxu0 0
      %2512 = vmatmul.mubr.bf16.gmra.mxu0 %v1156
      %v2513 = vpop.f32.mrf.mxu0
      %v2514 = vadd.f32 %v2350, %v2513
      %v2515 = vpop.f32.mrf.mxu0
      %v2516 = vpop.f32.mrf.mxu0
      %v2517 = vadd.f32 %v2353, %v2516
      %v2518 = vpop.f32.mrf.mxu0
      %2519 = vmatprep.mubr.bf16.mxu0 0
      %2520 = vmatmul.mubr.bf16.gmra.mxu0 %v1159
      %v2521 = vpop.f32.mrf.mxu0
      %v2522 = vadd.f32 %v2358, %v2521
      %v2523 = vpop.f32.mrf.mxu0
      %v2524 = vpop.f32.mrf.mxu0
      %v2525 = vadd.f32 %v2361, %v2524
      %v2526 = vpop.f32.mrf.mxu0
      %2527 = vmatprep.mubr.bf16.mxu0 0
      %2528 = vmatmul.mubr.bf16.gmra.mxu0 %v1162
      %v2529 = vpop.f32.mrf.mxu0
      %v2530 = vadd.f32 %v2366, %v2529
      %v2531 = vpop.f32.mrf.mxu0
      %v2532 = vpop.f32.mrf.mxu0
      %v2533 = vadd.f32 %v2369, %v2532
      %v2534 = vpop.f32.mrf.mxu0
      %2535 = vmatprep.mubr.bf16.mxu0 0
      %2536 = vmatmul.mubr.bf16.gmra.mxu0 %v1165
      %v2537 = vpop.f32.mrf.mxu0
      %v2538 = vadd.f32 %v2374, %v2537
      %v2539 = vpop.f32.mrf.mxu0
      %v2540 = vpop.f32.mrf.mxu0
      %v2541 = vadd.f32 %v2377, %v2540
      %v2542 = vpop.f32.mrf.mxu0
      %2543 = vmatprep.mubr.bf16.mxu0 0
      %2544 = vmatmul.mubr.bf16.gmra.mxu0 %v1168
      %v2545 = vpop.f32.mrf.mxu0
      %v2546 = vadd.f32 %v2382, %v2545
      %v2547 = vpop.f32.mrf.mxu0
      %v2548 = vpop.f32.mrf.mxu0
      %v2549 = vadd.f32 %v2385, %v2548
      %v2550 = vpop.f32.mrf.mxu0
      %2551 = vmatprep.mubr.bf16.mxu0 0
      %2552 = vmatmul.mubr.bf16.gmra.mxu0 %v1171
      %v2553 = vpop.f32.mrf.mxu0
      %v2554 = vadd.f32 %v2390, %v2553
      %v2555 = vpop.f32.mrf.mxu0
      %v2556 = vpop.f32.mrf.mxu0
      %v2557 = vadd.f32 %v2393, %v2556
      %v2558 = vpop.f32.mrf.mxu0
      %2559 = vmatprep.mubr.bf16.mxu0 0
      %2560 = vmatmul.mubr.bf16.gmra.mxu0 %v1174
      %v2561 = vpop.f32.mrf.mxu0
      %v2562 = vadd.f32 %v2398, %v2561
      %v2563 = vpop.f32.mrf.mxu0
      %v2564 = vpop.f32.mrf.mxu0
      %v2565 = vadd.f32 %v2401, %v2564
      %v2566 = vpop.f32.mrf.mxu0
      %2567 = vmatprep.mubr.bf16.mxu0 0
      %2568 = vmatmul.mubr.bf16.gmra.mxu0 %v1177
      %v2569 = vpop.f32.mrf.mxu0
      %v2570 = vadd.f32 %v2406, %v2569
      %v2571 = vpop.f32.mrf.mxu0
      %v2572 = vpop.f32.mrf.mxu0
      %v2573 = vadd.f32 %v2409, %v2572
      %v2574 = vpop.f32.mrf.mxu0
      %2575 = vmatprep.mubr.bf16.mxu0 0
      %2576 = vmatmul.mubr.bf16.gmra.mxu0 %v1180
      %v2577 = vpop.f32.mrf.mxu0
      %v2578 = vadd.f32 %v2414, %v2577
      %v2579 = vpop.f32.mrf.mxu0
      %v2580 = vpop.f32.mrf.mxu0
      %v2581 = vadd.f32 %v2417, %v2580
      %v2582 = vpop.f32.mrf.mxu0
      %2583 = vdwg.mxu0
      %s2584 = scalar_lea.vmem %s386, 12
      %v2585 = vld [vmem:[%s2584] sm:$0x3]
      %v2587 = vsel %vm1182, %v2585, 0
      %2589 = vmatprep.subr.bf16.mxu0 0
      %2590 = vmatpush1.bf16.msra.mxu0 0
      %2591 = vmatprep.subr.bf16.mxu0 0
      %2592 = vmatpush1.bf16.msra.mxu0 0
      %2593 = vmatprep.subr.bf16.mxu0 0
      %2594 = vmatpush1.bf16.msra.mxu0 0
      %2595 = vmatprep.subr.bf16.mxu0 0
      %2596 = vmatpush1.bf16.msra.mxu0 0
      %2597 = vmatprep.subr.bf16.mxu0 0
      %2598 = vmatpush1.bf16.msra.mxu0 0
      %2599 = vmatprep.subr.bf16.mxu0 0
      %2600 = vmatpush1.bf16.msra.mxu0 0
      %2601 = vmatprep.subr.bf16.mxu0 0
      %2602 = vmatpush1.bf16.msra.mxu0 0
      %2603 = vmatprep.subr.bf16.mxu0 0
      %2604 = vmatpush1.bf16.msra.mxu0 %v2587
      %2605 = vmatprep.subr.bf16.mxu0 0
      %2606 = vmatpush2.bf16.msra.mxu0 0
      %2607 = vmatprep.subr.bf16.mxu0 0
      %2608 = vmatpush2.bf16.msra.mxu0 0
      %2609 = vmatprep.subr.bf16.mxu0 0
      %2610 = vmatpush2.bf16.msra.mxu0 0
      %2611 = vmatprep.subr.bf16.mxu0 0
      %2612 = vmatpush2.bf16.msra.mxu0 0
      %2613 = vmatprep.subr.bf16.mxu0 0
      %2614 = vmatpush2.bf16.msra.mxu0 0
      %2615 = vmatprep.subr.bf16.mxu0 0
      %2616 = vmatpush2.bf16.msra.mxu0 0
      %2617 = vmatprep.subr.bf16.mxu0 0
      %2618 = vmatpush2.bf16.msra.mxu0 0
      %2619 = vmatprep.subr.bf16.mxu0 0
      %2620 = vmatpush2.bf16.msra.mxu0 0
      %2621 = vmatprep.mubr.bf16.mxu0 0
      %2622 = vmatmul.mubr.bf16.gmra.mxu0 %v1138
      %v2623 = vpop.f32.mrf.mxu0
      %v2624 = vadd.f32 0.0, %v2623
      %v2625 = vpop.f32.mrf.mxu0
      %v2626 = vpop.f32.mrf.mxu0
      %v2627 = vadd.f32 0.0, %v2626
      %v2628 = vpop.f32.mrf.mxu0
      %2629 = vmatprep.mubr.bf16.mxu0 0
      %2630 = vmatmul.mubr.bf16.gmra.mxu0 %v1141
      %v2631 = vpop.f32.mrf.mxu0
      %v2632 = vadd.f32 0.0, %v2631
      %v2633 = vpop.f32.mrf.mxu0
      %v2634 = vpop.f32.mrf.mxu0
      %v2635 = vadd.f32 0.0, %v2634
      %v2636 = vpop.f32.mrf.mxu0
      %2637 = vmatprep.mubr.bf16.mxu0 0
      %2638 = vmatmul.mubr.bf16.gmra.mxu0 %v1144
      %v2639 = vpop.f32.mrf.mxu0
      %v2640 = vadd.f32 0.0, %v2639
      %v2641 = vpop.f32.mrf.mxu0
      %v2642 = vpop.f32.mrf.mxu0
      %v2643 = vadd.f32 0.0, %v2642
      %v2644 = vpop.f32.mrf.mxu0
      %2645 = vmatprep.mubr.bf16.mxu0 0
      %2646 = vmatmul.mubr.bf16.gmra.mxu0 %v1147
      %v2647 = vpop.f32.mrf.mxu0
      %v2648 = vadd.f32 0.0, %v2647
      %v2649 = vpop.f32.mrf.mxu0
      %v2650 = vpop.f32.mrf.mxu0
      %v2651 = vadd.f32 0.0, %v2650
      %v2652 = vpop.f32.mrf.mxu0
      %2653 = vmatprep.mubr.bf16.mxu0 0
      %2654 = vmatmul.mubr.bf16.gmra.mxu0 %v1150
      %v2655 = vpop.f32.mrf.mxu0
      %v2656 = vadd.f32 0.0, %v2655
      %v2657 = vpop.f32.mrf.mxu0
      %v2658 = vpop.f32.mrf.mxu0
      %v2659 = vadd.f32 0.0, %v2658
      %v2660 = vpop.f32.mrf.mxu0
      %2661 = vmatprep.mubr.bf16.mxu0 0
      %2662 = vmatmul.mubr.bf16.gmra.mxu0 %v1153
      %v2663 = vpop.f32.mrf.mxu0
      %v2664 = vadd.f32 0.0, %v2663
      %v2665 = vpop.f32.mrf.mxu0
      %v2666 = vpop.f32.mrf.mxu0
      %v2667 = vadd.f32 0.0, %v2666
      %v2668 = vpop.f32.mrf.mxu0
      %2669 = vmatprep.mubr.bf16.mxu0 0
      %2670 = vmatmul.mubr.bf16.gmra.mxu0 %v1156
      %v2671 = vpop.f32.mrf.mxu0
      %v2672 = vadd.f32 0.0, %v2671
      %v2673 = vpop.f32.mrf.mxu0
      %v2674 = vpop.f32.mrf.mxu0
      %v2675 = vadd.f32 0.0, %v2674
      %v2676 = vpop.f32.mrf.mxu0
      %2677 = vmatprep.mubr.bf16.mxu0 0
      %2678 = vmatmul.mubr.bf16.gmra.mxu0 %v1159
      %v2679 = vpop.f32.mrf.mxu0
      %v2680 = vadd.f32 0.0, %v2679
      %v2681 = vpop.f32.mrf.mxu0
      %v2682 = vpop.f32.mrf.mxu0
      %v2683 = vadd.f32 0.0, %v2682
      %v2684 = vpop.f32.mrf.mxu0
      %2685 = vmatprep.mubr.bf16.mxu0 0
      %2686 = vmatmul.mubr.bf16.gmra.mxu0 %v1162
      %v2687 = vpop.f32.mrf.mxu0
      %v2688 = vadd.f32 0.0, %v2687
      %v2689 = vpop.f32.mrf.mxu0
      %v2690 = vpop.f32.mrf.mxu0
      %v2691 = vadd.f32 0.0, %v2690
      %v2692 = vpop.f32.mrf.mxu0
      %2693 = vmatprep.mubr.bf16.mxu0 0
      %2694 = vmatmul.mubr.bf16.gmra.mxu0 %v1165
      %v2695 = vpop.f32.mrf.mxu0
      %v2696 = vadd.f32 0.0, %v2695
      %v2697 = vpop.f32.mrf.mxu0
      %v2698 = vpop.f32.mrf.mxu0
      %v2699 = vadd.f32 0.0, %v2698
      %v2700 = vpop.f32.mrf.mxu0
      %2701 = vmatprep.mubr.bf16.mxu0 0
      %2702 = vmatmul.mubr.bf16.gmra.mxu0 %v1168
      %v2703 = vpop.f32.mrf.mxu0
      %v2704 = vadd.f32 0.0, %v2703
      %v2705 = vpop.f32.mrf.mxu0
      %v2706 = vpop.f32.mrf.mxu0
      %v2707 = vadd.f32 0.0, %v2706
      %v2708 = vpop.f32.mrf.mxu0
      %2709 = vmatprep.mubr.bf16.mxu0 0
      %2710 = vmatmul.mubr.bf16.gmra.mxu0 %v1171
      %v2711 = vpop.f32.mrf.mxu0
      %v2712 = vadd.f32 0.0, %v2711
      %v2713 = vpop.f32.mrf.mxu0
      %v2714 = vpop.f32.mrf.mxu0
      %v2715 = vadd.f32 0.0, %v2714
      %v2716 = vpop.f32.mrf.mxu0
      %2717 = vmatprep.mubr.bf16.mxu0 0
      %2718 = vmatmul.mubr.bf16.gmra.mxu0 %v1174
      %v2719 = vpop.f32.mrf.mxu0
      %v2720 = vadd.f32 0.0, %v2719
      %v2721 = vpop.f32.mrf.mxu0
      %v2722 = vpop.f32.mrf.mxu0
      %v2723 = vadd.f32 0.0, %v2722
      %v2724 = vpop.f32.mrf.mxu0
      %2725 = vmatprep.mubr.bf16.mxu0 0
      %2726 = vmatmul.mubr.bf16.gmra.mxu0 %v1177
      %v2727 = vpop.f32.mrf.mxu0
      %v2728 = vadd.f32 0.0, %v2727
      %v2729 = vpop.f32.mrf.mxu0
      %v2730 = vpop.f32.mrf.mxu0
      %v2731 = vadd.f32 0.0, %v2730
      %v2732 = vpop.f32.mrf.mxu0
      %2733 = vmatprep.mubr.bf16.mxu0 0
      %2734 = vmatmul.mubr.bf16.gmra.mxu0 %v1180
      %v2735 = vpop.f32.mrf.mxu0
      %v2736 = vadd.f32 0.0, %v2735
      %v2737 = vpop.f32.mrf.mxu0
      %v2738 = vpop.f32.mrf.mxu0
      %v2739 = vadd.f32 0.0, %v2738
      %v2740 = vpop.f32.mrf.mxu0
      %2741 = vmatprep.mubr.bf16.mxu0 0
      %2742 = vmatmul.mubr.bf16.gmra.mxu0 %v1817
      %v2743 = vpop.f32.mrf.mxu0
      %v2744 = vadd.f32 0.0, %v2743
      %v2745 = vpop.f32.mrf.mxu0
      %v2746 = vpop.f32.mrf.mxu0
      %v2747 = vadd.f32 0.0, %v2746
      %v2748 = vpop.f32.mrf.mxu0
      %2749 = vdwg.mxu0
      %v2750 = vadd.f32 %v2458, %v2624
      %v2751 = vadd.f32 %v2461, %v2627
      %v2752 = vadd.f32 %v2466, %v2632
      %v2753 = vadd.f32 %v2469, %v2635
      %v2754 = vadd.f32 %v2474, %v2640
      %v2755 = vadd.f32 %v2477, %v2643
      %v2756 = vadd.f32 %v2482, %v2648
      %v2757 = vadd.f32 %v2485, %v2651
      %v2758 = vadd.f32 %v2490, %v2656
      %v2759 = vadd.f32 %v2493, %v2659
      %v2760 = vadd.f32 %v2498, %v2664
      %v2761 = vadd.f32 %v2501, %v2667
      %v2762 = vadd.f32 %v2506, %v2672
      %v2763 = vadd.f32 %v2509, %v2675
      %v2764 = vadd.f32 %v2514, %v2680
      %v2765 = vadd.f32 %v2517, %v2683
      %v2766 = vadd.f32 %v2522, %v2688
      %v2767 = vadd.f32 %v2525, %v2691
      %v2768 = vadd.f32 %v2530, %v2696
      %v2769 = vadd.f32 %v2533, %v2699
      %v2770 = vadd.f32 %v2538, %v2704
      %v2771 = vadd.f32 %v2541, %v2707
      %v2772 = vadd.f32 %v2546, %v2712
      %v2773 = vadd.f32 %v2549, %v2715
      %v2774 = vadd.f32 %v2554, %v2720
      %v2775 = vadd.f32 %v2557, %v2723
      %v2776 = vadd.f32 %v2562, %v2728
      %v2777 = vadd.f32 %v2565, %v2731
      %v2778 = vadd.f32 %v2570, %v2736
      %v2779 = vadd.f32 %v2573, %v2739
      %v2780 = vadd.f32 %v2578, %v2744
      %v2781 = vadd.f32 %v2581, %v2747
      %s2782 = scalar_lea.vmem %s386, 14
      %v2783 = vld [vmem:[%s2782] sm:$0x3]
      %v2784 = vunpack.c.l.b16 %v1069
      %v2785 = vunpack.c.l.b16 %v1072
      %v2786 = vpack.c.b16 %v2785, %v2784
      %v2788 = vsel %vm1133, %v2786, 0
      %v2791 = vsel %vm1182, %v2783, 0
      %2793 = vmatprep.subr.bf16.mxu0 0
      %2794 = vmatpush1.bf16.msra.mxu0 0
      %2795 = vmatprep.subr.bf16.mxu0 0
      %2796 = vmatpush1.bf16.msra.mxu0 0
      %2797 = vmatprep.subr.bf16.mxu0 0
      %2798 = vmatpush1.bf16.msra.mxu0 0
      %2799 = vmatprep.subr.bf16.mxu0 0
      %2800 = vmatpush1.bf16.msra.mxu0 0
      %2801 = vmatprep.subr.bf16.mxu0 0
      %2802 = vmatpush1.bf16.msra.mxu0 0
      %2803 = vmatprep.subr.bf16.mxu0 0
      %2804 = vmatpush1.bf16.msra.mxu0 0
      %2805 = vmatprep.subr.bf16.mxu0 0
      %2806 = vmatpush1.bf16.msra.mxu0 0
      %2807 = vmatprep.subr.bf16.mxu0 0
      %2808 = vmatpush1.bf16.msra.mxu0 %v2791
      %2809 = vmatprep.subr.bf16.mxu0 0
      %2810 = vmatpush2.bf16.msra.mxu0 0
      %2811 = vmatprep.subr.bf16.mxu0 0
      %2812 = vmatpush2.bf16.msra.mxu0 0
      %2813 = vmatprep.subr.bf16.mxu0 0
      %2814 = vmatpush2.bf16.msra.mxu0 0
      %2815 = vmatprep.subr.bf16.mxu0 0
      %2816 = vmatpush2.bf16.msra.mxu0 0
      %2817 = vmatprep.subr.bf16.mxu0 0
      %2818 = vmatpush2.bf16.msra.mxu0 0
      %2819 = vmatprep.subr.bf16.mxu0 0
      %2820 = vmatpush2.bf16.msra.mxu0 0
      %2821 = vmatprep.subr.bf16.mxu0 0
      %2822 = vmatpush2.bf16.msra.mxu0 0
      %2823 = vmatprep.subr.bf16.mxu0 0
      %2824 = vmatpush2.bf16.msra.mxu0 0
      %2825 = vmatprep.mubr.bf16.mxu0 0
      %2826 = vmatmul.mubr.bf16.gmra.mxu0 %v2212
      %v2827 = vpop.f32.mrf.mxu0
      %v2828 = vadd.f32 0.0, %v2827
      %v2829 = vpop.f32.mrf.mxu0
      %v2830 = vpop.f32.mrf.mxu0
      %v2831 = vadd.f32 0.0, %v2830
      %v2832 = vpop.f32.mrf.mxu0
      %2833 = vmatprep.mubr.bf16.mxu0 0
      %2834 = vmatmul.mubr.bf16.gmra.mxu0 %v2215
      %v2835 = vpop.f32.mrf.mxu0
      %v2836 = vadd.f32 0.0, %v2835
      %v2837 = vpop.f32.mrf.mxu0
      %v2838 = vpop.f32.mrf.mxu0
      %v2839 = vadd.f32 0.0, %v2838
      %v2840 = vpop.f32.mrf.mxu0
      %2841 = vmatprep.mubr.bf16.mxu0 0
      %2842 = vmatmul.mubr.bf16.gmra.mxu0 %v2218
      %v2843 = vpop.f32.mrf.mxu0
      %v2844 = vadd.f32 0.0, %v2843
      %v2845 = vpop.f32.mrf.mxu0
      %v2846 = vpop.f32.mrf.mxu0
      %v2847 = vadd.f32 0.0, %v2846
      %v2848 = vpop.f32.mrf.mxu0
      %2849 = vmatprep.mubr.bf16.mxu0 0
      %2850 = vmatmul.mubr.bf16.gmra.mxu0 %v2221
      %v2851 = vpop.f32.mrf.mxu0
      %v2852 = vadd.f32 0.0, %v2851
      %v2853 = vpop.f32.mrf.mxu0
      %v2854 = vpop.f32.mrf.mxu0
      %v2855 = vadd.f32 0.0, %v2854
      %v2856 = vpop.f32.mrf.mxu0
      %2857 = vmatprep.mubr.bf16.mxu0 0
      %2858 = vmatmul.mubr.bf16.gmra.mxu0 %v2224
      %v2859 = vpop.f32.mrf.mxu0
      %v2860 = vadd.f32 0.0, %v2859
      %v2861 = vpop.f32.mrf.mxu0
      %v2862 = vpop.f32.mrf.mxu0
      %v2863 = vadd.f32 0.0, %v2862
      %v2864 = vpop.f32.mrf.mxu0
      %2865 = vmatprep.mubr.bf16.mxu0 0
      %2866 = vmatmul.mubr.bf16.gmra.mxu0 %v2227
      %v2867 = vpop.f32.mrf.mxu0
      %v2868 = vadd.f32 0.0, %v2867
      %v2869 = vpop.f32.mrf.mxu0
      %v2870 = vpop.f32.mrf.mxu0
      %v2871 = vadd.f32 0.0, %v2870
      %v2872 = vpop.f32.mrf.mxu0
      %2873 = vmatprep.mubr.bf16.mxu0 0
      %2874 = vmatmul.mubr.bf16.gmra.mxu0 %v2230
      %v2875 = vpop.f32.mrf.mxu0
      %v2876 = vadd.f32 0.0, %v2875
      %v2877 = vpop.f32.mrf.mxu0
      %v2878 = vpop.f32.mrf.mxu0
      %v2879 = vadd.f32 0.0, %v2878
      %v2880 = vpop.f32.mrf.mxu0
      %2881 = vmatprep.mubr.bf16.mxu0 0
      %2882 = vmatmul.mubr.bf16.gmra.mxu0 %v2233
      %v2883 = vpop.f32.mrf.mxu0
      %v2884 = vadd.f32 0.0, %v2883
      %v2885 = vpop.f32.mrf.mxu0
      %v2886 = vpop.f32.mrf.mxu0
      %v2887 = vadd.f32 0.0, %v2886
      %v2888 = vpop.f32.mrf.mxu0
      %2889 = vmatprep.mubr.bf16.mxu0 0
      %2890 = vmatmul.mubr.bf16.gmra.mxu0 %v2236
      %v2891 = vpop.f32.mrf.mxu0
      %v2892 = vadd.f32 0.0, %v2891
      %v2893 = vpop.f32.mrf.mxu0
      %v2894 = vpop.f32.mrf.mxu0
      %v2895 = vadd.f32 0.0, %v2894
      %v2896 = vpop.f32.mrf.mxu0
      %2897 = vmatprep.mubr.bf16.mxu0 0
      %2898 = vmatmul.mubr.bf16.gmra.mxu0 %v2239
      %v2899 = vpop.f32.mrf.mxu0
      %v2900 = vadd.f32 0.0, %v2899
      %v2901 = vpop.f32.mrf.mxu0
      %v2902 = vpop.f32.mrf.mxu0
      %v2903 = vadd.f32 0.0, %v2902
      %v2904 = vpop.f32.mrf.mxu0
      %2905 = vmatprep.mubr.bf16.mxu0 0
      %2906 = vmatmul.mubr.bf16.gmra.mxu0 %v2242
      %v2907 = vpop.f32.mrf.mxu0
      %v2908 = vadd.f32 0.0, %v2907
      %v2909 = vpop.f32.mrf.mxu0
      %v2910 = vpop.f32.mrf.mxu0
      %v2911 = vadd.f32 0.0, %v2910
      %v2912 = vpop.f32.mrf.mxu0
      %2913 = vmatprep.mubr.bf16.mxu0 0
      %2914 = vmatmul.mubr.bf16.gmra.mxu0 %v2245
      %v2915 = vpop.f32.mrf.mxu0
      %v2916 = vadd.f32 0.0, %v2915
      %v2917 = vpop.f32.mrf.mxu0
      %v2918 = vpop.f32.mrf.mxu0
      %v2919 = vadd.f32 0.0, %v2918
      %v2920 = vpop.f32.mrf.mxu0
      %2921 = vmatprep.mubr.bf16.mxu0 0
      %2922 = vmatmul.mubr.bf16.gmra.mxu0 %v2248
      %v2923 = vpop.f32.mrf.mxu0
      %v2924 = vadd.f32 0.0, %v2923
      %v2925 = vpop.f32.mrf.mxu0
      %v2926 = vpop.f32.mrf.mxu0
      %v2927 = vadd.f32 0.0, %v2926
      %v2928 = vpop.f32.mrf.mxu0
      %2929 = vmatprep.mubr.bf16.mxu0 0
      %2930 = vmatmul.mubr.bf16.gmra.mxu0 %v2251
      %v2931 = vpop.f32.mrf.mxu0
      %v2932 = vadd.f32 0.0, %v2931
      %v2933 = vpop.f32.mrf.mxu0
      %v2934 = vpop.f32.mrf.mxu0
      %v2935 = vadd.f32 0.0, %v2934
      %v2936 = vpop.f32.mrf.mxu0
      %2937 = vmatprep.mubr.bf16.mxu0 0
      %2938 = vmatmul.mubr.bf16.gmra.mxu0 %v2254
      %v2939 = vpop.f32.mrf.mxu0
      %v2940 = vadd.f32 0.0, %v2939
      %v2941 = vpop.f32.mrf.mxu0
      %v2942 = vpop.f32.mrf.mxu0
      %v2943 = vadd.f32 0.0, %v2942
      %v2944 = vpop.f32.mrf.mxu0
      %2945 = vmatprep.mubr.bf16.mxu0 0
      %2946 = vmatmul.mubr.bf16.gmra.mxu0 %v2788
      %v2947 = vpop.f32.mrf.mxu0
      %v2948 = vadd.f32 0.0, %v2947
      %v2949 = vpop.f32.mrf.mxu0
      %v2950 = vpop.f32.mrf.mxu0
      %v2951 = vadd.f32 0.0, %v2950
      %v2952 = vpop.f32.mrf.mxu0
      %2953 = vdwg.mxu0
      %v2954 = vadd.f32 %v2750, %v2828
      %v2955 = vadd.f32 %v2751, %v2831
      %v2956 = vadd.f32 %v2752, %v2836
      %v2957 = vadd.f32 %v2753, %v2839
      %v2958 = vadd.f32 %v2754, %v2844
      %v2959 = vadd.f32 %v2755, %v2847
      %v2960 = vadd.f32 %v2756, %v2852
      %v2961 = vadd.f32 %v2757, %v2855
      %v2962 = vadd.f32 %v2758, %v2860
      %v2963 = vadd.f32 %v2759, %v2863
      %v2964 = vadd.f32 %v2760, %v2868
      %v2965 = vadd.f32 %v2761, %v2871
      %v2966 = vadd.f32 %v2762, %v2876
      %v2967 = vadd.f32 %v2763, %v2879
      %v2968 = vadd.f32 %v2764, %v2884
      %v2969 = vadd.f32 %v2765, %v2887
      %v2970 = vadd.f32 %v2766, %v2892
      %v2971 = vadd.f32 %v2767, %v2895
      %v2972 = vadd.f32 %v2768, %v2900
      %v2973 = vadd.f32 %v2769, %v2903
      %v2974 = vadd.f32 %v2770, %v2908
      %v2975 = vadd.f32 %v2771, %v2911
      %v2976 = vadd.f32 %v2772, %v2916
      %v2977 = vadd.f32 %v2773, %v2919
      %v2978 = vadd.f32 %v2774, %v2924
      %v2979 = vadd.f32 %v2775, %v2927
      %v2980 = vadd.f32 %v2776, %v2932
      %v2981 = vadd.f32 %v2777, %v2935
      %v2982 = vadd.f32 %v2778, %v2940
      %v2983 = vadd.f32 %v2779, %v2943
      %v2984 = vadd.f32 %v2780, %v2948
      %v2985 = vadd.f32 %v2781, %v2951
      %v2986 = vmul.f32 %v2954, %v2019
      %v2987 = vmul.f32 %v2955, %v2019
      %v2988 = vmul.f32 %v2956, %v2019
      %v2989 = vmul.f32 %v2957, %v2019
      %v2990 = vmul.f32 %v2958, %v2019
      %v2991 = vmul.f32 %v2959, %v2019
      %v2992 = vmul.f32 %v2960, %v2019
      %v2993 = vmul.f32 %v2961, %v2019
      %v2994 = vmul.f32 %v2962, %v2019
      %v2995 = vmul.f32 %v2963, %v2019
      %v2996 = vmul.f32 %v2964, %v2019
      %v2997 = vmul.f32 %v2965, %v2019
      %v2998 = vmul.f32 %v2966, %v2019
      %v2999 = vmul.f32 %v2967, %v2019
      %v3000 = vmul.f32 %v2968, %v2019
      %v3001 = vmul.f32 %v2969, %v2019
      %v3002 = vmul.f32 %v2970, %v2019
      %v3003 = vmul.f32 %v2971, %v2019
      %v3004 = vmul.f32 %v2972, %v2019
      %v3005 = vmul.f32 %v2973, %v2019
      %v3006 = vmul.f32 %v2974, %v2019
      %v3007 = vmul.f32 %v2975, %v2019
      %v3008 = vmul.f32 %v2976, %v2019
      %v3009 = vmul.f32 %v2977, %v2019
      %v3010 = vmul.f32 %v2978, %v2019
      %v3011 = vmul.f32 %v2979, %v2019
      %v3012 = vmul.f32 %v2980, %v2019
      %v3013 = vmul.f32 %v2981, %v2019
      %v3014 = vmul.f32 %v2982, %v2019
      %v3015 = vmul.f32 %v2983, %v2019
      %v3016 = vmul.f32 %v2984, %v2019
      %v3017 = vmul.f32 %v2985, %v2019
      %v3018 = vadd.f32 %v2986, %v2057
      %v3019 = vadd.f32 %v2987, %v2057
      %v3020 = vadd.f32 %v2988, %v2057
      %v3021 = vadd.f32 %v2989, %v2057
      %v3022 = vadd.f32 %v2990, %v2057
      %v3023 = vadd.f32 %v2991, %v2057
      %v3024 = vadd.f32 %v2992, %v2057
      %v3025 = vadd.f32 %v2993, %v2057
      %v3026 = vadd.f32 %v2994, %v2057
      %v3027 = vadd.f32 %v2995, %v2057
      %v3028 = vadd.f32 %v2996, %v2057
      %v3029 = vadd.f32 %v2997, %v2057
      %v3030 = vadd.f32 %v2998, %v2057
      %v3031 = vadd.f32 %v2999, %v2057
      %v3032 = vadd.f32 %v3000, %v2057
      %v3033 = vadd.f32 %v3001, %v2057
      %v3034 = vadd.f32 %v3002, %v2057
      %v3035 = vadd.f32 %v3003, %v2057
      %v3036 = vadd.f32 %v3004, %v2057
      %v3037 = vadd.f32 %v3005, %v2057
      %v3038 = vadd.f32 %v3006, %v2057
      %v3039 = vadd.f32 %v3007, %v2057
      %v3040 = vadd.f32 %v3008, %v2057
      %v3041 = vadd.f32 %v3009, %v2057
      %v3042 = vadd.f32 %v3010, %v2057
      %v3043 = vadd.f32 %v3011, %v2057
      %v3044 = vadd.f32 %v3012, %v2057
      %v3045 = vadd.f32 %v3013, %v2057
      %v3046 = vadd.f32 %v3014, %v2057
      %v3047 = vadd.f32 %v3015, %v2057
      %v3048 = vadd.f32 %v3016, %v2057
      %v3049 = vadd.f32 %v3017, %v2057
      %v3050 = vmax.f32 %v3018, 0.0
      %v3051 = vmax.f32 %v3019, 0.0
      %v3052 = vmax.f32 %v3020, 0.0
      %v3053 = vmax.f32 %v3021, 0.0
      %v3054 = vmax.f32 %v3022, 0.0
      %v3055 = vmax.f32 %v3023, 0.0
      %v3056 = vmax.f32 %v3024, 0.0
      %v3057 = vmax.f32 %v3025, 0.0
      %v3058 = vmax.f32 %v3026, 0.0
      %v3059 = vmax.f32 %v3027, 0.0
      %v3060 = vmax.f32 %v3028, 0.0
      %v3061 = vmax.f32 %v3029, 0.0
      %v3062 = vmax.f32 %v3030, 0.0
      %v3063 = vmax.f32 %v3031, 0.0
      %v3064 = vmax.f32 %v3032, 0.0
      %v3065 = vmax.f32 %v3033, 0.0
      %v3066 = vmax.f32 %v3034, 0.0
      %v3067 = vmax.f32 %v3035, 0.0
      %v3068 = vmax.f32 %v3036, 0.0
      %v3069 = vmax.f32 %v3037, 0.0
      %v3070 = vmax.f32 %v3038, 0.0
      %v3071 = vmax.f32 %v3039, 0.0
      %v3072 = vmax.f32 %v3040, 0.0
      %v3073 = vmax.f32 %v3041, 0.0
      %v3074 = vmax.f32 %v3042, 0.0
      %v3075 = vmax.f32 %v3043, 0.0
      %v3076 = vmax.f32 %v3044, 0.0
      %v3077 = vmax.f32 %v3045, 0.0
      %v3078 = vmax.f32 %v3046, 0.0
      %v3079 = vmax.f32 %v3047, 0.0
      %v3080 = vmax.f32 %v3048, 0.0
      %v3081 = vmax.f32 %v3049, 0.0
      %s3082 = scalar_lea.vmem %s405, 256
      %3083 = vst.msk [vmem:[%s3082] sm:$0xff] %vm2123, %v3050
      %3084 = vst.msk [vmem:[%s3082 + $0x8] sm:$0xff] %vm2123, %v3051
      %3085 = vst.msk [vmem:[%s3082 + $0x10] sm:$0xff] %vm2123, %v3052
      %3086 = vst.msk [vmem:[%s3082 + $0x18] sm:$0xff] %vm2123, %v3053
      %3087 = vst.msk [vmem:[%s3082 + $0x20] sm:$0xff] %vm2123, %v3054
      %3088 = vst.msk [vmem:[%s3082 + $0x28] sm:$0xff] %vm2123, %v3055
      %3089 = vst.msk [vmem:[%s3082 + $0x30] sm:$0xff] %vm2123, %v3056
      %3090 = vst.msk [vmem:[%s3082 + $0x38] sm:$0xff] %vm2123, %v3057
      %3091 = vst.msk [vmem:[%s3082 + $0x40] sm:$0xff] %vm2123, %v3058
      %3092 = vst.msk [vmem:[%s3082 + $0x48] sm:$0xff] %vm2123, %v3059
      %3093 = vst.msk [vmem:[%s3082 + $0x50] sm:$0xff] %vm2123, %v3060
      %3094 = vst.msk [vmem:[%s3082 + $0x58] sm:$0xff] %vm2123, %v3061
      %3095 = vst.msk [vmem:[%s3082 + $0x60] sm:$0xff] %vm2123, %v3062
      %3096 = vst.msk [vmem:[%s3082 + $0x68] sm:$0xff] %vm2123, %v3063
      %3097 = vst.msk [vmem:[%s3082 + $0x70] sm:$0xff] %vm2123, %v3064
      %3098 = vst.msk [vmem:[%s3082 + $0x78] sm:$0xff] %vm2123, %v3065
      %3099 = vst.msk [vmem:[%s3082 + $0x80] sm:$0xff] %vm2123, %v3066
      %3100 = vst.msk [vmem:[%s3082 + $0x88] sm:$0xff] %vm2123, %v3067
      %3101 = vst.msk [vmem:[%s3082 + $0x90] sm:$0xff] %vm2123, %v3068
      %3102 = vst.msk [vmem:[%s3082 + $0x98] sm:$0xff] %vm2123, %v3069
      %3103 = vst.msk [vmem:[%s3082 + $0xa0] sm:$0xff] %vm2123, %v3070
      %3104 = vst.msk [vmem:[%s3082 + $0xa8] sm:$0xff] %vm2123, %v3071
      %3105 = vst.msk [vmem:[%s3082 + $0xb0] sm:$0xff] %vm2123, %v3072
      %3106 = vst.msk [vmem:[%s3082 + $0xb8] sm:$0xff] %vm2123, %v3073
      %3107 = vst.msk [vmem:[%s3082 + $0xc0] sm:$0xff] %vm2123, %v3074
      %3108 = vst.msk [vmem:[%s3082 + $0xc8] sm:$0xff] %vm2123, %v3075
      %3109 = vst.msk [vmem:[%s3082 + $0xd0] sm:$0xff] %vm2123, %v3076
      %3110 = vst.msk [vmem:[%s3082 + $0xd8] sm:$0xff] %vm2123, %v3077
      %3111 = vst.msk [vmem:[%s3082 + $0xe0] sm:$0xff] %vm2123, %v3078
      %3112 = vst.msk [vmem:[%s3082 + $0xe8] sm:$0xff] %vm2123, %v3079
      %3113 = vst.msk [vmem:[%s3082 + $0xf0] sm:$0xff] %vm2123, %v3080
      %3114 = vst.msk [vmem:[%s3082 + $0xf8] sm:$0xff] %vm2123, %v3081
      %s3115 = scalar_lea.vmem %s386, 16
      %v3116 = vld [vmem:[%s3115] sm:$0x3]
      %s3117 = scalar_lea.vmem %s386, 18
      %v3118 = vld [vmem:[%s3117] sm:$0x3]
      %v3120 = vsel %vm1182, %v3118, 0
      %3122 = vmatprep.subr.bf16.mxu0 0
      %3123 = vmatpush1.bf16.msra.mxu0 0
      %3124 = vmatprep.subr.bf16.mxu0 0
      %3125 = vmatpush1.bf16.msra.mxu0 0
      %3126 = vmatprep.subr.bf16.mxu0 0
      %3127 = vmatpush1.bf16.msra.mxu0 0
      %3128 = vmatprep.subr.bf16.mxu0 0
      %3129 = vmatpush1.bf16.msra.mxu0 0
      %3130 = vmatprep.subr.bf16.mxu0 0
      %3131 = vmatpush1.bf16.msra.mxu0 0
      %3132 = vmatprep.subr.bf16.mxu0 0
      %3133 = vmatpush1.bf16.msra.mxu0 0
      %3134 = vmatprep.subr.bf16.mxu0 0
      %3135 = vmatpush1.bf16.msra.mxu0 0
      %3136 = vmatprep.subr.bf16.mxu0 0
      %3137 = vmatpush1.bf16.msra.mxu0 %v3120
      %3138 = vmatprep.subr.bf16.mxu0 0
      %3139 = vmatpush2.bf16.msra.mxu0 0
      %3140 = vmatprep.subr.bf16.mxu0 0
      %3141 = vmatpush2.bf16.msra.mxu0 0
      %3142 = vmatprep.subr.bf16.mxu0 0
      %3143 = vmatpush2.bf16.msra.mxu0 0
      %3144 = vmatprep.subr.bf16.mxu0 0
      %3145 = vmatpush2.bf16.msra.mxu0 0
      %3146 = vmatprep.subr.bf16.mxu0 0
      %3147 = vmatpush2.bf16.msra.mxu0 0
      %3148 = vmatprep.subr.bf16.mxu0 0
      %3149 = vmatpush2.bf16.msra.mxu0 0
      %3150 = vmatprep.subr.bf16.mxu0 0
      %3151 = vmatpush2.bf16.msra.mxu0 0
      %3152 = vmatprep.subr.bf16.mxu0 0
      %3153 = vmatpush2.bf16.msra.mxu0 0
      %3154 = vmatprep.mubr.bf16.mxu0 0
      %3155 = vmatmul.mubr.bf16.gmra.mxu0 %v1138
      %v3156 = vpop.f32.mrf.mxu0
      %v3157 = vadd.f32 0.0, %v3156
      %v3158 = vpop.f32.mrf.mxu0
      %v3159 = vpop.f32.mrf.mxu0
      %v3160 = vadd.f32 0.0, %v3159
      %v3161 = vpop.f32.mrf.mxu0
      %3162 = vmatprep.mubr.bf16.mxu0 0
      %3163 = vmatmul.mubr.bf16.gmra.mxu0 %v1141
      %v3164 = vpop.f32.mrf.mxu0
      %v3165 = vadd.f32 0.0, %v3164
      %v3166 = vpop.f32.mrf.mxu0
      %v3167 = vpop.f32.mrf.mxu0
      %v3168 = vadd.f32 0.0, %v3167
      %v3169 = vpop.f32.mrf.mxu0
      %3170 = vmatprep.mubr.bf16.mxu0 0
      %3171 = vmatmul.mubr.bf16.gmra.mxu0 %v1144
      %v3172 = vpop.f32.mrf.mxu0
      %v3173 = vadd.f32 0.0, %v3172
      %v3174 = vpop.f32.mrf.mxu0
      %v3175 = vpop.f32.mrf.mxu0
      %v3176 = vadd.f32 0.0, %v3175
      %v3177 = vpop.f32.mrf.mxu0
      %3178 = vmatprep.mubr.bf16.mxu0 0
      %3179 = vmatmul.mubr.bf16.gmra.mxu0 %v1147
      %v3180 = vpop.f32.mrf.mxu0
      %v3181 = vadd.f32 0.0, %v3180
      %v3182 = vpop.f32.mrf.mxu0
      %v3183 = vpop.f32.mrf.mxu0
      %v3184 = vadd.f32 0.0, %v3183
      %v3185 = vpop.f32.mrf.mxu0
      %3186 = vmatprep.mubr.bf16.mxu0 0
      %3187 = vmatmul.mubr.bf16.gmra.mxu0 %v1150
      %v3188 = vpop.f32.mrf.mxu0
      %v3189 = vadd.f32 0.0, %v3188
      %v3190 = vpop.f32.mrf.mxu0
      %v3191 = vpop.f32.mrf.mxu0
      %v3192 = vadd.f32 0.0, %v3191
      %v3193 = vpop.f32.mrf.mxu0
      %3194 = vmatprep.mubr.bf16.mxu0 0
      %3195 = vmatmul.mubr.bf16.gmra.mxu0 %v1153
      %v3196 = vpop.f32.mrf.mxu0
      %v3197 = vadd.f32 0.0, %v3196
      %v3198 = vpop.f32.mrf.mxu0
      %v3199 = vpop.f32.mrf.mxu0
      %v3200 = vadd.f32 0.0, %v3199
      %v3201 = vpop.f32.mrf.mxu0
      %3202 = vmatprep.mubr.bf16.mxu0 0
      %3203 = vmatmul.mubr.bf16.gmra.mxu0 %v1156
      %v3204 = vpop.f32.mrf.mxu0
      %v3205 = vadd.f32 0.0, %v3204
      %v3206 = vpop.f32.mrf.mxu0
      %v3207 = vpop.f32.mrf.mxu0
      %v3208 = vadd.f32 0.0, %v3207
      %v3209 = vpop.f32.mrf.mxu0
      %3210 = vmatprep.mubr.bf16.mxu0 0
      %3211 = vmatmul.mubr.bf16.gmra.mxu0 %v1159
      %v3212 = vpop.f32.mrf.mxu0
      %v3213 = vadd.f32 0.0, %v3212
      %v3214 = vpop.f32.mrf.mxu0
      %v3215 = vpop.f32.mrf.mxu0
      %v3216 = vadd.f32 0.0, %v3215
      %v3217 = vpop.f32.mrf.mxu0
      %3218 = vmatprep.mubr.bf16.mxu0 0
      %3219 = vmatmul.mubr.bf16.gmra.mxu0 %v1162
      %v3220 = vpop.f32.mrf.mxu0
      %v3221 = vadd.f32 0.0, %v3220
      %v3222 = vpop.f32.mrf.mxu0
      %v3223 = vpop.f32.mrf.mxu0
      %v3224 = vadd.f32 0.0, %v3223
      %v3225 = vpop.f32.mrf.mxu0
      %3226 = vmatprep.mubr.bf16.mxu0 0
      %3227 = vmatmul.mubr.bf16.gmra.mxu0 %v1165
      %v3228 = vpop.f32.mrf.mxu0
      %v3229 = vadd.f32 0.0, %v3228
      %v3230 = vpop.f32.mrf.mxu0
      %v3231 = vpop.f32.mrf.mxu0
      %v3232 = vadd.f32 0.0, %v3231
      %v3233 = vpop.f32.mrf.mxu0
      %3234 = vmatprep.mubr.bf16.mxu0 0
      %3235 = vmatmul.mubr.bf16.gmra.mxu0 %v1168
      %v3236 = vpop.f32.mrf.mxu0
      %v3237 = vadd.f32 0.0, %v3236
      %v3238 = vpop.f32.mrf.mxu0
      %v3239 = vpop.f32.mrf.mxu0
      %v3240 = vadd.f32 0.0, %v3239
      %v3241 = vpop.f32.mrf.mxu0
      %3242 = vmatprep.mubr.bf16.mxu0 0
      %3243 = vmatmul.mubr.bf16.gmra.mxu0 %v1171
      %v3244 = vpop.f32.mrf.mxu0
      %v3245 = vadd.f32 0.0, %v3244
      %v3246 = vpop.f32.mrf.mxu0
      %v3247 = vpop.f32.mrf.mxu0
      %v3248 = vadd.f32 0.0, %v3247
      %v3249 = vpop.f32.mrf.mxu0
      %3250 = vmatprep.mubr.bf16.mxu0 0
      %3251 = vmatmul.mubr.bf16.gmra.mxu0 %v1174
      %v3252 = vpop.f32.mrf.mxu0
      %v3253 = vadd.f32 0.0, %v3252
      %v3254 = vpop.f32.mrf.mxu0
      %v3255 = vpop.f32.mrf.mxu0
      %v3256 = vadd.f32 0.0, %v3255
      %v3257 = vpop.f32.mrf.mxu0
      %3258 = vmatprep.mubr.bf16.mxu0 0
      %3259 = vmatmul.mubr.bf16.gmra.mxu0 %v1177
      %v3260 = vpop.f32.mrf.mxu0
      %v3261 = vadd.f32 0.0, %v3260
      %v3262 = vpop.f32.mrf.mxu0
      %v3263 = vpop.f32.mrf.mxu0
      %v3264 = vadd.f32 0.0, %v3263
      %v3265 = vpop.f32.mrf.mxu0
      %3266 = vmatprep.mubr.bf16.mxu0 0
      %3267 = vmatmul.mubr.bf16.gmra.mxu0 %v1180
      %v3268 = vpop.f32.mrf.mxu0
      %v3269 = vadd.f32 0.0, %v3268
      %v3270 = vpop.f32.mrf.mxu0
      %v3271 = vpop.f32.mrf.mxu0
      %v3272 = vadd.f32 0.0, %v3271
      %v3273 = vpop.f32.mrf.mxu0
      %3274 = vmatprep.mubr.bf16.mxu0 0
      %3275 = vmatmul.mubr.bf16.gmra.mxu0 %v1817
      %v3276 = vpop.f32.mrf.mxu0
      %v3277 = vadd.f32 0.0, %v3276
      %v3278 = vpop.f32.mrf.mxu0
      %v3279 = vpop.f32.mrf.mxu0
      %v3280 = vadd.f32 0.0, %v3279
      %v3281 = vpop.f32.mrf.mxu0
      %3282 = vdwg.mxu0
      %v3284 = vsel %vm1182, %v3116, 0
      %3286 = vmatprep.subr.bf16.mxu0 0
      %3287 = vmatpush1.bf16.msra.mxu0 0
      %3288 = vmatprep.subr.bf16.mxu0 0
      %3289 = vmatpush1.bf16.msra.mxu0 0
      %3290 = vmatprep.subr.bf16.mxu0 0
      %3291 = vmatpush1.bf16.msra.mxu0 0
      %3292 = vmatprep.subr.bf16.mxu0 0
      %3293 = vmatpush1.bf16.msra.mxu0 0
      %3294 = vmatprep.subr.bf16.mxu0 0
      %3295 = vmatpush1.bf16.msra.mxu0 0
      %3296 = vmatprep.subr.bf16.mxu0 0
      %3297 = vmatpush1.bf16.msra.mxu0 0
      %3298 = vmatprep.subr.bf16.mxu0 0
      %3299 = vmatpush1.bf16.msra.mxu0 0
      %3300 = vmatprep.subr.bf16.mxu0 0
      %3301 = vmatpush1.bf16.msra.mxu0 %v3284
      %3302 = vmatprep.subr.bf16.mxu0 0
      %3303 = vmatpush2.bf16.msra.mxu0 0
      %3304 = vmatprep.subr.bf16.mxu0 0
      %3305 = vmatpush2.bf16.msra.mxu0 0
      %3306 = vmatprep.subr.bf16.mxu0 0
      %3307 = vmatpush2.bf16.msra.mxu0 0
      %3308 = vmatprep.subr.bf16.mxu0 0
      %3309 = vmatpush2.bf16.msra.mxu0 0
      %3310 = vmatprep.subr.bf16.mxu0 0
      %3311 = vmatpush2.bf16.msra.mxu0 0
      %3312 = vmatprep.subr.bf16.mxu0 0
      %3313 = vmatpush2.bf16.msra.mxu0 0
      %3314 = vmatprep.subr.bf16.mxu0 0
      %3315 = vmatpush2.bf16.msra.mxu0 0
      %3316 = vmatprep.subr.bf16.mxu0 0
      %3317 = vmatpush2.bf16.msra.mxu0 0
      %3318 = vmatprep.mubr.bf16.mxu0 0
      %3319 = vmatmul.mubr.bf16.gmra.mxu0 %v1399
      %v3320 = vpop.f32.mrf.mxu0
      %v3321 = vadd.f32 %v3157, %v3320
      %v3322 = vpop.f32.mrf.mxu0
      %v3323 = vpop.f32.mrf.mxu0
      %v3324 = vadd.f32 %v3160, %v3323
      %v3325 = vpop.f32.mrf.mxu0
      %3326 = vmatprep.mubr.bf16.mxu0 0
      %3327 = vmatmul.mubr.bf16.gmra.mxu0 %v1402
      %v3328 = vpop.f32.mrf.mxu0
      %v3329 = vadd.f32 %v3165, %v3328
      %v3330 = vpop.f32.mrf.mxu0
      %v3331 = vpop.f32.mrf.mxu0
      %v3332 = vadd.f32 %v3168, %v3331
      %v3333 = vpop.f32.mrf.mxu0
      %3334 = vmatprep.mubr.bf16.mxu0 0
      %3335 = vmatmul.mubr.bf16.gmra.mxu0 %v1405
      %v3336 = vpop.f32.mrf.mxu0
      %v3337 = vadd.f32 %v3173, %v3336
      %v3338 = vpop.f32.mrf.mxu0
      %v3339 = vpop.f32.mrf.mxu0
      %v3340 = vadd.f32 %v3176, %v3339
      %v3341 = vpop.f32.mrf.mxu0
      %3342 = vmatprep.mubr.bf16.mxu0 0
      %3343 = vmatmul.mubr.bf16.gmra.mxu0 %v1408
      %v3344 = vpop.f32.mrf.mxu0
      %v3345 = vadd.f32 %v3181, %v3344
      %v3346 = vpop.f32.mrf.mxu0
      %v3347 = vpop.f32.mrf.mxu0
      %v3348 = vadd.f32 %v3184, %v3347
      %v3349 = vpop.f32.mrf.mxu0
      %3350 = vmatprep.mubr.bf16.mxu0 0
      %3351 = vmatmul.mubr.bf16.gmra.mxu0 %v1411
      %v3352 = vpop.f32.mrf.mxu0
      %v3353 = vadd.f32 %v3189, %v3352
      %v3354 = vpop.f32.mrf.mxu0
      %v3355 = vpop.f32.mrf.mxu0
      %v3356 = vadd.f32 %v3192, %v3355
      %v3357 = vpop.f32.mrf.mxu0
      %3358 = vmatprep.mubr.bf16.mxu0 0
      %3359 = vmatmul.mubr.bf16.gmra.mxu0 %v1414
      %v3360 = vpop.f32.mrf.mxu0
      %v3361 = vadd.f32 %v3197, %v3360
      %v3362 = vpop.f32.mrf.mxu0
      %v3363 = vpop.f32.mrf.mxu0
      %v3364 = vadd.f32 %v3200, %v3363
      %v3365 = vpop.f32.mrf.mxu0
      %3366 = vmatprep.mubr.bf16.mxu0 0
      %3367 = vmatmul.mubr.bf16.gmra.mxu0 %v1417
      %v3368 = vpop.f32.mrf.mxu0
      %v3369 = vadd.f32 %v3205, %v3368
      %v3370 = vpop.f32.mrf.mxu0
      %v3371 = vpop.f32.mrf.mxu0
      %v3372 = vadd.f32 %v3208, %v3371
      %v3373 = vpop.f32.mrf.mxu0
      %3374 = vmatprep.mubr.bf16.mxu0 0
      %3375 = vmatmul.mubr.bf16.gmra.mxu0 %v1420
      %v3376 = vpop.f32.mrf.mxu0
      %v3377 = vadd.f32 %v3213, %v3376
      %v3378 = vpop.f32.mrf.mxu0
      %v3379 = vpop.f32.mrf.mxu0
      %v3380 = vadd.f32 %v3216, %v3379
      %v3381 = vpop.f32.mrf.mxu0
      %3382 = vmatprep.mubr.bf16.mxu0 0
      %3383 = vmatmul.mubr.bf16.gmra.mxu0 %v1423
      %v3384 = vpop.f32.mrf.mxu0
      %v3385 = vadd.f32 %v3221, %v3384
      %v3386 = vpop.f32.mrf.mxu0
      %v3387 = vpop.f32.mrf.mxu0
      %v3388 = vadd.f32 %v3224, %v3387
      %v3389 = vpop.f32.mrf.mxu0
      %3390 = vmatprep.mubr.bf16.mxu0 0
      %3391 = vmatmul.mubr.bf16.gmra.mxu0 %v1426
      %v3392 = vpop.f32.mrf.mxu0
      %v3393 = vadd.f32 %v3229, %v3392
      %v3394 = vpop.f32.mrf.mxu0
      %v3395 = vpop.f32.mrf.mxu0
      %v3396 = vadd.f32 %v3232, %v3395
      %v3397 = vpop.f32.mrf.mxu0
      %3398 = vmatprep.mubr.bf16.mxu0 0
      %3399 = vmatmul.mubr.bf16.gmra.mxu0 %v1429
      %v3400 = vpop.f32.mrf.mxu0
      %v3401 = vadd.f32 %v3237, %v3400
      %v3402 = vpop.f32.mrf.mxu0
      %v3403 = vpop.f32.mrf.mxu0
      %v3404 = vadd.f32 %v3240, %v3403
      %v3405 = vpop.f32.mrf.mxu0
      %3406 = vmatprep.mubr.bf16.mxu0 0
      %3407 = vmatmul.mubr.bf16.gmra.mxu0 %v1432
      %v3408 = vpop.f32.mrf.mxu0
      %v3409 = vadd.f32 %v3245, %v3408
      %v3410 = vpop.f32.mrf.mxu0
      %v3411 = vpop.f32.mrf.mxu0
      %v3412 = vadd.f32 %v3248, %v3411
      %v3413 = vpop.f32.mrf.mxu0
      %3414 = vmatprep.mubr.bf16.mxu0 0
      %3415 = vmatmul.mubr.bf16.gmra.mxu0 %v1435
      %v3416 = vpop.f32.mrf.mxu0
      %v3417 = vadd.f32 %v3253, %v3416
      %v3418 = vpop.f32.mrf.mxu0
      %v3419 = vpop.f32.mrf.mxu0
      %v3420 = vadd.f32 %v3256, %v3419
      %v3421 = vpop.f32.mrf.mxu0
      %3422 = vmatprep.mubr.bf16.mxu0 0
      %3423 = vmatmul.mubr.bf16.gmra.mxu0 %v1438
      %v3424 = vpop.f32.mrf.mxu0
      %v3425 = vadd.f32 %v3261, %v3424
      %v3426 = vpop.f32.mrf.mxu0
      %v3427 = vpop.f32.mrf.mxu0
      %v3428 = vadd.f32 %v3264, %v3427
      %v3429 = vpop.f32.mrf.mxu0
      %3430 = vmatprep.mubr.bf16.mxu0 0
      %3431 = vmatmul.mubr.bf16.gmra.mxu0 %v1441
      %v3432 = vpop.f32.mrf.mxu0
      %v3433 = vadd.f32 %v3269, %v3432
      %v3434 = vpop.f32.mrf.mxu0
      %v3435 = vpop.f32.mrf.mxu0
      %v3436 = vadd.f32 %v3272, %v3435
      %v3437 = vpop.f32.mrf.mxu0
      %3438 = vmatprep.mubr.bf16.mxu0 0
      %3439 = vmatmul.mubr.bf16.gmra.mxu0 %v1613
      %v3440 = vpop.f32.mrf.mxu0
      %v3441 = vadd.f32 %v3277, %v3440
      %v3442 = vpop.f32.mrf.mxu0
      %v3443 = vpop.f32.mrf.mxu0
      %v3444 = vadd.f32 %v3280, %v3443
      %v3445 = vpop.f32.mrf.mxu0
      %3446 = vdwg.mxu0
      %s3447 = scalar_lea.vmem %s386, 20
      %v3448 = vld [vmem:[%s3447] sm:$0x3]
      %v3449 = vunpack.c.l.b16 %v459
      %v3450 = vunpack.c.l.b16 %v460
      %v3451 = vpack.c.b16 %v3450, %v3449
      %v3453 = vsel %vm1133, %v3451, 0
      %v3456 = vsel %vm1182, %v3448, 0
      %3458 = vmatprep.subr.bf16.mxu0 0
      %3459 = vmatpush1.bf16.msra.mxu0 0
      %3460 = vmatprep.subr.bf16.mxu0 0
      %3461 = vmatpush1.bf16.msra.mxu0 0
      %3462 = vmatprep.subr.bf16.mxu0 0
      %3463 = vmatpush1.bf16.msra.mxu0 0
      %3464 = vmatprep.subr.bf16.mxu0 0
      %3465 = vmatpush1.bf16.msra.mxu0 0
      %3466 = vmatprep.subr.bf16.mxu0 0
      %3467 = vmatpush1.bf16.msra.mxu0 0
      %3468 = vmatprep.subr.bf16.mxu0 0
      %3469 = vmatpush1.bf16.msra.mxu0 0
      %3470 = vmatprep.subr.bf16.mxu0 0
      %3471 = vmatpush1.bf16.msra.mxu0 0
      %3472 = vmatprep.subr.bf16.mxu0 0
      %3473 = vmatpush1.bf16.msra.mxu0 %v3456
      %3474 = vmatprep.subr.bf16.mxu0 0
      %3475 = vmatpush2.bf16.msra.mxu0 0
      %3476 = vmatprep.subr.bf16.mxu0 0
      %3477 = vmatpush2.bf16.msra.mxu0 0
      %3478 = vmatprep.subr.bf16.mxu0 0
      %3479 = vmatpush2.bf16.msra.mxu0 0
      %3480 = vmatprep.subr.bf16.mxu0 0
      %3481 = vmatpush2.bf16.msra.mxu0 0
      %3482 = vmatprep.subr.bf16.mxu0 0
      %3483 = vmatpush2.bf16.msra.mxu0 0
      %3484 = vmatprep.subr.bf16.mxu0 0
      %3485 = vmatpush2.bf16.msra.mxu0 0
      %3486 = vmatprep.subr.bf16.mxu0 0
      %3487 = vmatpush2.bf16.msra.mxu0 0
      %3488 = vmatprep.subr.bf16.mxu0 0
      %3489 = vmatpush2.bf16.msra.mxu0 0
      %3490 = vmatprep.mubr.bf16.mxu0 0
      %3491 = vmatmul.mubr.bf16.gmra.mxu0 %v1402
      %v3492 = vpop.f32.mrf.mxu0
      %v3493 = vadd.f32 0.0, %v3492
      %v3494 = vpop.f32.mrf.mxu0
      %v3495 = vpop.f32.mrf.mxu0
      %v3496 = vadd.f32 0.0, %v3495
      %v3497 = vpop.f32.mrf.mxu0
      %3498 = vmatprep.mubr.bf16.mxu0 0
      %3499 = vmatmul.mubr.bf16.gmra.mxu0 %v1405
      %v3500 = vpop.f32.mrf.mxu0
      %v3501 = vadd.f32 0.0, %v3500
      %v3502 = vpop.f32.mrf.mxu0
      %v3503 = vpop.f32.mrf.mxu0
      %v3504 = vadd.f32 0.0, %v3503
      %v3505 = vpop.f32.mrf.mxu0
      %3506 = vmatprep.mubr.bf16.mxu0 0
      %3507 = vmatmul.mubr.bf16.gmra.mxu0 %v1408
      %v3508 = vpop.f32.mrf.mxu0
      %v3509 = vadd.f32 0.0, %v3508
      %v3510 = vpop.f32.mrf.mxu0
      %v3511 = vpop.f32.mrf.mxu0
      %v3512 = vadd.f32 0.0, %v3511
      %v3513 = vpop.f32.mrf.mxu0
      %3514 = vmatprep.mubr.bf16.mxu0 0
      %3515 = vmatmul.mubr.bf16.gmra.mxu0 %v1411
      %v3516 = vpop.f32.mrf.mxu0
      %v3517 = vadd.f32 0.0, %v3516
      %v3518 = vpop.f32.mrf.mxu0
      %v3519 = vpop.f32.mrf.mxu0
      %v3520 = vadd.f32 0.0, %v3519
      %v3521 = vpop.f32.mrf.mxu0
      %3522 = vmatprep.mubr.bf16.mxu0 0
      %3523 = vmatmul.mubr.bf16.gmra.mxu0 %v1414
      %v3524 = vpop.f32.mrf.mxu0
      %v3525 = vadd.f32 0.0, %v3524
      %v3526 = vpop.f32.mrf.mxu0
      %v3527 = vpop.f32.mrf.mxu0
      %v3528 = vadd.f32 0.0, %v3527
      %v3529 = vpop.f32.mrf.mxu0
      %3530 = vmatprep.mubr.bf16.mxu0 0
      %3531 = vmatmul.mubr.bf16.gmra.mxu0 %v1417
      %v3532 = vpop.f32.mrf.mxu0
      %v3533 = vadd.f32 0.0, %v3532
      %v3534 = vpop.f32.mrf.mxu0
      %v3535 = vpop.f32.mrf.mxu0
      %v3536 = vadd.f32 0.0, %v3535
      %v3537 = vpop.f32.mrf.mxu0
      %3538 = vmatprep.mubr.bf16.mxu0 0
      %3539 = vmatmul.mubr.bf16.gmra.mxu0 %v1420
      %v3540 = vpop.f32.mrf.mxu0
      %v3541 = vadd.f32 0.0, %v3540
      %v3542 = vpop.f32.mrf.mxu0
      %v3543 = vpop.f32.mrf.mxu0
      %v3544 = vadd.f32 0.0, %v3543
      %v3545 = vpop.f32.mrf.mxu0
      %3546 = vmatprep.mubr.bf16.mxu0 0
      %3547 = vmatmul.mubr.bf16.gmra.mxu0 %v1423
      %v3548 = vpop.f32.mrf.mxu0
      %v3549 = vadd.f32 0.0, %v3548
      %v3550 = vpop.f32.mrf.mxu0
      %v3551 = vpop.f32.mrf.mxu0
      %v3552 = vadd.f32 0.0, %v3551
      %v3553 = vpop.f32.mrf.mxu0
      %3554 = vmatprep.mubr.bf16.mxu0 0
      %3555 = vmatmul.mubr.bf16.gmra.mxu0 %v1426
      %v3556 = vpop.f32.mrf.mxu0
      %v3557 = vadd.f32 0.0, %v3556
      %v3558 = vpop.f32.mrf.mxu0
      %v3559 = vpop.f32.mrf.mxu0
      %v3560 = vadd.f32 0.0, %v3559
      %v3561 = vpop.f32.mrf.mxu0
      %3562 = vmatprep.mubr.bf16.mxu0 0
      %3563 = vmatmul.mubr.bf16.gmra.mxu0 %v1429
      %v3564 = vpop.f32.mrf.mxu0
      %v3565 = vadd.f32 0.0, %v3564
      %v3566 = vpop.f32.mrf.mxu0
      %v3567 = vpop.f32.mrf.mxu0
      %v3568 = vadd.f32 0.0, %v3567
      %v3569 = vpop.f32.mrf.mxu0
      %3570 = vmatprep.mubr.bf16.mxu0 0
      %3571 = vmatmul.mubr.bf16.gmra.mxu0 %v1432
      %v3572 = vpop.f32.mrf.mxu0
      %v3573 = vadd.f32 0.0, %v3572
      %v3574 = vpop.f32.mrf.mxu0
      %v3575 = vpop.f32.mrf.mxu0
      %v3576 = vadd.f32 0.0, %v3575
      %v3577 = vpop.f32.mrf.mxu0
      %3578 = vmatprep.mubr.bf16.mxu0 0
      %3579 = vmatmul.mubr.bf16.gmra.mxu0 %v1435
      %v3580 = vpop.f32.mrf.mxu0
      %v3581 = vadd.f32 0.0, %v3580
      %v3582 = vpop.f32.mrf.mxu0
      %v3583 = vpop.f32.mrf.mxu0
      %v3584 = vadd.f32 0.0, %v3583
      %v3585 = vpop.f32.mrf.mxu0
      %3586 = vmatprep.mubr.bf16.mxu0 0
      %3587 = vmatmul.mubr.bf16.gmra.mxu0 %v1438
      %v3588 = vpop.f32.mrf.mxu0
      %v3589 = vadd.f32 0.0, %v3588
      %v3590 = vpop.f32.mrf.mxu0
      %v3591 = vpop.f32.mrf.mxu0
      %v3592 = vadd.f32 0.0, %v3591
      %v3593 = vpop.f32.mrf.mxu0
      %3594 = vmatprep.mubr.bf16.mxu0 0
      %3595 = vmatmul.mubr.bf16.gmra.mxu0 %v1441
      %v3596 = vpop.f32.mrf.mxu0
      %v3597 = vadd.f32 0.0, %v3596
      %v3598 = vpop.f32.mrf.mxu0
      %v3599 = vpop.f32.mrf.mxu0
      %v3600 = vadd.f32 0.0, %v3599
      %v3601 = vpop.f32.mrf.mxu0
      %3602 = vmatprep.mubr.bf16.mxu0 0
      %3603 = vmatmul.mubr.bf16.gmra.mxu0 %v1613
      %v3604 = vpop.f32.mrf.mxu0
      %v3605 = vadd.f32 0.0, %v3604
      %v3606 = vpop.f32.mrf.mxu0
      %v3607 = vpop.f32.mrf.mxu0
      %v3608 = vadd.f32 0.0, %v3607
      %v3609 = vpop.f32.mrf.mxu0
      %3610 = vmatprep.mubr.bf16.mxu0 0
      %3611 = vmatmul.mubr.bf16.gmra.mxu0 %v3453
      %v3612 = vpop.f32.mrf.mxu0
      %v3613 = vadd.f32 0.0, %v3612
      %v3614 = vpop.f32.mrf.mxu0
      %v3615 = vpop.f32.mrf.mxu0
      %v3616 = vadd.f32 0.0, %v3615
      %v3617 = vpop.f32.mrf.mxu0
      %3618 = vdwg.mxu0
      %v3619 = vadd.f32 %v3321, %v3493
      %v3620 = vadd.f32 %v3324, %v3496
      %v3621 = vadd.f32 %v3329, %v3501
      %v3622 = vadd.f32 %v3332, %v3504
      %v3623 = vadd.f32 %v3337, %v3509
      %v3624 = vadd.f32 %v3340, %v3512
      %v3625 = vadd.f32 %v3345, %v3517
      %v3626 = vadd.f32 %v3348, %v3520
      %v3627 = vadd.f32 %v3353, %v3525
      %v3628 = vadd.f32 %v3356, %v3528
      %v3629 = vadd.f32 %v3361, %v3533
      %v3630 = vadd.f32 %v3364, %v3536
      %v3631 = vadd.f32 %v3369, %v3541
      %v3632 = vadd.f32 %v3372, %v3544
      %v3633 = vadd.f32 %v3377, %v3549
      %v3634 = vadd.f32 %v3380, %v3552
      %v3635 = vadd.f32 %v3385, %v3557
      %v3636 = vadd.f32 %v3388, %v3560
      %v3637 = vadd.f32 %v3393, %v3565
      %v3638 = vadd.f32 %v3396, %v3568
      %v3639 = vadd.f32 %v3401, %v3573
      %v3640 = vadd.f32 %v3404, %v3576
      %v3641 = vadd.f32 %v3409, %v3581
      %v3642 = vadd.f32 %v3412, %v3584
      %v3643 = vadd.f32 %v3417, %v3589
      %v3644 = vadd.f32 %v3420, %v3592
      %v3645 = vadd.f32 %v3425, %v3597
      %v3646 = vadd.f32 %v3428, %v3600
      %v3647 = vadd.f32 %v3433, %v3605
      %v3648 = vadd.f32 %v3436, %v3608
      %v3649 = vadd.f32 %v3441, %v3613
      %v3650 = vadd.f32 %v3444, %v3616
      %s3651 = scalar_lea.vmem %s386, 22
      %v3652 = vld [vmem:[%s3651] sm:$0x3]
      %v3653 = vunpack.c.l.b16 %v886
      %v3654 = vunpack.c.l.b16 %v896
      %v3655 = vpack.c.b16 %v3654, %v3653
      %v3657 = vsel %vm1133, %v3655, 0
      %v3660 = vsel %vm1182, %v3652, 0
      %3662 = vmatprep.subr.bf16.mxu0 0
      %3663 = vmatpush1.bf16.msra.mxu0 0
      %3664 = vmatprep.subr.bf16.mxu0 0
      %3665 = vmatpush1.bf16.msra.mxu0 0
      %3666 = vmatprep.subr.bf16.mxu0 0
      %3667 = vmatpush1.bf16.msra.mxu0 0
      %3668 = vmatprep.subr.bf16.mxu0 0
      %3669 = vmatpush1.bf16.msra.mxu0 0
      %3670 = vmatprep.subr.bf16.mxu0 0
      %3671 = vmatpush1.bf16.msra.mxu0 0
      %3672 = vmatprep.subr.bf16.mxu0 0
      %3673 = vmatpush1.bf16.msra.mxu0 0
      %3674 = vmatprep.subr.bf16.mxu0 0
      %3675 = vmatpush1.bf16.msra.mxu0 0
      %3676 = vmatprep.subr.bf16.mxu0 0
      %3677 = vmatpush1.bf16.msra.mxu0 %v3660
      %3678 = vmatprep.subr.bf16.mxu0 0
      %3679 = vmatpush2.bf16.msra.mxu0 0
      %3680 = vmatprep.subr.bf16.mxu0 0
      %3681 = vmatpush2.bf16.msra.mxu0 0
      %3682 = vmatprep.subr.bf16.mxu0 0
      %3683 = vmatpush2.bf16.msra.mxu0 0
      %3684 = vmatprep.subr.bf16.mxu0 0
      %3685 = vmatpush2.bf16.msra.mxu0 0
      %3686 = vmatprep.subr.bf16.mxu0 0
      %3687 = vmatpush2.bf16.msra.mxu0 0
      %3688 = vmatprep.subr.bf16.mxu0 0
      %3689 = vmatpush2.bf16.msra.mxu0 0
      %3690 = vmatprep.subr.bf16.mxu0 0
      %3691 = vmatpush2.bf16.msra.mxu0 0
      %3692 = vmatprep.subr.bf16.mxu0 0
      %3693 = vmatpush2.bf16.msra.mxu0 0
      %3694 = vmatprep.mubr.bf16.mxu0 0
      %3695 = vmatmul.mubr.bf16.gmra.mxu0 %v1141
      %v3696 = vpop.f32.mrf.mxu0
      %v3697 = vadd.f32 0.0, %v3696
      %v3698 = vpop.f32.mrf.mxu0
      %v3699 = vpop.f32.mrf.mxu0
      %v3700 = vadd.f32 0.0, %v3699
      %v3701 = vpop.f32.mrf.mxu0
      %3702 = vmatprep.mubr.bf16.mxu0 0
      %3703 = vmatmul.mubr.bf16.gmra.mxu0 %v1144
      %v3704 = vpop.f32.mrf.mxu0
      %v3705 = vadd.f32 0.0, %v3704
      %v3706 = vpop.f32.mrf.mxu0
      %v3707 = vpop.f32.mrf.mxu0
      %v3708 = vadd.f32 0.0, %v3707
      %v3709 = vpop.f32.mrf.mxu0
      %3710 = vmatprep.mubr.bf16.mxu0 0
      %3711 = vmatmul.mubr.bf16.gmra.mxu0 %v1147
      %v3712 = vpop.f32.mrf.mxu0
      %v3713 = vadd.f32 0.0, %v3712
      %v3714 = vpop.f32.mrf.mxu0
      %v3715 = vpop.f32.mrf.mxu0
      %v3716 = vadd.f32 0.0, %v3715
      %v3717 = vpop.f32.mrf.mxu0
      %3718 = vmatprep.mubr.bf16.mxu0 0
      %3719 = vmatmul.mubr.bf16.gmra.mxu0 %v1150
      %v3720 = vpop.f32.mrf.mxu0
      %v3721 = vadd.f32 0.0, %v3720
      %v3722 = vpop.f32.mrf.mxu0
      %v3723 = vpop.f32.mrf.mxu0
      %v3724 = vadd.f32 0.0, %v3723
      %v3725 = vpop.f32.mrf.mxu0
      %3726 = vmatprep.mubr.bf16.mxu0 0
      %3727 = vmatmul.mubr.bf16.gmra.mxu0 %v1153
      %v3728 = vpop.f32.mrf.mxu0
      %v3729 = vadd.f32 0.0, %v3728
      %v3730 = vpop.f32.mrf.mxu0
      %v3731 = vpop.f32.mrf.mxu0
      %v3732 = vadd.f32 0.0, %v3731
      %v3733 = vpop.f32.mrf.mxu0
      %3734 = vmatprep.mubr.bf16.mxu0 0
      %3735 = vmatmul.mubr.bf16.gmra.mxu0 %v1156
      %v3736 = vpop.f32.mrf.mxu0
      %v3737 = vadd.f32 0.0, %v3736
      %v3738 = vpop.f32.mrf.mxu0
      %v3739 = vpop.f32.mrf.mxu0
      %v3740 = vadd.f32 0.0, %v3739
      %v3741 = vpop.f32.mrf.mxu0
      %3742 = vmatprep.mubr.bf16.mxu0 0
      %3743 = vmatmul.mubr.bf16.gmra.mxu0 %v1159
      %v3744 = vpop.f32.mrf.mxu0
      %v3745 = vadd.f32 0.0, %v3744
      %v3746 = vpop.f32.mrf.mxu0
      %v3747 = vpop.f32.mrf.mxu0
      %v3748 = vadd.f32 0.0, %v3747
      %v3749 = vpop.f32.mrf.mxu0
      %3750 = vmatprep.mubr.bf16.mxu0 0
      %3751 = vmatmul.mubr.bf16.gmra.mxu0 %v1162
      %v3752 = vpop.f32.mrf.mxu0
      %v3753 = vadd.f32 0.0, %v3752
      %v3754 = vpop.f32.mrf.mxu0
      %v3755 = vpop.f32.mrf.mxu0
      %v3756 = vadd.f32 0.0, %v3755
      %v3757 = vpop.f32.mrf.mxu0
      %3758 = vmatprep.mubr.bf16.mxu0 0
      %3759 = vmatmul.mubr.bf16.gmra.mxu0 %v1165
      %v3760 = vpop.f32.mrf.mxu0
      %v3761 = vadd.f32 0.0, %v3760
      %v3762 = vpop.f32.mrf.mxu0
      %v3763 = vpop.f32.mrf.mxu0
      %v3764 = vadd.f32 0.0, %v3763
      %v3765 = vpop.f32.mrf.mxu0
      %3766 = vmatprep.mubr.bf16.mxu0 0
      %3767 = vmatmul.mubr.bf16.gmra.mxu0 %v1168
      %v3768 = vpop.f32.mrf.mxu0
      %v3769 = vadd.f32 0.0, %v3768
      %v3770 = vpop.f32.mrf.mxu0
      %v3771 = vpop.f32.mrf.mxu0
      %v3772 = vadd.f32 0.0, %v3771
      %v3773 = vpop.f32.mrf.mxu0
      %3774 = vmatprep.mubr.bf16.mxu0 0
      %3775 = vmatmul.mubr.bf16.gmra.mxu0 %v1171
      %v3776 = vpop.f32.mrf.mxu0
      %v3777 = vadd.f32 0.0, %v3776
      %v3778 = vpop.f32.mrf.mxu0
      %v3779 = vpop.f32.mrf.mxu0
      %v3780 = vadd.f32 0.0, %v3779
      %v3781 = vpop.f32.mrf.mxu0
      %3782 = vmatprep.mubr.bf16.mxu0 0
      %3783 = vmatmul.mubr.bf16.gmra.mxu0 %v1174
      %v3784 = vpop.f32.mrf.mxu0
      %v3785 = vadd.f32 0.0, %v3784
      %v3786 = vpop.f32.mrf.mxu0
      %v3787 = vpop.f32.mrf.mxu0
      %v3788 = vadd.f32 0.0, %v3787
      %v3789 = vpop.f32.mrf.mxu0
      %3790 = vmatprep.mubr.bf16.mxu0 0
      %3791 = vmatmul.mubr.bf16.gmra.mxu0 %v1177
      %v3792 = vpop.f32.mrf.mxu0
      %v3793 = vadd.f32 0.0, %v3792
      %v3794 = vpop.f32.mrf.mxu0
      %v3795 = vpop.f32.mrf.mxu0
      %v3796 = vadd.f32 0.0, %v3795
      %v3797 = vpop.f32.mrf.mxu0
      %3798 = vmatprep.mubr.bf16.mxu0 0
      %3799 = vmatmul.mubr.bf16.gmra.mxu0 %v1180
      %v3800 = vpop.f32.mrf.mxu0
      %v3801 = vadd.f32 0.0, %v3800
      %v3802 = vpop.f32.mrf.mxu0
      %v3803 = vpop.f32.mrf.mxu0
      %v3804 = vadd.f32 0.0, %v3803
      %v3805 = vpop.f32.mrf.mxu0
      %3806 = vmatprep.mubr.bf16.mxu0 0
      %3807 = vmatmul.mubr.bf16.gmra.mxu0 %v1817
      %v3808 = vpop.f32.mrf.mxu0
      %v3809 = vadd.f32 0.0, %v3808
      %v3810 = vpop.f32.mrf.mxu0
      %v3811 = vpop.f32.mrf.mxu0
      %v3812 = vadd.f32 0.0, %v3811
      %v3813 = vpop.f32.mrf.mxu0
      %3814 = vmatprep.mubr.bf16.mxu0 0
      %3815 = vmatmul.mubr.bf16.gmra.mxu0 %v3657
      %v3816 = vpop.f32.mrf.mxu0
      %v3817 = vadd.f32 0.0, %v3816
      %v3818 = vpop.f32.mrf.mxu0
      %v3819 = vpop.f32.mrf.mxu0
      %v3820 = vadd.f32 0.0, %v3819
      %v3821 = vpop.f32.mrf.mxu0
      %3822 = vdwg.mxu0
      %v3823 = vadd.f32 %v3619, %v3697
      %v3824 = vadd.f32 %v3620, %v3700
      %v3825 = vadd.f32 %v3621, %v3705
      %v3826 = vadd.f32 %v3622, %v3708
      %v3827 = vadd.f32 %v3623, %v3713
      %v3828 = vadd.f32 %v3624, %v3716
      %v3829 = vadd.f32 %v3625, %v3721
      %v3830 = vadd.f32 %v3626, %v3724
      %v3831 = vadd.f32 %v3627, %v3729
      %v3832 = vadd.f32 %v3628, %v3732
      %v3833 = vadd.f32 %v3629, %v3737
      %v3834 = vadd.f32 %v3630, %v3740
      %v3835 = vadd.f32 %v3631, %v3745
      %v3836 = vadd.f32 %v3632, %v3748
      %v3837 = vadd.f32 %v3633, %v3753
      %v3838 = vadd.f32 %v3634, %v3756
      %v3839 = vadd.f32 %v3635, %v3761
      %v3840 = vadd.f32 %v3636, %v3764
      %v3841 = vadd.f32 %v3637, %v3769
      %v3842 = vadd.f32 %v3638, %v3772
      %v3843 = vadd.f32 %v3639, %v3777
      %v3844 = vadd.f32 %v3640, %v3780
      %v3845 = vadd.f32 %v3641, %v3785
      %v3846 = vadd.f32 %v3642, %v3788
      %v3847 = vadd.f32 %v3643, %v3793
      %v3848 = vadd.f32 %v3644, %v3796
      %v3849 = vadd.f32 %v3645, %v3801
      %v3850 = vadd.f32 %v3646, %v3804
      %v3851 = vadd.f32 %v3647, %v3809
      %v3852 = vadd.f32 %v3648, %v3812
      %v3853 = vadd.f32 %v3649, %v3817
      %v3854 = vadd.f32 %v3650, %v3820
      %v3855 = vmul.f32 %v3823, %v2019
      %v3856 = vmul.f32 %v3824, %v2019
      %v3857 = vmul.f32 %v3825, %v2019
      %v3858 = vmul.f32 %v3826, %v2019
      %v3859 = vmul.f32 %v3827, %v2019
      %v3860 = vmul.f32 %v3828, %v2019
      %v3861 = vmul.f32 %v3829, %v2019
      %v3862 = vmul.f32 %v3830, %v2019
      %v3863 = vmul.f32 %v3831, %v2019
      %v3864 = vmul.f32 %v3832, %v2019
      %v3865 = vmul.f32 %v3833, %v2019
      %v3866 = vmul.f32 %v3834, %v2019
      %v3867 = vmul.f32 %v3835, %v2019
      %v3868 = vmul.f32 %v3836, %v2019
      %v3869 = vmul.f32 %v3837, %v2019
      %v3870 = vmul.f32 %v3838, %v2019
      %v3871 = vmul.f32 %v3839, %v2019
      %v3872 = vmul.f32 %v3840, %v2019
      %v3873 = vmul.f32 %v3841, %v2019
      %v3874 = vmul.f32 %v3842, %v2019
      %v3875 = vmul.f32 %v3843, %v2019
      %v3876 = vmul.f32 %v3844, %v2019
      %v3877 = vmul.f32 %v3845, %v2019
      %v3878 = vmul.f32 %v3846, %v2019
      %v3879 = vmul.f32 %v3847, %v2019
      %v3880 = vmul.f32 %v3848, %v2019
      %v3881 = vmul.f32 %v3849, %v2019
      %v3882 = vmul.f32 %v3850, %v2019
      %v3883 = vmul.f32 %v3851, %v2019
      %v3884 = vmul.f32 %v3852, %v2019
      %v3885 = vmul.f32 %v3853, %v2019
      %v3886 = vmul.f32 %v3854, %v2019
      %v3887 = vadd.f32 %v3855, %v2057
      %v3888 = vadd.f32 %v3856, %v2057
      %v3889 = vadd.f32 %v3857, %v2057
      %v3890 = vadd.f32 %v3858, %v2057
      %v3891 = vadd.f32 %v3859, %v2057
      %v3892 = vadd.f32 %v3860, %v2057
      %v3893 = vadd.f32 %v3861, %v2057
      %v3894 = vadd.f32 %v3862, %v2057
      %v3895 = vadd.f32 %v3863, %v2057
      %v3896 = vadd.f32 %v3864, %v2057
      %v3897 = vadd.f32 %v3865, %v2057
      %v3898 = vadd.f32 %v3866, %v2057
      %v3899 = vadd.f32 %v3867, %v2057
      %v3900 = vadd.f32 %v3868, %v2057
      %v3901 = vadd.f32 %v3869, %v2057
      %v3902 = vadd.f32 %v3870, %v2057
      %v3903 = vadd.f32 %v3871, %v2057
      %v3904 = vadd.f32 %v3872, %v2057
      %v3905 = vadd.f32 %v3873, %v2057
      %v3906 = vadd.f32 %v3874, %v2057
      %v3907 = vadd.f32 %v3875, %v2057
      %v3908 = vadd.f32 %v3876, %v2057
      %v3909 = vadd.f32 %v3877, %v2057
      %v3910 = vadd.f32 %v3878, %v2057
      %v3911 = vadd.f32 %v3879, %v2057
      %v3912 = vadd.f32 %v3880, %v2057
      %v3913 = vadd.f32 %v3881, %v2057
      %v3914 = vadd.f32 %v3882, %v2057
      %v3915 = vadd.f32 %v3883, %v2057
      %v3916 = vadd.f32 %v3884, %v2057
      %v3917 = vadd.f32 %v3885, %v2057
      %v3918 = vadd.f32 %v3886, %v2057
      %v3919 = vmax.f32 %v3887, 0.0
      %v3920 = vmax.f32 %v3888, 0.0
      %v3921 = vmax.f32 %v3889, 0.0
      %v3922 = vmax.f32 %v3890, 0.0
      %v3923 = vmax.f32 %v3891, 0.0
      %v3924 = vmax.f32 %v3892, 0.0
      %v3925 = vmax.f32 %v3893, 0.0
      %v3926 = vmax.f32 %v3894, 0.0
      %v3927 = vmax.f32 %v3895, 0.0
      %v3928 = vmax.f32 %v3896, 0.0
      %v3929 = vmax.f32 %v3897, 0.0
      %v3930 = vmax.f32 %v3898, 0.0
      %v3931 = vmax.f32 %v3899, 0.0
      %v3932 = vmax.f32 %v3900, 0.0
      %v3933 = vmax.f32 %v3901, 0.0
      %v3934 = vmax.f32 %v3902, 0.0
      %v3935 = vmax.f32 %v3903, 0.0
      %v3936 = vmax.f32 %v3904, 0.0
      %v3937 = vmax.f32 %v3905, 0.0
      %v3938 = vmax.f32 %v3906, 0.0
      %v3939 = vmax.f32 %v3907, 0.0
      %v3940 = vmax.f32 %v3908, 0.0
      %v3941 = vmax.f32 %v3909, 0.0
      %v3942 = vmax.f32 %v3910, 0.0
      %v3943 = vmax.f32 %v3911, 0.0
      %v3944 = vmax.f32 %v3912, 0.0
      %v3945 = vmax.f32 %v3913, 0.0
      %v3946 = vmax.f32 %v3914, 0.0
      %v3947 = vmax.f32 %v3915, 0.0
      %v3948 = vmax.f32 %v3916, 0.0
      %v3949 = vmax.f32 %v3917, 0.0
      %v3950 = vmax.f32 %v3918, 0.0
      %s3951 = scalar_lea.vmem %s405, 512
      %3952 = vst.msk [vmem:[%s3951] sm:$0xff] %vm2123, %v3919
      %3953 = vst.msk [vmem:[%s3951 + $0x8] sm:$0xff] %vm2123, %v3920
      %3954 = vst.msk [vmem:[%s3951 + $0x10] sm:$0xff] %vm2123, %v3921
      %3955 = vst.msk [vmem:[%s3951 + $0x18] sm:$0xff] %vm2123, %v3922
      %3956 = vst.msk [vmem:[%s3951 + $0x20] sm:$0xff] %vm2123, %v3923
      %3957 = vst.msk [vmem:[%s3951 + $0x28] sm:$0xff] %vm2123, %v3924
      %3958 = vst.msk [vmem:[%s3951 + $0x30] sm:$0xff] %vm2123, %v3925
      %3959 = vst.msk [vmem:[%s3951 + $0x38] sm:$0xff] %vm2123, %v3926
      %3960 = vst.msk [vmem:[%s3951 + $0x40] sm:$0xff] %vm2123, %v3927
      %3961 = vst.msk [vmem:[%s3951 + $0x48] sm:$0xff] %vm2123, %v3928
      %3962 = vst.msk [vmem:[%s3951 + $0x50] sm:$0xff] %vm2123, %v3929
      %3963 = vst.msk [vmem:[%s3951 + $0x58] sm:$0xff] %vm2123, %v3930
      %3964 = vst.msk [vmem:[%s3951 + $0x60] sm:$0xff] %vm2123, %v3931
      %3965 = vst.msk [vmem:[%s3951 + $0x68] sm:$0xff] %vm2123, %v3932
      %3966 = vst.msk [vmem:[%s3951 + $0x70] sm:$0xff] %vm2123, %v3933
      %3967 = vst.msk [vmem:[%s3951 + $0x78] sm:$0xff] %vm2123, %v3934
      %3968 = vst.msk [vmem:[%s3951 + $0x80] sm:$0xff] %vm2123, %v3935
      %3969 = vst.msk [vmem:[%s3951 + $0x88] sm:$0xff] %vm2123, %v3936
      %3970 = vst.msk [vmem:[%s3951 + $0x90] sm:$0xff] %vm2123, %v3937
      %3971 = vst.msk [vmem:[%s3951 + $0x98] sm:$0xff] %vm2123, %v3938
      %3972 = vst.msk [vmem:[%s3951 + $0xa0] sm:$0xff] %vm2123, %v3939
      %3973 = vst.msk [vmem:[%s3951 + $0xa8] sm:$0xff] %vm2123, %v3940
      %3974 = vst.msk [vmem:[%s3951 + $0xb0] sm:$0xff] %vm2123, %v3941
      %3975 = vst.msk [vmem:[%s3951 + $0xb8] sm:$0xff] %vm2123, %v3942
      %3976 = vst.msk [vmem:[%s3951 + $0xc0] sm:$0xff] %vm2123, %v3943
      %3977 = vst.msk [vmem:[%s3951 + $0xc8] sm:$0xff] %vm2123, %v3944
      %3978 = vst.msk [vmem:[%s3951 + $0xd0] sm:$0xff] %vm2123, %v3945
      %3979 = vst.msk [vmem:[%s3951 + $0xd8] sm:$0xff] %vm2123, %v3946
      %3980 = vst.msk [vmem:[%s3951 + $0xe0] sm:$0xff] %vm2123, %v3947
      %3981 = vst.msk [vmem:[%s3951 + $0xe8] sm:$0xff] %vm2123, %v3948
      %3982 = vst.msk [vmem:[%s3951 + $0xf0] sm:$0xff] %vm2123, %v3949
      %3983 = vst.msk [vmem:[%s3951 + $0xf8] sm:$0xff] %vm2123, %v3950
      %s3984 = scalar_lea.vmem %s386, 24
      %v3985 = vld [vmem:[%s3984] sm:$0x3]
      %s3986 = scalar_lea.vmem %s386, 26
      %v3987 = vld [vmem:[%s3986] sm:$0x3]
      %v3989 = vsel %vm1182, %v3987, 0
      %3991 = vmatprep.subr.bf16.mxu0 0
      %3992 = vmatpush1.bf16.msra.mxu0 0
      %3993 = vmatprep.subr.bf16.mxu0 0
      %3994 = vmatpush1.bf16.msra.mxu0 0
      %3995 = vmatprep.subr.bf16.mxu0 0
      %3996 = vmatpush1.bf16.msra.mxu0 0
      %3997 = vmatprep.subr.bf16.mxu0 0
      %3998 = vmatpush1.bf16.msra.mxu0 0
      %3999 = vmatprep.subr.bf16.mxu0 0
      %4000 = vmatpush1.bf16.msra.mxu0 0
      %4001 = vmatprep.subr.bf16.mxu0 0
      %4002 = vmatpush1.bf16.msra.mxu0 0
      %4003 = vmatprep.subr.bf16.mxu0 0
      %4004 = vmatpush1.bf16.msra.mxu0 0
      %4005 = vmatprep.subr.bf16.mxu0 0
      %4006 = vmatpush1.bf16.msra.mxu0 %v3989
      %4007 = vmatprep.subr.bf16.mxu0 0
      %4008 = vmatpush2.bf16.msra.mxu0 0
      %4009 = vmatprep.subr.bf16.mxu0 0
      %4010 = vmatpush2.bf16.msra.mxu0 0
      %4011 = vmatprep.subr.bf16.mxu0 0
      %4012 = vmatpush2.bf16.msra.mxu0 0
      %4013 = vmatprep.subr.bf16.mxu0 0
      %4014 = vmatpush2.bf16.msra.mxu0 0
      %4015 = vmatprep.subr.bf16.mxu0 0
      %4016 = vmatpush2.bf16.msra.mxu0 0
      %4017 = vmatprep.subr.bf16.mxu0 0
      %4018 = vmatpush2.bf16.msra.mxu0 0
      %4019 = vmatprep.subr.bf16.mxu0 0
      %4020 = vmatpush2.bf16.msra.mxu0 0
      %4021 = vmatprep.subr.bf16.mxu0 0
      %4022 = vmatpush2.bf16.msra.mxu0 0
      %4023 = vmatprep.mubr.bf16.mxu0 0
      %4024 = vmatmul.mubr.bf16.gmra.mxu0 %v2212
      %v4025 = vpop.f32.mrf.mxu0
      %v4026 = vadd.f32 0.0, %v4025
      %v4027 = vpop.f32.mrf.mxu0
      %v4028 = vpop.f32.mrf.mxu0
      %v4029 = vadd.f32 0.0, %v4028
      %v4030 = vpop.f32.mrf.mxu0
      %4031 = vmatprep.mubr.bf16.mxu0 0
      %4032 = vmatmul.mubr.bf16.gmra.mxu0 %v2215
      %v4033 = vpop.f32.mrf.mxu0
      %v4034 = vadd.f32 0.0, %v4033
      %v4035 = vpop.f32.mrf.mxu0
      %v4036 = vpop.f32.mrf.mxu0
      %v4037 = vadd.f32 0.0, %v4036
      %v4038 = vpop.f32.mrf.mxu0
      %4039 = vmatprep.mubr.bf16.mxu0 0
      %4040 = vmatmul.mubr.bf16.gmra.mxu0 %v2218
      %v4041 = vpop.f32.mrf.mxu0
      %v4042 = vadd.f32 0.0, %v4041
      %v4043 = vpop.f32.mrf.mxu0
      %v4044 = vpop.f32.mrf.mxu0
      %v4045 = vadd.f32 0.0, %v4044
      %v4046 = vpop.f32.mrf.mxu0
      %4047 = vmatprep.mubr.bf16.mxu0 0
      %4048 = vmatmul.mubr.bf16.gmra.mxu0 %v2221
      %v4049 = vpop.f32.mrf.mxu0
      %v4050 = vadd.f32 0.0, %v4049
      %v4051 = vpop.f32.mrf.mxu0
      %v4052 = vpop.f32.mrf.mxu0
      %v4053 = vadd.f32 0.0, %v4052
      %v4054 = vpop.f32.mrf.mxu0
      %4055 = vmatprep.mubr.bf16.mxu0 0
      %4056 = vmatmul.mubr.bf16.gmra.mxu0 %v2224
      %v4057 = vpop.f32.mrf.mxu0
      %v4058 = vadd.f32 0.0, %v4057
      %v4059 = vpop.f32.mrf.mxu0
      %v4060 = vpop.f32.mrf.mxu0
      %v4061 = vadd.f32 0.0, %v4060
      %v4062 = vpop.f32.mrf.mxu0
      %4063 = vmatprep.mubr.bf16.mxu0 0
      %4064 = vmatmul.mubr.bf16.gmra.mxu0 %v2227
      %v4065 = vpop.f32.mrf.mxu0
      %v4066 = vadd.f32 0.0, %v4065
      %v4067 = vpop.f32.mrf.mxu0
      %v4068 = vpop.f32.mrf.mxu0
      %v4069 = vadd.f32 0.0, %v4068
      %v4070 = vpop.f32.mrf.mxu0
      %4071 = vmatprep.mubr.bf16.mxu0 0
      %4072 = vmatmul.mubr.bf16.gmra.mxu0 %v2230
      %v4073 = vpop.f32.mrf.mxu0
      %v4074 = vadd.f32 0.0, %v4073
      %v4075 = vpop.f32.mrf.mxu0
      %v4076 = vpop.f32.mrf.mxu0
      %v4077 = vadd.f32 0.0, %v4076
      %v4078 = vpop.f32.mrf.mxu0
      %4079 = vmatprep.mubr.bf16.mxu0 0
      %4080 = vmatmul.mubr.bf16.gmra.mxu0 %v2233
      %v4081 = vpop.f32.mrf.mxu0
      %v4082 = vadd.f32 0.0, %v4081
      %v4083 = vpop.f32.mrf.mxu0
      %v4084 = vpop.f32.mrf.mxu0
      %v4085 = vadd.f32 0.0, %v4084
      %v4086 = vpop.f32.mrf.mxu0
      %4087 = vmatprep.mubr.bf16.mxu0 0
      %4088 = vmatmul.mubr.bf16.gmra.mxu0 %v2236
      %v4089 = vpop.f32.mrf.mxu0
      %v4090 = vadd.f32 0.0, %v4089
      %v4091 = vpop.f32.mrf.mxu0
      %v4092 = vpop.f32.mrf.mxu0
      %v4093 = vadd.f32 0.0, %v4092
      %v4094 = vpop.f32.mrf.mxu0
      %4095 = vmatprep.mubr.bf16.mxu0 0
      %4096 = vmatmul.mubr.bf16.gmra.mxu0 %v2239
      %v4097 = vpop.f32.mrf.mxu0
      %v4098 = vadd.f32 0.0, %v4097
      %v4099 = vpop.f32.mrf.mxu0
      %v4100 = vpop.f32.mrf.mxu0
      %v4101 = vadd.f32 0.0, %v4100
      %v4102 = vpop.f32.mrf.mxu0
      %4103 = vmatprep.mubr.bf16.mxu0 0
      %4104 = vmatmul.mubr.bf16.gmra.mxu0 %v2242
      %v4105 = vpop.f32.mrf.mxu0
      %v4106 = vadd.f32 0.0, %v4105
      %v4107 = vpop.f32.mrf.mxu0
      %v4108 = vpop.f32.mrf.mxu0
      %v4109 = vadd.f32 0.0, %v4108
      %v4110 = vpop.f32.mrf.mxu0
      %4111 = vmatprep.mubr.bf16.mxu0 0
      %4112 = vmatmul.mubr.bf16.gmra.mxu0 %v2245
      %v4113 = vpop.f32.mrf.mxu0
      %v4114 = vadd.f32 0.0, %v4113
      %v4115 = vpop.f32.mrf.mxu0
      %v4116 = vpop.f32.mrf.mxu0
      %v4117 = vadd.f32 0.0, %v4116
      %v4118 = vpop.f32.mrf.mxu0
      %4119 = vmatprep.mubr.bf16.mxu0 0
      %4120 = vmatmul.mubr.bf16.gmra.mxu0 %v2248
      %v4121 = vpop.f32.mrf.mxu0
      %v4122 = vadd.f32 0.0, %v4121
      %v4123 = vpop.f32.mrf.mxu0
      %v4124 = vpop.f32.mrf.mxu0
      %v4125 = vadd.f32 0.0, %v4124
      %v4126 = vpop.f32.mrf.mxu0
      %4127 = vmatprep.mubr.bf16.mxu0 0
      %4128 = vmatmul.mubr.bf16.gmra.mxu0 %v2251
      %v4129 = vpop.f32.mrf.mxu0
      %v4130 = vadd.f32 0.0, %v4129
      %v4131 = vpop.f32.mrf.mxu0
      %v4132 = vpop.f32.mrf.mxu0
      %v4133 = vadd.f32 0.0, %v4132
      %v4134 = vpop.f32.mrf.mxu0
      %4135 = vmatprep.mubr.bf16.mxu0 0
      %4136 = vmatmul.mubr.bf16.gmra.mxu0 %v2254
      %v4137 = vpop.f32.mrf.mxu0
      %v4138 = vadd.f32 0.0, %v4137
      %v4139 = vpop.f32.mrf.mxu0
      %v4140 = vpop.f32.mrf.mxu0
      %v4141 = vadd.f32 0.0, %v4140
      %v4142 = vpop.f32.mrf.mxu0
      %4143 = vmatprep.mubr.bf16.mxu0 0
      %4144 = vmatmul.mubr.bf16.gmra.mxu0 %v2788
      %v4145 = vpop.f32.mrf.mxu0
      %v4146 = vadd.f32 0.0, %v4145
      %v4147 = vpop.f32.mrf.mxu0
      %v4148 = vpop.f32.mrf.mxu0
      %v4149 = vadd.f32 0.0, %v4148
      %v4150 = vpop.f32.mrf.mxu0
      %4151 = vdwg.mxu0
      %v4153 = vsel %vm1182, %v3985, 0
      %4155 = vmatprep.subr.bf16.mxu0 0
      %4156 = vmatpush1.bf16.msra.mxu0 0
      %4157 = vmatprep.subr.bf16.mxu0 0
      %4158 = vmatpush1.bf16.msra.mxu0 0
      %4159 = vmatprep.subr.bf16.mxu0 0
      %4160 = vmatpush1.bf16.msra.mxu0 0
      %4161 = vmatprep.subr.bf16.mxu0 0
      %4162 = vmatpush1.bf16.msra.mxu0 0
      %4163 = vmatprep.subr.bf16.mxu0 0
      %4164 = vmatpush1.bf16.msra.mxu0 0
      %4165 = vmatprep.subr.bf16.mxu0 0
      %4166 = vmatpush1.bf16.msra.mxu0 0
      %4167 = vmatprep.subr.bf16.mxu0 0
      %4168 = vmatpush1.bf16.msra.mxu0 0
      %4169 = vmatprep.subr.bf16.mxu0 0
      %4170 = vmatpush1.bf16.msra.mxu0 %v4153
      %4171 = vmatprep.subr.bf16.mxu0 0
      %4172 = vmatpush2.bf16.msra.mxu0 0
      %4173 = vmatprep.subr.bf16.mxu0 0
      %4174 = vmatpush2.bf16.msra.mxu0 0
      %4175 = vmatprep.subr.bf16.mxu0 0
      %4176 = vmatpush2.bf16.msra.mxu0 0
      %4177 = vmatprep.subr.bf16.mxu0 0
      %4178 = vmatpush2.bf16.msra.mxu0 0
      %4179 = vmatprep.subr.bf16.mxu0 0
      %4180 = vmatpush2.bf16.msra.mxu0 0
      %4181 = vmatprep.subr.bf16.mxu0 0
      %4182 = vmatpush2.bf16.msra.mxu0 0
      %4183 = vmatprep.subr.bf16.mxu0 0
      %4184 = vmatpush2.bf16.msra.mxu0 0
      %4185 = vmatprep.subr.bf16.mxu0 0
      %4186 = vmatpush2.bf16.msra.mxu0 0
      %4187 = vmatprep.mubr.bf16.mxu0 0
      %4188 = vmatmul.mubr.bf16.gmra.mxu0 %v1138
      %v4189 = vpop.f32.mrf.mxu0
      %v4190 = vadd.f32 %v4026, %v4189
      %v4191 = vpop.f32.mrf.mxu0
      %v4192 = vpop.f32.mrf.mxu0
      %v4193 = vadd.f32 %v4029, %v4192
      %v4194 = vpop.f32.mrf.mxu0
      %4195 = vmatprep.mubr.bf16.mxu0 0
      %4196 = vmatmul.mubr.bf16.gmra.mxu0 %v1141
      %v4197 = vpop.f32.mrf.mxu0
      %v4198 = vadd.f32 %v4034, %v4197
      %v4199 = vpop.f32.mrf.mxu0
      %v4200 = vpop.f32.mrf.mxu0
      %v4201 = vadd.f32 %v4037, %v4200
      %v4202 = vpop.f32.mrf.mxu0
      %4203 = vmatprep.mubr.bf16.mxu0 0
      %4204 = vmatmul.mubr.bf16.gmra.mxu0 %v1144
      %v4205 = vpop.f32.mrf.mxu0
      %v4206 = vadd.f32 %v4042, %v4205
      %v4207 = vpop.f32.mrf.mxu0
      %v4208 = vpop.f32.mrf.mxu0
      %v4209 = vadd.f32 %v4045, %v4208
      %v4210 = vpop.f32.mrf.mxu0
      %4211 = vmatprep.mubr.bf16.mxu0 0
      %4212 = vmatmul.mubr.bf16.gmra.mxu0 %v1147
      %v4213 = vpop.f32.mrf.mxu0
      %v4214 = vadd.f32 %v4050, %v4213
      %v4215 = vpop.f32.mrf.mxu0
      %v4216 = vpop.f32.mrf.mxu0
      %v4217 = vadd.f32 %v4053, %v4216
      %v4218 = vpop.f32.mrf.mxu0
      %4219 = vmatprep.mubr.bf16.mxu0 0
      %4220 = vmatmul.mubr.bf16.gmra.mxu0 %v1150
      %v4221 = vpop.f32.mrf.mxu0
      %v4222 = vadd.f32 %v4058, %v4221
      %v4223 = vpop.f32.mrf.mxu0
      %v4224 = vpop.f32.mrf.mxu0
      %v4225 = vadd.f32 %v4061, %v4224
      %v4226 = vpop.f32.mrf.mxu0
      %4227 = vmatprep.mubr.bf16.mxu0 0
      %4228 = vmatmul.mubr.bf16.gmra.mxu0 %v1153
      %v4229 = vpop.f32.mrf.mxu0
      %v4230 = vadd.f32 %v4066, %v4229
      %v4231 = vpop.f32.mrf.mxu0
      %v4232 = vpop.f32.mrf.mxu0
      %v4233 = vadd.f32 %v4069, %v4232
      %v4234 = vpop.f32.mrf.mxu0
      %4235 = vmatprep.mubr.bf16.mxu0 0
      %4236 = vmatmul.mubr.bf16.gmra.mxu0 %v1156
      %v4237 = vpop.f32.mrf.mxu0
      %v4238 = vadd.f32 %v4074, %v4237
      %v4239 = vpop.f32.mrf.mxu0
      %v4240 = vpop.f32.mrf.mxu0
      %v4241 = vadd.f32 %v4077, %v4240
      %v4242 = vpop.f32.mrf.mxu0
      %4243 = vmatprep.mubr.bf16.mxu0 0
      %4244 = vmatmul.mubr.bf16.gmra.mxu0 %v1159
      %v4245 = vpop.f32.mrf.mxu0
      %v4246 = vadd.f32 %v4082, %v4245
      %v4247 = vpop.f32.mrf.mxu0
      %v4248 = vpop.f32.mrf.mxu0
      %v4249 = vadd.f32 %v4085, %v4248
      %v4250 = vpop.f32.mrf.mxu0
      %4251 = vmatprep.mubr.bf16.mxu0 0
      %4252 = vmatmul.mubr.bf16.gmra.mxu0 %v1162
      %v4253 = vpop.f32.mrf.mxu0
      %v4254 = vadd.f32 %v4090, %v4253
      %v4255 = vpop.f32.mrf.mxu0
      %v4256 = vpop.f32.mrf.mxu0
      %v4257 = vadd.f32 %v4093, %v4256
      %v4258 = vpop.f32.mrf.mxu0
      %4259 = vmatprep.mubr.bf16.mxu0 0
      %4260 = vmatmul.mubr.bf16.gmra.mxu0 %v1165
      %v4261 = vpop.f32.mrf.mxu0
      %v4262 = vadd.f32 %v4098, %v4261
      %v4263 = vpop.f32.mrf.mxu0
      %v4264 = vpop.f32.mrf.mxu0
      %v4265 = vadd.f32 %v4101, %v4264
      %v4266 = vpop.f32.mrf.mxu0
      %4267 = vmatprep.mubr.bf16.mxu0 0
      %4268 = vmatmul.mubr.bf16.gmra.mxu0 %v1168
      %v4269 = vpop.f32.mrf.mxu0
      %v4270 = vadd.f32 %v4106, %v4269
      %v4271 = vpop.f32.mrf.mxu0
      %v4272 = vpop.f32.mrf.mxu0
      %v4273 = vadd.f32 %v4109, %v4272
      %v4274 = vpop.f32.mrf.mxu0
      %4275 = vmatprep.mubr.bf16.mxu0 0
      %4276 = vmatmul.mubr.bf16.gmra.mxu0 %v1171
      %v4277 = vpop.f32.mrf.mxu0
      %v4278 = vadd.f32 %v4114, %v4277
      %v4279 = vpop.f32.mrf.mxu0
      %v4280 = vpop.f32.mrf.mxu0
      %v4281 = vadd.f32 %v4117, %v4280
      %v4282 = vpop.f32.mrf.mxu0
      %4283 = vmatprep.mubr.bf16.mxu0 0
      %4284 = vmatmul.mubr.bf16.gmra.mxu0 %v1174
      %v4285 = vpop.f32.mrf.mxu0
      %v4286 = vadd.f32 %v4122, %v4285
      %v4287 = vpop.f32.mrf.mxu0
      %v4288 = vpop.f32.mrf.mxu0
      %v4289 = vadd.f32 %v4125, %v4288
      %v4290 = vpop.f32.mrf.mxu0
      %4291 = vmatprep.mubr.bf16.mxu0 0
      %4292 = vmatmul.mubr.bf16.gmra.mxu0 %v1177
      %v4293 = vpop.f32.mrf.mxu0
      %v4294 = vadd.f32 %v4130, %v4293
      %v4295 = vpop.f32.mrf.mxu0
      %v4296 = vpop.f32.mrf.mxu0
      %v4297 = vadd.f32 %v4133, %v4296
      %v4298 = vpop.f32.mrf.mxu0
      %4299 = vmatprep.mubr.bf16.mxu0 0
      %4300 = vmatmul.mubr.bf16.gmra.mxu0 %v1180
      %v4301 = vpop.f32.mrf.mxu0
      %v4302 = vadd.f32 %v4138, %v4301
      %v4303 = vpop.f32.mrf.mxu0
      %v4304 = vpop.f32.mrf.mxu0
      %v4305 = vadd.f32 %v4141, %v4304
      %v4306 = vpop.f32.mrf.mxu0
      %4307 = vmatprep.mubr.bf16.mxu0 0
      %4308 = vmatmul.mubr.bf16.gmra.mxu0 %v1817
      %v4309 = vpop.f32.mrf.mxu0
      %v4310 = vadd.f32 %v4146, %v4309
      %v4311 = vpop.f32.mrf.mxu0
      %v4312 = vpop.f32.mrf.mxu0
      %v4313 = vadd.f32 %v4149, %v4312
      %v4314 = vpop.f32.mrf.mxu0
      %4315 = vdwg.mxu0
      %s4316 = scalar_lea.vmem %s386, 28
      %v4317 = vld [vmem:[%s4316] sm:$0x3]
      %v4319 = vsel %vm1182, %v4317, 0
      %4321 = vmatprep.subr.bf16.mxu0 0
      %4322 = vmatpush1.bf16.msra.mxu0 0
      %4323 = vmatprep.subr.bf16.mxu0 0
      %4324 = vmatpush1.bf16.msra.mxu0 0
      %4325 = vmatprep.subr.bf16.mxu0 0
      %4326 = vmatpush1.bf16.msra.mxu0 0
      %4327 = vmatprep.subr.bf16.mxu0 0
      %4328 = vmatpush1.bf16.msra.mxu0 0
      %4329 = vmatprep.subr.bf16.mxu0 0
      %4330 = vmatpush1.bf16.msra.mxu0 0
      %4331 = vmatprep.subr.bf16.mxu0 0
      %4332 = vmatpush1.bf16.msra.mxu0 0
      %4333 = vmatprep.subr.bf16.mxu0 0
      %4334 = vmatpush1.bf16.msra.mxu0 0
      %4335 = vmatprep.subr.bf16.mxu0 0
      %4336 = vmatpush1.bf16.msra.mxu0 %v4319
      %4337 = vmatprep.subr.bf16.mxu0 0
      %4338 = vmatpush2.bf16.msra.mxu0 0
      %4339 = vmatprep.subr.bf16.mxu0 0
      %4340 = vmatpush2.bf16.msra.mxu0 0
      %4341 = vmatprep.subr.bf16.mxu0 0
      %4342 = vmatpush2.bf16.msra.mxu0 0
      %4343 = vmatprep.subr.bf16.mxu0 0
      %4344 = vmatpush2.bf16.msra.mxu0 0
      %4345 = vmatprep.subr.bf16.mxu0 0
      %4346 = vmatpush2.bf16.msra.mxu0 0
      %4347 = vmatprep.subr.bf16.mxu0 0
      %4348 = vmatpush2.bf16.msra.mxu0 0
      %4349 = vmatprep.subr.bf16.mxu0 0
      %4350 = vmatpush2.bf16.msra.mxu0 0
      %4351 = vmatprep.subr.bf16.mxu0 0
      %4352 = vmatpush2.bf16.msra.mxu0 0
      %4353 = vmatprep.mubr.bf16.mxu0 0
      %4354 = vmatmul.mubr.bf16.gmra.mxu0 %v1141
      %v4355 = vpop.f32.mrf.mxu0
      %v4356 = vadd.f32 0.0, %v4355
      %v4357 = vpop.f32.mrf.mxu0
      %v4358 = vpop.f32.mrf.mxu0
      %v4359 = vadd.f32 0.0, %v4358
      %v4360 = vpop.f32.mrf.mxu0
      %4361 = vmatprep.mubr.bf16.mxu0 0
      %4362 = vmatmul.mubr.bf16.gmra.mxu0 %v1144
      %v4363 = vpop.f32.mrf.mxu0
      %v4364 = vadd.f32 0.0, %v4363
      %v4365 = vpop.f32.mrf.mxu0
      %v4366 = vpop.f32.mrf.mxu0
      %v4367 = vadd.f32 0.0, %v4366
      %v4368 = vpop.f32.mrf.mxu0
      %4369 = vmatprep.mubr.bf16.mxu0 0
      %4370 = vmatmul.mubr.bf16.gmra.mxu0 %v1147
      %v4371 = vpop.f32.mrf.mxu0
      %v4372 = vadd.f32 0.0, %v4371
      %v4373 = vpop.f32.mrf.mxu0
      %v4374 = vpop.f32.mrf.mxu0
      %v4375 = vadd.f32 0.0, %v4374
      %v4376 = vpop.f32.mrf.mxu0
      %4377 = vmatprep.mubr.bf16.mxu0 0
      %4378 = vmatmul.mubr.bf16.gmra.mxu0 %v1150
      %v4379 = vpop.f32.mrf.mxu0
      %v4380 = vadd.f32 0.0, %v4379
      %v4381 = vpop.f32.mrf.mxu0
      %v4382 = vpop.f32.mrf.mxu0
      %v4383 = vadd.f32 0.0, %v4382
      %v4384 = vpop.f32.mrf.mxu0
      %4385 = vmatprep.mubr.bf16.mxu0 0
      %4386 = vmatmul.mubr.bf16.gmra.mxu0 %v1153
      %v4387 = vpop.f32.mrf.mxu0
      %v4388 = vadd.f32 0.0, %v4387
      %v4389 = vpop.f32.mrf.mxu0
      %v4390 = vpop.f32.mrf.mxu0
      %v4391 = vadd.f32 0.0, %v4390
      %v4392 = vpop.f32.mrf.mxu0
      %4393 = vmatprep.mubr.bf16.mxu0 0
      %4394 = vmatmul.mubr.bf16.gmra.mxu0 %v1156
      %v4395 = vpop.f32.mrf.mxu0
      %v4396 = vadd.f32 0.0, %v4395
      %v4397 = vpop.f32.mrf.mxu0
      %v4398 = vpop.f32.mrf.mxu0
      %v4399 = vadd.f32 0.0, %v4398
      %v4400 = vpop.f32.mrf.mxu0
      %4401 = vmatprep.mubr.bf16.mxu0 0
      %4402 = vmatmul.mubr.bf16.gmra.mxu0 %v1159
      %v4403 = vpop.f32.mrf.mxu0
      %v4404 = vadd.f32 0.0, %v4403
      %v4405 = vpop.f32.mrf.mxu0
      %v4406 = vpop.f32.mrf.mxu0
      %v4407 = vadd.f32 0.0, %v4406
      %v4408 = vpop.f32.mrf.mxu0
      %4409 = vmatprep.mubr.bf16.mxu0 0
      %4410 = vmatmul.mubr.bf16.gmra.mxu0 %v1162
      %v4411 = vpop.f32.mrf.mxu0
      %v4412 = vadd.f32 0.0, %v4411
      %v4413 = vpop.f32.mrf.mxu0
      %v4414 = vpop.f32.mrf.mxu0
      %v4415 = vadd.f32 0.0, %v4414
      %v4416 = vpop.f32.mrf.mxu0
      %4417 = vmatprep.mubr.bf16.mxu0 0
      %4418 = vmatmul.mubr.bf16.gmra.mxu0 %v1165
      %v4419 = vpop.f32.mrf.mxu0
      %v4420 = vadd.f32 0.0, %v4419
      %v4421 = vpop.f32.mrf.mxu0
      %v4422 = vpop.f32.mrf.mxu0
      %v4423 = vadd.f32 0.0, %v4422
      %v4424 = vpop.f32.mrf.mxu0
      %4425 = vmatprep.mubr.bf16.mxu0 0
      %4426 = vmatmul.mubr.bf16.gmra.mxu0 %v1168
      %v4427 = vpop.f32.mrf.mxu0
      %v4428 = vadd.f32 0.0, %v4427
      %v4429 = vpop.f32.mrf.mxu0
      %v4430 = vpop.f32.mrf.mxu0
      %v4431 = vadd.f32 0.0, %v4430
      %v4432 = vpop.f32.mrf.mxu0
      %4433 = vmatprep.mubr.bf16.mxu0 0
      %4434 = vmatmul.mubr.bf16.gmra.mxu0 %v1171
      %v4435 = vpop.f32.mrf.mxu0
      %v4436 = vadd.f32 0.0, %v4435
      %v4437 = vpop.f32.mrf.mxu0
      %v4438 = vpop.f32.mrf.mxu0
      %v4439 = vadd.f32 0.0, %v4438
      %v4440 = vpop.f32.mrf.mxu0
      %4441 = vmatprep.mubr.bf16.mxu0 0
      %4442 = vmatmul.mubr.bf16.gmra.mxu0 %v1174
      %v4443 = vpop.f32.mrf.mxu0
      %v4444 = vadd.f32 0.0, %v4443
      %v4445 = vpop.f32.mrf.mxu0
      %v4446 = vpop.f32.mrf.mxu0
      %v4447 = vadd.f32 0.0, %v4446
      %v4448 = vpop.f32.mrf.mxu0
      %4449 = vmatprep.mubr.bf16.mxu0 0
      %4450 = vmatmul.mubr.bf16.gmra.mxu0 %v1177
      %v4451 = vpop.f32.mrf.mxu0
      %v4452 = vadd.f32 0.0, %v4451
      %v4453 = vpop.f32.mrf.mxu0
      %v4454 = vpop.f32.mrf.mxu0
      %v4455 = vadd.f32 0.0, %v4454
      %v4456 = vpop.f32.mrf.mxu0
      %4457 = vmatprep.mubr.bf16.mxu0 0
      %4458 = vmatmul.mubr.bf16.gmra.mxu0 %v1180
      %v4459 = vpop.f32.mrf.mxu0
      %v4460 = vadd.f32 0.0, %v4459
      %v4461 = vpop.f32.mrf.mxu0
      %v4462 = vpop.f32.mrf.mxu0
      %v4463 = vadd.f32 0.0, %v4462
      %v4464 = vpop.f32.mrf.mxu0
      %4465 = vmatprep.mubr.bf16.mxu0 0
      %4466 = vmatmul.mubr.bf16.gmra.mxu0 %v1817
      %v4467 = vpop.f32.mrf.mxu0
      %v4468 = vadd.f32 0.0, %v4467
      %v4469 = vpop.f32.mrf.mxu0
      %v4470 = vpop.f32.mrf.mxu0
      %v4471 = vadd.f32 0.0, %v4470
      %v4472 = vpop.f32.mrf.mxu0
      %4473 = vmatprep.mubr.bf16.mxu0 0
      %4474 = vmatmul.mubr.bf16.gmra.mxu0 %v3657
      %v4475 = vpop.f32.mrf.mxu0
      %v4476 = vadd.f32 0.0, %v4475
      %v4477 = vpop.f32.mrf.mxu0
      %v4478 = vpop.f32.mrf.mxu0
      %v4479 = vadd.f32 0.0, %v4478
      %v4480 = vpop.f32.mrf.mxu0
      %4481 = vdwg.mxu0
      %v4482 = vadd.f32 %v4190, %v4356
      %v4483 = vadd.f32 %v4193, %v4359
      %v4484 = vadd.f32 %v4198, %v4364
      %v4485 = vadd.f32 %v4201, %v4367
      %v4486 = vadd.f32 %v4206, %v4372
      %v4487 = vadd.f32 %v4209, %v4375
      %v4488 = vadd.f32 %v4214, %v4380
      %v4489 = vadd.f32 %v4217, %v4383
      %v4490 = vadd.f32 %v4222, %v4388
      %v4491 = vadd.f32 %v4225, %v4391
      %v4492 = vadd.f32 %v4230, %v4396
      %v4493 = vadd.f32 %v4233, %v4399
      %v4494 = vadd.f32 %v4238, %v4404
      %v4495 = vadd.f32 %v4241, %v4407
      %v4496 = vadd.f32 %v4246, %v4412
      %v4497 = vadd.f32 %v4249, %v4415
      %v4498 = vadd.f32 %v4254, %v4420
      %v4499 = vadd.f32 %v4257, %v4423
      %v4500 = vadd.f32 %v4262, %v4428
      %v4501 = vadd.f32 %v4265, %v4431
      %v4502 = vadd.f32 %v4270, %v4436
      %v4503 = vadd.f32 %v4273, %v4439
      %v4504 = vadd.f32 %v4278, %v4444
      %v4505 = vadd.f32 %v4281, %v4447
      %v4506 = vadd.f32 %v4286, %v4452
      %v4507 = vadd.f32 %v4289, %v4455
      %v4508 = vadd.f32 %v4294, %v4460
      %v4509 = vadd.f32 %v4297, %v4463
      %v4510 = vadd.f32 %v4302, %v4468
      %v4511 = vadd.f32 %v4305, %v4471
      %v4512 = vadd.f32 %v4310, %v4476
      %v4513 = vadd.f32 %v4313, %v4479
      %s4514 = scalar_lea.vmem %s386, 30
      %v4515 = vld [vmem:[%s4514] sm:$0x3]
      %v4516 = vunpack.c.l.b16 %v1076
      %v4517 = vunpack.c.l.b16 %v1079
      %v4518 = vpack.c.b16 %v4517, %v4516
      %v4520 = vsel %vm1133, %v4518, 0
      %v4523 = vsel %vm1182, %v4515, 0
      %4525 = vmatprep.subr.bf16.mxu0 0
      %4526 = vmatpush1.bf16.msra.mxu0 0
      %4527 = vmatprep.subr.bf16.mxu0 0
      %4528 = vmatpush1.bf16.msra.mxu0 0
      %4529 = vmatprep.subr.bf16.mxu0 0
      %4530 = vmatpush1.bf16.msra.mxu0 0
      %4531 = vmatprep.subr.bf16.mxu0 0
      %4532 = vmatpush1.bf16.msra.mxu0 0
      %4533 = vmatprep.subr.bf16.mxu0 0
      %4534 = vmatpush1.bf16.msra.mxu0 0
      %4535 = vmatprep.subr.bf16.mxu0 0
      %4536 = vmatpush1.bf16.msra.mxu0 0
      %4537 = vmatprep.subr.bf16.mxu0 0
      %4538 = vmatpush1.bf16.msra.mxu0 0
      %4539 = vmatprep.subr.bf16.mxu0 0
      %4540 = vmatpush1.bf16.msra.mxu0 %v4523
      %4541 = vmatprep.subr.bf16.mxu0 0
      %4542 = vmatpush2.bf16.msra.mxu0 0
      %4543 = vmatprep.subr.bf16.mxu0 0
      %4544 = vmatpush2.bf16.msra.mxu0 0
      %4545 = vmatprep.subr.bf16.mxu0 0
      %4546 = vmatpush2.bf16.msra.mxu0 0
      %4547 = vmatprep.subr.bf16.mxu0 0
      %4548 = vmatpush2.bf16.msra.mxu0 0
      %4549 = vmatprep.subr.bf16.mxu0 0
      %4550 = vmatpush2.bf16.msra.mxu0 0
      %4551 = vmatprep.subr.bf16.mxu0 0
      %4552 = vmatpush2.bf16.msra.mxu0 0
      %4553 = vmatprep.subr.bf16.mxu0 0
      %4554 = vmatpush2.bf16.msra.mxu0 0
      %4555 = vmatprep.subr.bf16.mxu0 0
      %4556 = vmatpush2.bf16.msra.mxu0 0
      %4557 = vmatprep.mubr.bf16.mxu0 0
      %4558 = vmatmul.mubr.bf16.gmra.mxu0 %v2215
      %v4559 = vpop.f32.mrf.mxu0
      %v4560 = vadd.f32 0.0, %v4559
      %v4561 = vpop.f32.mrf.mxu0
      %v4562 = vpop.f32.mrf.mxu0
      %v4563 = vadd.f32 0.0, %v4562
      %v4564 = vpop.f32.mrf.mxu0
      %4565 = vmatprep.mubr.bf16.mxu0 0
      %4566 = vmatmul.mubr.bf16.gmra.mxu0 %v2218
      %v4567 = vpop.f32.mrf.mxu0
      %v4568 = vadd.f32 0.0, %v4567
      %v4569 = vpop.f32.mrf.mxu0
      %v4570 = vpop.f32.mrf.mxu0
      %v4571 = vadd.f32 0.0, %v4570
      %v4572 = vpop.f32.mrf.mxu0
      %4573 = vmatprep.mubr.bf16.mxu0 0
      %4574 = vmatmul.mubr.bf16.gmra.mxu0 %v2221
      %v4575 = vpop.f32.mrf.mxu0
      %v4576 = vadd.f32 0.0, %v4575
      %v4577 = vpop.f32.mrf.mxu0
      %v4578 = vpop.f32.mrf.mxu0
      %v4579 = vadd.f32 0.0, %v4578
      %v4580 = vpop.f32.mrf.mxu0
      %4581 = vmatprep.mubr.bf16.mxu0 0
      %4582 = vmatmul.mubr.bf16.gmra.mxu0 %v2224
      %v4583 = vpop.f32.mrf.mxu0
      %v4584 = vadd.f32 0.0, %v4583
      %v4585 = vpop.f32.mrf.mxu0
      %v4586 = vpop.f32.mrf.mxu0
      %v4587 = vadd.f32 0.0, %v4586
      %v4588 = vpop.f32.mrf.mxu0
      %4589 = vmatprep.mubr.bf16.mxu0 0
      %4590 = vmatmul.mubr.bf16.gmra.mxu0 %v2227
      %v4591 = vpop.f32.mrf.mxu0
      %v4592 = vadd.f32 0.0, %v4591
      %v4593 = vpop.f32.mrf.mxu0
      %v4594 = vpop.f32.mrf.mxu0
      %v4595 = vadd.f32 0.0, %v4594
      %v4596 = vpop.f32.mrf.mxu0
      %4597 = vmatprep.mubr.bf16.mxu0 0
      %4598 = vmatmul.mubr.bf16.gmra.mxu0 %v2230
      %v4599 = vpop.f32.mrf.mxu0
      %v4600 = vadd.f32 0.0, %v4599
      %v4601 = vpop.f32.mrf.mxu0
      %v4602 = vpop.f32.mrf.mxu0
      %v4603 = vadd.f32 0.0, %v4602
      %v4604 = vpop.f32.mrf.mxu0
      %4605 = vmatprep.mubr.bf16.mxu0 0
      %4606 = vmatmul.mubr.bf16.gmra.mxu0 %v2233
      %v4607 = vpop.f32.mrf.mxu0
      %v4608 = vadd.f32 0.0, %v4607
      %v4609 = vpop.f32.mrf.mxu0
      %v4610 = vpop.f32.mrf.mxu0
      %v4611 = vadd.f32 0.0, %v4610
      %v4612 = vpop.f32.mrf.mxu0
      %4613 = vmatprep.mubr.bf16.mxu0 0
      %4614 = vmatmul.mubr.bf16.gmra.mxu0 %v2236
      %v4615 = vpop.f32.mrf.mxu0
      %v4616 = vadd.f32 0.0, %v4615
      %v4617 = vpop.f32.mrf.mxu0
      %v4618 = vpop.f32.mrf.mxu0
      %v4619 = vadd.f32 0.0, %v4618
      %v4620 = vpop.f32.mrf.mxu0
      %4621 = vmatprep.mubr.bf16.mxu0 0
      %4622 = vmatmul.mubr.bf16.gmra.mxu0 %v2239
      %v4623 = vpop.f32.mrf.mxu0
      %v4624 = vadd.f32 0.0, %v4623
      %v4625 = vpop.f32.mrf.mxu0
      %v4626 = vpop.f32.mrf.mxu0
      %v4627 = vadd.f32 0.0, %v4626
      %v4628 = vpop.f32.mrf.mxu0
      %4629 = vmatprep.mubr.bf16.mxu0 0
      %4630 = vmatmul.mubr.bf16.gmra.mxu0 %v2242
      %v4631 = vpop.f32.mrf.mxu0
      %v4632 = vadd.f32 0.0, %v4631
      %v4633 = vpop.f32.mrf.mxu0
      %v4634 = vpop.f32.mrf.mxu0
      %v4635 = vadd.f32 0.0, %v4634
      %v4636 = vpop.f32.mrf.mxu0
      %4637 = vmatprep.mubr.bf16.mxu0 0
      %4638 = vmatmul.mubr.bf16.gmra.mxu0 %v2245
      %v4639 = vpop.f32.mrf.mxu0
      %v4640 = vadd.f32 0.0, %v4639
      %v4641 = vpop.f32.mrf.mxu0
      %v4642 = vpop.f32.mrf.mxu0
      %v4643 = vadd.f32 0.0, %v4642
      %v4644 = vpop.f32.mrf.mxu0
      %4645 = vmatprep.mubr.bf16.mxu0 0
      %4646 = vmatmul.mubr.bf16.gmra.mxu0 %v2248
      %v4647 = vpop.f32.mrf.mxu0
      %v4648 = vadd.f32 0.0, %v4647
      %v4649 = vpop.f32.mrf.mxu0
      %v4650 = vpop.f32.mrf.mxu0
      %v4651 = vadd.f32 0.0, %v4650
      %v4652 = vpop.f32.mrf.mxu0
      %4653 = vmatprep.mubr.bf16.mxu0 0
      %4654 = vmatmul.mubr.bf16.gmra.mxu0 %v2251
      %v4655 = vpop.f32.mrf.mxu0
      %v4656 = vadd.f32 0.0, %v4655
      %v4657 = vpop.f32.mrf.mxu0
      %v4658 = vpop.f32.mrf.mxu0
      %v4659 = vadd.f32 0.0, %v4658
      %v4660 = vpop.f32.mrf.mxu0
      %4661 = vmatprep.mubr.bf16.mxu0 0
      %4662 = vmatmul.mubr.bf16.gmra.mxu0 %v2254
      %v4663 = vpop.f32.mrf.mxu0
      %v4664 = vadd.f32 0.0, %v4663
      %v4665 = vpop.f32.mrf.mxu0
      %v4666 = vpop.f32.mrf.mxu0
      %v4667 = vadd.f32 0.0, %v4666
      %v4668 = vpop.f32.mrf.mxu0
      %4669 = vmatprep.mubr.bf16.mxu0 0
      %4670 = vmatmul.mubr.bf16.gmra.mxu0 %v2788
      %v4671 = vpop.f32.mrf.mxu0
      %v4672 = vadd.f32 0.0, %v4671
      %v4673 = vpop.f32.mrf.mxu0
      %v4674 = vpop.f32.mrf.mxu0
      %v4675 = vadd.f32 0.0, %v4674
      %v4676 = vpop.f32.mrf.mxu0
      %4677 = vmatprep.mubr.bf16.mxu0 0
      %4678 = vmatmul.mubr.bf16.gmra.mxu0 %v4520
      %v4679 = vpop.f32.mrf.mxu0
      %v4680 = vadd.f32 0.0, %v4679
      %v4681 = vpop.f32.mrf.mxu0
      %v4682 = vpop.f32.mrf.mxu0
      %v4683 = vadd.f32 0.0, %v4682
      %v4684 = vpop.f32.mrf.mxu0
      %4685 = vdwg.mxu0
      %v4686 = vadd.f32 %v4482, %v4560
      %v4687 = vadd.f32 %v4483, %v4563
      %v4688 = vadd.f32 %v4484, %v4568
      %v4689 = vadd.f32 %v4485, %v4571
      %v4690 = vadd.f32 %v4486, %v4576
      %v4691 = vadd.f32 %v4487, %v4579
      %v4692 = vadd.f32 %v4488, %v4584
      %v4693 = vadd.f32 %v4489, %v4587
      %v4694 = vadd.f32 %v4490, %v4592
      %v4695 = vadd.f32 %v4491, %v4595
      %v4696 = vadd.f32 %v4492, %v4600
      %v4697 = vadd.f32 %v4493, %v4603
      %v4698 = vadd.f32 %v4494, %v4608
      %v4699 = vadd.f32 %v4495, %v4611
      %v4700 = vadd.f32 %v4496, %v4616
      %v4701 = vadd.f32 %v4497, %v4619
      %v4702 = vadd.f32 %v4498, %v4624
      %v4703 = vadd.f32 %v4499, %v4627
      %v4704 = vadd.f32 %v4500, %v4632
      %v4705 = vadd.f32 %v4501, %v4635
      %v4706 = vadd.f32 %v4502, %v4640
      %v4707 = vadd.f32 %v4503, %v4643
      %v4708 = vadd.f32 %v4504, %v4648
      %v4709 = vadd.f32 %v4505, %v4651
      %v4710 = vadd.f32 %v4506, %v4656
      %v4711 = vadd.f32 %v4507, %v4659
      %v4712 = vadd.f32 %v4508, %v4664
      %v4713 = vadd.f32 %v4509, %v4667
      %v4714 = vadd.f32 %v4510, %v4672
      %v4715 = vadd.f32 %v4511, %v4675
      %v4716 = vadd.f32 %v4512, %v4680
      %v4717 = vadd.f32 %v4513, %v4683
      %v4718 = vmul.f32 %v4686, %v2019
      %v4719 = vmul.f32 %v4687, %v2019
      %v4720 = vmul.f32 %v4688, %v2019
      %v4721 = vmul.f32 %v4689, %v2019
      %v4722 = vmul.f32 %v4690, %v2019
      %v4723 = vmul.f32 %v4691, %v2019
      %v4724 = vmul.f32 %v4692, %v2019
      %v4725 = vmul.f32 %v4693, %v2019
      %v4726 = vmul.f32 %v4694, %v2019
      %v4727 = vmul.f32 %v4695, %v2019
      %v4728 = vmul.f32 %v4696, %v2019
      %v4729 = vmul.f32 %v4697, %v2019
      %v4730 = vmul.f32 %v4698, %v2019
      %v4731 = vmul.f32 %v4699, %v2019
      %v4732 = vmul.f32 %v4700, %v2019
      %v4733 = vmul.f32 %v4701, %v2019
      %v4734 = vmul.f32 %v4702, %v2019
      %v4735 = vmul.f32 %v4703, %v2019
      %v4736 = vmul.f32 %v4704, %v2019
      %v4737 = vmul.f32 %v4705, %v2019
      %v4738 = vmul.f32 %v4706, %v2019
      %v4739 = vmul.f32 %v4707, %v2019
      %v4740 = vmul.f32 %v4708, %v2019
      %v4741 = vmul.f32 %v4709, %v2019
      %v4742 = vmul.f32 %v4710, %v2019
      %v4743 = vmul.f32 %v4711, %v2019
      %v4744 = vmul.f32 %v4712, %v2019
      %v4745 = vmul.f32 %v4713, %v2019
      %v4746 = vmul.f32 %v4714, %v2019
      %v4747 = vmul.f32 %v4715, %v2019
      %v4748 = vmul.f32 %v4716, %v2019
      %v4749 = vmul.f32 %v4717, %v2019
      %v4750 = vadd.f32 %v4718, %v2057
      %v4751 = vadd.f32 %v4719, %v2057
      %v4752 = vadd.f32 %v4720, %v2057
      %v4753 = vadd.f32 %v4721, %v2057
      %v4754 = vadd.f32 %v4722, %v2057
      %v4755 = vadd.f32 %v4723, %v2057
      %v4756 = vadd.f32 %v4724, %v2057
      %v4757 = vadd.f32 %v4725, %v2057
      %v4758 = vadd.f32 %v4726, %v2057
      %v4759 = vadd.f32 %v4727, %v2057
      %v4760 = vadd.f32 %v4728, %v2057
      %v4761 = vadd.f32 %v4729, %v2057
      %v4762 = vadd.f32 %v4730, %v2057
      %v4763 = vadd.f32 %v4731, %v2057
      %v4764 = vadd.f32 %v4732, %v2057
      %v4765 = vadd.f32 %v4733, %v2057
      %v4766 = vadd.f32 %v4734, %v2057
      %v4767 = vadd.f32 %v4735, %v2057
      %v4768 = vadd.f32 %v4736, %v2057
      %v4769 = vadd.f32 %v4737, %v2057
      %v4770 = vadd.f32 %v4738, %v2057
      %v4771 = vadd.f32 %v4739, %v2057
      %v4772 = vadd.f32 %v4740, %v2057
      %v4773 = vadd.f32 %v4741, %v2057
      %v4774 = vadd.f32 %v4742, %v2057
      %v4775 = vadd.f32 %v4743, %v2057
      %v4776 = vadd.f32 %v4744, %v2057
      %v4777 = vadd.f32 %v4745, %v2057
      %v4778 = vadd.f32 %v4746, %v2057
      %v4779 = vadd.f32 %v4747, %v2057
      %v4780 = vadd.f32 %v4748, %v2057
      %v4781 = vadd.f32 %v4749, %v2057
      %v4782 = vmax.f32 %v4750, 0.0
      %v4783 = vmax.f32 %v4751, 0.0
      %v4784 = vmax.f32 %v4752, 0.0
      %v4785 = vmax.f32 %v4753, 0.0
      %v4786 = vmax.f32 %v4754, 0.0
      %v4787 = vmax.f32 %v4755, 0.0
      %v4788 = vmax.f32 %v4756, 0.0
      %v4789 = vmax.f32 %v4757, 0.0
      %v4790 = vmax.f32 %v4758, 0.0
      %v4791 = vmax.f32 %v4759, 0.0
      %v4792 = vmax.f32 %v4760, 0.0
      %v4793 = vmax.f32 %v4761, 0.0
      %v4794 = vmax.f32 %v4762, 0.0
      %v4795 = vmax.f32 %v4763, 0.0
      %v4796 = vmax.f32 %v4764, 0.0
      %v4797 = vmax.f32 %v4765, 0.0
      %v4798 = vmax.f32 %v4766, 0.0
      %v4799 = vmax.f32 %v4767, 0.0
      %v4800 = vmax.f32 %v4768, 0.0
      %v4801 = vmax.f32 %v4769, 0.0
      %v4802 = vmax.f32 %v4770, 0.0
      %v4803 = vmax.f32 %v4771, 0.0
      %v4804 = vmax.f32 %v4772, 0.0
      %v4805 = vmax.f32 %v4773, 0.0
      %v4806 = vmax.f32 %v4774, 0.0
      %v4807 = vmax.f32 %v4775, 0.0
      %v4808 = vmax.f32 %v4776, 0.0
      %v4809 = vmax.f32 %v4777, 0.0
      %v4810 = vmax.f32 %v4778, 0.0
      %v4811 = vmax.f32 %v4779, 0.0
      %v4812 = vmax.f32 %v4780, 0.0
      %v4813 = vmax.f32 %v4781, 0.0
      %s4814 = scalar_lea.vmem %s405, 768
      %4815 = vst.msk [vmem:[%s4814] sm:$0xff] %vm2123, %v4782
      %4816 = vst.msk [vmem:[%s4814 + $0x8] sm:$0xff] %vm2123, %v4783
      %4817 = vst.msk [vmem:[%s4814 + $0x10] sm:$0xff] %vm2123, %v4784
      %4818 = vst.msk [vmem:[%s4814 + $0x18] sm:$0xff] %vm2123, %v4785
      %4819 = vst.msk [vmem:[%s4814 + $0x20] sm:$0xff] %vm2123, %v4786
      %4820 = vst.msk [vmem:[%s4814 + $0x28] sm:$0xff] %vm2123, %v4787
      %4821 = vst.msk [vmem:[%s4814 + $0x30] sm:$0xff] %vm2123, %v4788
      %4822 = vst.msk [vmem:[%s4814 + $0x38] sm:$0xff] %vm2123, %v4789
      %4823 = vst.msk [vmem:[%s4814 + $0x40] sm:$0xff] %vm2123, %v4790
      %4824 = vst.msk [vmem:[%s4814 + $0x48] sm:$0xff] %vm2123, %v4791
      %4825 = vst.msk [vmem:[%s4814 + $0x50] sm:$0xff] %vm2123, %v4792
      %4826 = vst.msk [vmem:[%s4814 + $0x58] sm:$0xff] %vm2123, %v4793
      %4827 = vst.msk [vmem:[%s4814 + $0x60] sm:$0xff] %vm2123, %v4794
      %4828 = vst.msk [vmem:[%s4814 + $0x68] sm:$0xff] %vm2123, %v4795
      %4829 = vst.msk [vmem:[%s4814 + $0x70] sm:$0xff] %vm2123, %v4796
      %4830 = vst.msk [vmem:[%s4814 + $0x78] sm:$0xff] %vm2123, %v4797
      %4831 = vst.msk [vmem:[%s4814 + $0x80] sm:$0xff] %vm2123, %v4798
      %4832 = vst.msk [vmem:[%s4814 + $0x88] sm:$0xff] %vm2123, %v4799
      %4833 = vst.msk [vmem:[%s4814 + $0x90] sm:$0xff] %vm2123, %v4800
      %4834 = vst.msk [vmem:[%s4814 + $0x98] sm:$0xff] %vm2123, %v4801
      %4835 = vst.msk [vmem:[%s4814 + $0xa0] sm:$0xff] %vm2123, %v4802
      %4836 = vst.msk [vmem:[%s4814 + $0xa8] sm:$0xff] %vm2123, %v4803
      %4837 = vst.msk [vmem:[%s4814 + $0xb0] sm:$0xff] %vm2123, %v4804
      %4838 = vst.msk [vmem:[%s4814 + $0xb8] sm:$0xff] %vm2123, %v4805
      %4839 = vst.msk [vmem:[%s4814 + $0xc0] sm:$0xff] %vm2123, %v4806
      %4840 = vst.msk [vmem:[%s4814 + $0xc8] sm:$0xff] %vm2123, %v4807
      %4841 = vst.msk [vmem:[%s4814 + $0xd0] sm:$0xff] %vm2123, %v4808
      %4842 = vst.msk [vmem:[%s4814 + $0xd8] sm:$0xff] %vm2123, %v4809
      %4843 = vst.msk [vmem:[%s4814 + $0xe0] sm:$0xff] %vm2123, %v4810
      %4844 = vst.msk [vmem:[%s4814 + $0xe8] sm:$0xff] %vm2123, %v4811
      %4845 = vst.msk [vmem:[%s4814 + $0xf0] sm:$0xff] %vm2123, %v4812
      %4846 = vst.msk [vmem:[%s4814 + $0xf8] sm:$0xff] %vm2123, %v4813
      %s4847 = smul.u32 16, %s22
      %p4848 = scmp.lt.s32.totalorder %s21, 1
      %s4849 = scalar_select %p4848, %s21, 1
      %p4850 = scmp.lt.s32.totalorder %s4847, 15
      %s4851 = scalar_select %p4850, %s4847, 15
      %p4852 = scmp.lt.s32.totalorder %s23, 0
      %s4853 = scalar_select %p4852, %s23, 0
      %s4854 = smul.addr %s4851, 2
      %s4855 = sadd.s32 %s4853, %s4854
      %s4856 = smul.addr %s4849, 128
      %s4857 = sadd.s32 %s4855, %s4856
      %s4858 = smul.addr %s4857, 8
      %s4859 = scalar_lea.vmem %s5, %s4858
      // Predicated region
      $region41: #{up_conv_forward.1} parent=39 // pred_check
        %p4860 = pneg %p195
      $region42: #{up_conv_forward.1} parent=39 // pred_check_branch
        %4862 = sbr.rel (%p4860) target = $region44
      $region43: #{up_conv_forward.1} parent=39 // pred_region
        %s4863 = smul.u32 16, %s22
      $region44: #{up_conv_forward.1} parent=39 // pred_fallthru
        _
    $region40: #{up_conv_forward.1} parent=5 // pred_fallthru
      _
    %p4864 = scmp.le.s32.totalorder 2, %s11
    // Predicated region
    $region45: #{up_conv_forward.1} parent=5 // pred_check
      %p4865 = pneg %p4864
    $region46: #{up_conv_forward.1} parent=5 // pred_check_branch
      %4867 = sbr.rel (%p4865) target = $region48
    $region47: #{up_conv_forward.1} parent=5 // pred_region
      %s4868 = ssub.s32 %s11, 2
      // Predicated region
      $region49: #{up_conv_forward.1} parent=47 // pred_check
        %p4869 = pneg %p201
      $region50: #{up_conv_forward.1} parent=47 // pred_check_branch
        %4871 = sbr.rel (%p4869) target = $region52
      $region51: #{up_conv_forward.1} parent=47 // pred_region
        %s4872 = smul.u32 16, %s25
        %p4873 = scmp.lt.s32.totalorder %s24, 1
        %s4874 = scalar_select %p4873, %s24, 1
        %p4875 = scmp.lt.s32.totalorder %s4872, 15
        %s4876 = scalar_select %p4875, %s4872, 15
        %p4877 = scmp.lt.s32.totalorder %s26, 0
        %s4878 = scalar_select %p4877, %s26, 0
        %s4879 = smul.addr %s4876, 2
        %s4880 = sadd.s32 %s4878, %s4879
        %s4881 = smul.addr %s4874, 128
        %s4882 = sadd.s32 %s4880, %s4881
        %s4883 = smul.addr %s4882, 8
        %s4884 = scalar_lea.vmem %s5, %s4883
      $region52: #{up_conv_forward.1} parent=47 // pred_fallthru
        _
    $region48: #{up_conv_forward.1} parent=5 // pred_fallthru
      _
  $region6: #{up_conv_forward.1} parent=0 // loop_footer
    %s15 = sadd.s32 1, %s11
  $region7: #{up_conv_forward.1} parent=0 // loop_footer_branch
    %10 = sbr.rel target = $region3
  $region8: #{up_conv_forward.1} parent=0 // loop_exit
    _

</llo_original>
